<compile_context>
chip_gen: v7x
topology: tpu7x:2x2x1
jax: 0.10.0
libtpu: 0.0.40
codegen_flags: <defaults>
</compile_context>

<pallas_src>
import jax
import jax.numpy as jnp
from jax.experimental import pallas as pl
from jax.experimental.pallas import tpu as pltpu

IN_DIM = 3 * 32 * 32   # 3072
H1_DIM = 512
H2_DIM = 256
OUT_DIM = 10
OUT_PAD = 128          # lane-dense padded output width (real logits in [:, :10])
TM_MAX = 256           # large-batch rows per grid step (256-wide MXU, low step overhead)


def _choose_tm(batch: int) -> int:
    """Batch-tile size: round small batches up to the 8-row sublane granule
    (no 64x padded dead work for B=2), cap at TM_MAX for throughput batches."""
    rounded = pl.cdiv(batch, 8) * 8
    return min(TM_MAX, rounded)


def swapnet_kernel(x_ref, w1_ref, b1_ref, w2_ref, b2_ref, w3_ref, b3_ref, o_ref):
    # x tile arrives already bf16 (cast upstream in the wrapper).
    x = x_ref[...]

    # fc1 + bias + ReLU (Dropout is identity in eval mode). fp32 accumulate,
    # fp32 elementwise (v5e VPU has no bf16 path), bf16 only at MXU boundaries.
    h1 = jnp.dot(x, w1_ref[...], preferred_element_type=jnp.float32) + b1_ref[...]
    h1 = jnp.maximum(h1, 0.0).astype(jnp.bfloat16)

    # fc2 + bias + ReLU
    h2 = jnp.dot(h1, w2_ref[...], preferred_element_type=jnp.float32) + b2_ref[...]
    h2 = jnp.maximum(h2, 0.0).astype(jnp.bfloat16)

    # fc3 (logits), 128-lane padded output -> unmasked stores.
    o_ref[...] = (
        jnp.dot(h2, w3_ref[...], preferred_element_type=jnp.float32) + b3_ref[...]
    )


@jax.jit
def swapnet_forward(x_nchw, params):
    """x_nchw: (B, 3, 32, 32) float32. params: bf16 weights / fp32 biases,
    fc3 padded to 128 output lanes. Returns logits (B, 10) float32."""
    w1, b1, w2, b2, w3, b3 = params

    B = x_nchw.shape[0]
    tm = _choose_tm(B)
    Bp = pl.cdiv(B, tm) * tm

    # Flatten row-major (torch x.view(x.size(0), -1) order) and cast to bf16
    # here: x is the dominant HBM stream (12 KiB/row fp32 -> 6 KiB bf16).
    x_flat = x_nchw.reshape(B, -1).astype(jnp.bfloat16)
    if Bp != B:
        x_flat = jnp.pad(x_flat, ((0, Bp - B), (0, 0)))

    # VMEM-resident specs for weights/biases (same block every grid step).
    resident = lambda shape: pl.BlockSpec(shape, lambda i: (0, 0))

    flops = 2 * Bp * (IN_DIM * H1_DIM + H1_DIM * H2_DIM + H2_DIM * OUT_PAD)
    bytes_accessed = (
        Bp * IN_DIM * 2                                                   # x in (bf16)
        + Bp * OUT_PAD * 4                                                # logits out
        + (IN_DIM * H1_DIM + H1_DIM * H2_DIM + H2_DIM * OUT_PAD) * 2      # bf16 weights
        + (H1_DIM + H2_DIM + OUT_PAD) * 4                                 # fp32 biases
    )

    out_padded = pl.pallas_call(
        swapnet_kernel,
        out_shape=jax.ShapeDtypeStruct((Bp, OUT_PAD), jnp.float32),
        grid=(Bp // tm,),
        in_specs=[
            pl.BlockSpec((tm, IN_DIM), lambda i: (i, 0)),   # batch-tiled bf16 x
            resident(w1.shape),
            resident(b1.shape),
            resident(w2.shape),
            resident(b2.shape),
            resident(w3.shape),
            resident(b3.shape),
        ],
        out_specs=pl.BlockSpec((tm, OUT_PAD), lambda i: (i, 0)),
        compiler_params=pltpu.CompilerParams(
            dimension_semantics=("parallel",),   # v7x megacore; no-op on v5e/v6e
            vmem_limit_bytes=32 << 20,           # ~11 MiB used; safe on v7x's 64 MiB
            # Let XLA fuse the reshape/convert/pad producing x into the kernel
            # input instead of materializing a padded bf16 copy in HBM.
            allow_input_fusion=[True, False, False, False, False, False, False],
        ),
        cost_estimate=pl.CostEstimate(
            flops=flops, transcendentals=0, bytes_accessed=bytes_accessed
        ),
    )(x_flat, w1, b1, w2, b2, w3, b3)

    return out_padded[:B, :OUT_DIM]


def init_params(key):
    """Deterministic fp32 init mimicking torch.nn.Linear (U(+/- 1/sqrt(fan_in))).

    Weights stored as (in_features, out_features); biases as (1, out_features).
    """
    dims = [(IN_DIM, H1_DIM), (H1_DIM, H2_DIM), (H2_DIM, OUT_DIM)]
    params = []
    for fan_in, fan_out in dims:
        key, kw, kb = jax.random.split(key, 3)
        bound = 1.0 / jnp.sqrt(jnp.float32(fan_in))
        w = jax.random.uniform(kw, (fan_in, fan_out), jnp.float32, -bound, bound)
        b = jax.random.uniform(kb, (1, fan_out), jnp.float32, -bound, bound)
        params += [w, b]
    return tuple(params)


def pack_params_for_kernel(params_f32):
    """bf16 weights, fp32 biases; fc3 zero-padded to a 128-lane output."""
    w1, b1, w2, b2, w3, b3 = params_f32
    w3p = jnp.pad(w3, ((0, 0), (0, OUT_PAD - OUT_DIM)))
    b3p = jnp.pad(b3, ((0, 0), (0, OUT_PAD - OUT_DIM)))
    return (
        w1.astype(jnp.bfloat16), b1,
        w2.astype(jnp.bfloat16), b2,
        w3p.astype(jnp.bfloat16), b3p,
    )


def reference_forward(x_nchw, params_f32):
    w1, b1, w2, b2, w3, b3 = params_f32
    x = x_nchw.reshape(x_nchw.shape[0], -1)
    h1 = jnp.maximum(x @ w1 + b1, 0.0)
    h2 = jnp.maximum(h1 @ w2 + b2, 0.0)
    return h2 @ w3 + b3


if __name__ == "__main__":
    key = jax.random.PRNGKey(0)
    key, kx = jax.random.split(key)

    # Small batch consistent with the module's expected CIFAR-style input.
    x = jax.random.normal(kx, (2, 3, 32, 32), dtype=jnp.float32)
    params_f32 = init_params(key)
    params = pack_params_for_kernel(params_f32)

    out = jax.block_until_ready(swapnet_forward(x, params))

    ref = reference_forward(x, params_f32)
    assert out.shape == (2, 10), out.shape
    # bf16 x / weights / intermediates vs fp32 reference -> loosened tolerance.
    assert jnp.allclose(out, ref, atol=3e-2, rtol=3e-2), "mismatch vs reference"

    print("KERNEL_OK")
</pallas_src>

<mosaic_0001>
module attributes {stable_mosaic.version = 11 : i64} {
  func.func @swapnet_kernel(%arg0: i32, %arg1: memref<8x3072xbf16, #tpu.memory_space<vmem>>, %arg2: memref<3072x512xbf16, #tpu.memory_space<vmem>>, %arg3: memref<1x512xf32, #tpu.memory_space<vmem>>, %arg4: memref<512x256xbf16, #tpu.memory_space<vmem>>, %arg5: memref<1x256xf32, #tpu.memory_space<vmem>>, %arg6: memref<256x128xbf16, #tpu.memory_space<vmem>>, %arg7: memref<1x128xf32, #tpu.memory_space<vmem>>, %arg8: memref<8x128xf32, #tpu.memory_space<vmem>>) attributes {dimension_semantics = [#tpu.dimension_semantics<parallel>], iteration_bounds = array<i64: 1>, scalar_prefetch = 0 : i64, scratch_operands = 0 : i64, tpu.core_type = #tpu.core_type<tc>, window_params = [{transform_indices = @transform_0, window_bounds = array<i64: 8, 3072>}, {pipeline_mode = #tpu.pipeline_mode<synchronous>, transform_indices = @transform_1, window_bounds = array<i64: 3072, 512>}, {pipeline_mode = #tpu.pipeline_mode<synchronous>, transform_indices = @transform_2, window_bounds = array<i64: 1, 512>}, {pipeline_mode = #tpu.pipeline_mode<synchronous>, transform_indices = @transform_3, window_bounds = array<i64: 512, 256>}, {pipeline_mode = #tpu.pipeline_mode<synchronous>, transform_indices = @transform_4, window_bounds = array<i64: 1, 256>}, {pipeline_mode = #tpu.pipeline_mode<synchronous>, transform_indices = @transform_5, window_bounds = array<i64: 256, 128>}, {pipeline_mode = #tpu.pipeline_mode<synchronous>, transform_indices = @transform_6, window_bounds = array<i64: 1, 128>}, {transform_indices = @transform_7, window_bounds = array<i64: 8, 128>}]} {
    %c0 = arith.constant 0 : index
    %c0_0 = arith.constant 0 : index
    %0 = vector.load %arg1[%c0, %c0_0] : memref<8x3072xbf16, #tpu.memory_space<vmem>>, vector<8x3072xbf16>
    %c0_1 = arith.constant 0 : index
    %c0_2 = arith.constant 0 : index
    %1 = vector.load %arg2[%c0_1, %c0_2] : memref<3072x512xbf16, #tpu.memory_space<vmem>>, vector<3072x512xbf16>
    %cst = arith.constant dense<0.000000e+00> : vector<8x512xf32>
    %2 = tpu.matmul %0, %1, %cst {dimension_numbers = #tpu.dot_dimension_numbers<[1], [0], [0], [1], [0, 0, 1, 1], [], []>} : vector<8x3072xbf16>, vector<3072x512xbf16>, vector<8x512xf32> -> vector<8x512xf32>
    %c0_3 = arith.constant 0 : index
    %c0_4 = arith.constant 0 : index
    %3 = vector.load %arg3[%c0_3, %c0_4] : memref<1x512xf32, #tpu.memory_space<vmem>>, vector<1x512xf32>
    %4 = vector.broadcast %3 : vector<1x512xf32> to vector<8x512xf32>
    %5 = arith.addf %2, %4 : vector<8x512xf32>
    %cst_5 = arith.constant 0.000000e+00 : f32
    %6 = vector.broadcast %cst_5 : f32 to vector<8x512xf32>
    %7 = arith.maximumf %5, %6 : vector<8x512xf32>
    %8 = arith.truncf %7 : vector<8x512xf32> to vector<8x512xbf16>
    %c0_6 = arith.constant 0 : index
    %c0_7 = arith.constant 0 : index
    %9 = vector.load %arg4[%c0_6, %c0_7] : memref<512x256xbf16, #tpu.memory_space<vmem>>, vector<512x256xbf16>
    %cst_8 = arith.constant dense<0.000000e+00> : vector<8x256xf32>
    %10 = tpu.matmul %8, %9, %cst_8 {dimension_numbers = #tpu.dot_dimension_numbers<[1], [0], [0], [1], [0, 0, 1, 1], [], []>} : vector<8x512xbf16>, vector<512x256xbf16>, vector<8x256xf32> -> vector<8x256xf32>
    %c0_9 = arith.constant 0 : index
    %c0_10 = arith.constant 0 : index
    %11 = vector.load %arg5[%c0_9, %c0_10] : memref<1x256xf32, #tpu.memory_space<vmem>>, vector<1x256xf32>
    %12 = vector.broadcast %11 : vector<1x256xf32> to vector<8x256xf32>
    %13 = arith.addf %10, %12 : vector<8x256xf32>
    %cst_11 = arith.constant 0.000000e+00 : f32
    %14 = vector.broadcast %cst_11 : f32 to vector<8x256xf32>
    %15 = arith.maximumf %13, %14 : vector<8x256xf32>
    %16 = arith.truncf %15 : vector<8x256xf32> to vector<8x256xbf16>
    %c0_12 = arith.constant 0 : index
    %c0_13 = arith.constant 0 : index
    %17 = vector.load %arg6[%c0_12, %c0_13] : memref<256x128xbf16, #tpu.memory_space<vmem>>, vector<256x128xbf16>
    %cst_14 = arith.constant dense<0.000000e+00> : vector<8x128xf32>
    %18 = tpu.matmul %16, %17, %cst_14 {dimension_numbers = #tpu.dot_dimension_numbers<[1], [0], [0], [1], [0, 0, 1, 1], [], []>} : vector<8x256xbf16>, vector<256x128xbf16>, vector<8x128xf32> -> vector<8x128xf32>
    %c0_15 = arith.constant 0 : index
    %c0_16 = arith.constant 0 : index
    %19 = vector.load %arg7[%c0_15, %c0_16] : memref<1x128xf32, #tpu.memory_space<vmem>>, vector<1x128xf32>
    %20 = vector.broadcast %19 : vector<1x128xf32> to vector<8x128xf32>
    %21 = arith.addf %18, %20 : vector<8x128xf32>
    %c0_17 = arith.constant 0 : index
    %c0_18 = arith.constant 0 : index
    %22 = vector.load %arg8[%c0_17, %c0_18] : memref<8x128xf32, #tpu.memory_space<vmem>>, vector<8x128xf32>
    tpu.vector_store %arg8[%c0_17, %c0_18], %21 {strides = array<i32>} : memref<8x128xf32, #tpu.memory_space<vmem>>, vector<8x128xf32>,
    return
  }
  func.func @transform_0(%arg0: i32) -> (i32, i32) {
    %c0_i32 = arith.constant 0 : i32
    %c0_i32_0 = arith.constant 0 : i32
    return %arg0, %c0_i32 : i32, i32
  }
  func.func @transform_1(%arg0: i32) -> (i32, i32) {
    %c0_i32 = arith.constant 0 : i32
    %c0_i32_0 = arith.constant 0 : i32
    %c0_i32_1 = arith.constant 0 : i32
    return %c0_i32, %c0_i32_0 : i32, i32
  }
  func.func @transform_2(%arg0: i32) -> (i32, i32) {
    %c0_i32 = arith.constant 0 : i32
    %c0_i32_0 = arith.constant 0 : i32
    %c0_i32_1 = arith.constant 0 : i32
    return %c0_i32, %c0_i32_0 : i32, i32
  }
  func.func @transform_3(%arg0: i32) -> (i32, i32) {
    %c0_i32 = arith.constant 0 : i32
    %c0_i32_0 = arith.constant 0 : i32
    %c0_i32_1 = arith.constant 0 : i32
    return %c0_i32, %c0_i32_0 : i32, i32
  }
  func.func @transform_4(%arg0: i32) -> (i32, i32) {
    %c0_i32 = arith.constant 0 : i32
    %c0_i32_0 = arith.constant 0 : i32
    %c0_i32_1 = arith.constant 0 : i32
    return %c0_i32, %c0_i32_0 : i32, i32
  }
  func.func @transform_5(%arg0: i32) -> (i32, i32) {
    %c0_i32 = arith.constant 0 : i32
    %c0_i32_0 = arith.constant 0 : i32
    %c0_i32_1 = arith.constant 0 : i32
    return %c0_i32, %c0_i32_0 : i32, i32
  }
  func.func @transform_6(%arg0: i32) -> (i32, i32) {
    %c0_i32 = arith.constant 0 : i32
    %c0_i32_0 = arith.constant 0 : i32
    %c0_i32_1 = arith.constant 0 : i32
    return %c0_i32, %c0_i32_0 : i32, i32
  }
  func.func @transform_7(%arg0: i32) -> (i32, i32) {
    %c0_i32 = arith.constant 0 : i32
    %c0_i32_0 = arith.constant 0 : i32
    return %arg0, %c0_i32 : i32, i32
  }
}

</mosaic_0001>

<llo_original>
// kernel: swapnet_forward.2
$region0: #{swapnet_forward.2}
  #allocation0 [shape = 'u32[]', space=smem, size = 0x4, offset = 0x4, fixed_abs, tag = 'smem constant byte address 0x4 - core index']
  #allocation1 [shape = 'u32[144,128]{1,0:T(1,128)}', space=vmem, size = 0x12000, scoped, tag = 'internal scratch']
  #allocation2 [shape = 'u32[2048]{0}', space=vmem, size = 0x2000, scoped, tag = 'scoped memory for swapnet_forward.2']
  #allocation3 [shape = 'u32[2048]{0}', space=vmem, size = 0x2000, scoped, tag = 'scoped memory for swapnet_forward.2']
  #allocation4 [shape = 'u32[2048]{0}', space=vmem, size = 0x2000, scoped, tag = 'scoped memory for swapnet_forward.2']
  #allocation5 [shape = 'u32[2048]{0}', space=vmem, size = 0x2000, scoped, tag = 'scoped memory for swapnet_forward.2']
  #allocation6 [shape = 'u32[2048]{0}', space=vmem, size = 0x2000, scoped, tag = 'scoped memory for swapnet_forward.2']
  %s0 = inlined_call_operand.hbm [shape: bf16[3072,512], index: 0, kind: input, shape index: {}]
  %s1 = inlined_call_operand.hbm [shape: f32[1,512], index: 1, kind: input, shape index: {}]
  %s2 = inlined_call_operand.hbm [shape: bf16[512,256], index: 2, kind: input, shape index: {}]
  %s3 = inlined_call_operand.hbm [shape: f32[1,256], index: 3, kind: input, shape index: {}]
  %s4 = inlined_call_operand.hbm [shape: bf16[256,128], index: 4, kind: input, shape index: {}]
  %s5 = inlined_call_operand.hbm [shape: f32[1,128], index: 5, kind: input, shape index: {}]
  %s6 = inlined_call_operand.vmem [shape: bf16[2,3072], index: 6, kind: input, shape index: {}]
  %s7 = inlined_call_operand.<no memory space> [shape: bf16[], index: 7, kind: input, shape index: {}]
  %s8 = inlined_call_operand.vmem [shape: f32[8,128], index: 8, kind: output, shape index: {}]
  %s9 = sld [smem:[#allocation0]]
  $region62: #{swapnet_forward.2} parent=0
    _
  %s11 = ssub.s32 1, %s9
  %s12 = scalar_select 0, %s11, %s9
  %v13 = vstv %s7
  %v14 = vunpack.i.l.bf16 %v13
  %v16 = vunpack.i.h.bf16 %v13
  $region1: #{swapnet_forward.2} parent=0
    #allocation7 [shape = 'u8[3145728]{0}', space=vmem, size = 0x300000, scoped, tag = 'input window, operand 1, single buffered']
    #allocation8 [shape = 's32[1]{0}', space=sflag, size = 0x4, scoped, tag = 'scoped memory for swapnet_forward.2']
    #allocation9 [shape = 'u8[2048]{0}', space=vmem, size = 0x800, scoped, tag = 'input window, operand 2, single buffered']
    #allocation10 [shape = 's32[1]{0}', space=sflag, size = 0x4, scoped, tag = 'scoped memory for swapnet_forward.2']
    #allocation11 [shape = 'u8[262144]{0}', space=vmem, size = 0x40000, scoped, tag = 'input window, operand 3, single buffered']
    #allocation12 [shape = 'u8[1024]{0}', space=vmem, size = 0x400, scoped, tag = 'input window, operand 4, single buffered']
    #allocation13 [shape = 's32[1]{0}', space=sflag, size = 0x4, scoped, tag = 'scoped memory for swapnet_forward.2']
    #allocation14 [shape = 'u8[65536]{0}', space=vmem, size = 0x10000, scoped, tag = 'input window, operand 5, single buffered']
    #allocation15 [shape = 'u8[512]{0}', space=vmem, size = 0x400, scoped, tag = 'input window, operand 6, single buffered']
    #allocation16 [shape = 's32[1]{0}', space=sflag, size = 0x4, scoped, tag = 'scoped memory for swapnet_forward.2']
    #allocation17 [shape = 'u8[49152]{0}', space=vmem, size = 0xc000, dematerialized = true, scoped, tag = 'FusionAdapter Buffer %fusion.1 = bf16[8,3072]{1,0:T(8,128)(2,1)} fusion(%param_6.1, %param_7), kind=kLoop, calls=%fused_computation.1.clone, metadata={op_name="jit(swapnet_forward)/jit(_pad)/pad" stack_frame_id=8}']
    %18 = vsyncpa [#allocation8], 0
    %19 = vsyncpa [#allocation10], 0
    %20 = vsyncpa [#allocation13], 0
    %21 = vsyncpa [#allocation16], 0
    // Predicated region
    $region2: #{swapnet_forward.2} parent=1 // pred_check
      _
    $region3: #{swapnet_forward.2} parent=1 // pred_check_branch
      %23 = sbr.rel (0) target = $region5
    $region4: #{swapnet_forward.2} parent=1 // pred_region
      _
    $region5: #{swapnet_forward.2} parent=1 // pred_fallthru
      _
    // Predicated region
    $region6: #{swapnet_forward.2} parent=1 // pred_check
      _
    $region7: #{swapnet_forward.2} parent=1 // pred_check_branch
      %25 = sbr.rel (0) target = $region9
    $region8: #{swapnet_forward.2} parent=1 // pred_region
      %s27 = ssub.s32 98304, 98304
      %28 = vsyncadd [#allocation8], %s27
      %s29 = sshll.u32 [#allocation7], 4
      %s30 = int_to_ptr.vmem [resolvable:$true] %s29
      %35 = dma.hbm_to_vmem [thread:$0]  %s0, 98304, %s30, [#allocation8], 256, 256, 16
    $region9: #{swapnet_forward.2} parent=1 // pred_fallthru
      _
    // Predicated region
    $region10: #{swapnet_forward.2} parent=1 // pred_check
      _
    $region11: #{swapnet_forward.2} parent=1 // pred_check_branch
      %37 = sbr.rel (0) target = $region13
    $region12: #{swapnet_forward.2} parent=1 // pred_region
      %s39 = ssub.s32 64, 64
      %40 = vsyncadd [#allocation10], %s39
      %s42 = sshll.u32 [#allocation9], 4
      %s43 = int_to_ptr.vmem [resolvable:$true] %s42
      %45 = dma.hbm_to_vmem [thread:$0]  %s1, 64, %s43, [#allocation10]
    $region13: #{swapnet_forward.2} parent=1 // pred_fallthru
      _
    // Predicated region
    $region14: #{swapnet_forward.2} parent=1 // pred_check
      _
    $region15: #{swapnet_forward.2} parent=1 // pred_check_branch
      %47 = sbr.rel (0) target = $region17
    $region16: #{swapnet_forward.2} parent=1 // pred_region
      %s49 = ssub.s32 8192, 8192
      %50 = vsyncadd [#allocation10], %s49
      %s51 = sshll.u32 [#allocation11], 4
      %s52 = int_to_ptr.vmem [resolvable:$true] %s51
      %57 = dma.hbm_to_vmem [thread:$0]  %s2, 8192, %s52, [#allocation10], 128, 128, 8
    $region17: #{swapnet_forward.2} parent=1 // pred_fallthru
      _
    // Predicated region
    $region18: #{swapnet_forward.2} parent=1 // pred_check
      _
    $region19: #{swapnet_forward.2} parent=1 // pred_check_branch
      %59 = sbr.rel (0) target = $region21
    $region20: #{swapnet_forward.2} parent=1 // pred_region
      %s61 = ssub.s32 32, 32
      %62 = vsyncadd [#allocation13], %s61
      %s64 = sshll.u32 [#allocation12], 4
      %s65 = int_to_ptr.vmem [resolvable:$true] %s64
      %67 = dma.hbm_to_vmem [thread:$0]  %s3, 32, %s65, [#allocation13]
    $region21: #{swapnet_forward.2} parent=1 // pred_fallthru
      _
    // Predicated region
    $region22: #{swapnet_forward.2} parent=1 // pred_check
      _
    $region23: #{swapnet_forward.2} parent=1 // pred_check_branch
      %69 = sbr.rel (0) target = $region25
    $region24: #{swapnet_forward.2} parent=1 // pred_region
      %s71 = ssub.s32 2048, 2048
      %72 = vsyncadd [#allocation13], %s71
      %s73 = sshll.u32 [#allocation14], 4
      %s74 = int_to_ptr.vmem [resolvable:$true] %s73
      %79 = dma.hbm_to_vmem [thread:$0]  %s4, 2048, %s74, [#allocation13], 64, 64, 4
    $region25: #{swapnet_forward.2} parent=1 // pred_fallthru
      _
    // Predicated region
    $region26: #{swapnet_forward.2} parent=1 // pred_check
      _
    $region27: #{swapnet_forward.2} parent=1 // pred_check_branch
      %81 = sbr.rel (0) target = $region29
    $region28: #{swapnet_forward.2} parent=1 // pred_region
      %s83 = ssub.s32 16, 16
      %84 = vsyncadd [#allocation16], %s83
      %s86 = sshll.u32 [#allocation15], 4
      %s87 = int_to_ptr.vmem [resolvable:$true] %s86
      %89 = dma.hbm_to_vmem [thread:$0]  %s5, 16, %s87, [#allocation16]
    $region29: #{swapnet_forward.2} parent=1 // pred_fallthru
      _
    // Predicated region
    $region30: #{swapnet_forward.2} parent=1 // pred_check
      _
    $region31: #{swapnet_forward.2} parent=1 // pred_check_branch
      %91 = sbr.rel (0) target = $region33
    $region32: #{swapnet_forward.2} parent=1 // pred_region
      %92 = dma.done [#allocation8], 98304
    $region33: #{swapnet_forward.2} parent=1 // pred_fallthru
      _
    // Predicated region
    $region34: #{swapnet_forward.2} parent=1 // pred_check
      _
    $region35: #{swapnet_forward.2} parent=1 // pred_check_branch
      %94 = sbr.rel (0) target = $region37
    $region36: #{swapnet_forward.2} parent=1 // pred_region
      %95 = dma.done [#allocation10], 64
    $region37: #{swapnet_forward.2} parent=1 // pred_fallthru
      _
    // Predicated region
    $region38: #{swapnet_forward.2} parent=1 // pred_check
      _
    $region39: #{swapnet_forward.2} parent=1 // pred_check_branch
      %97 = sbr.rel (0) target = $region41
    $region40: #{swapnet_forward.2} parent=1 // pred_region
      %98 = dma.done [#allocation10], 8192
    $region41: #{swapnet_forward.2} parent=1 // pred_fallthru
      _
    // Predicated region
    $region42: #{swapnet_forward.2} parent=1 // pred_check
      _
    $region43: #{swapnet_forward.2} parent=1 // pred_check_branch
      %100 = sbr.rel (0) target = $region45
    $region44: #{swapnet_forward.2} parent=1 // pred_region
      %101 = dma.done [#allocation13], 32
    $region45: #{swapnet_forward.2} parent=1 // pred_fallthru
      _
    // Predicated region
    $region46: #{swapnet_forward.2} parent=1 // pred_check
      _
    $region47: #{swapnet_forward.2} parent=1 // pred_check_branch
      %103 = sbr.rel (0) target = $region49
    $region48: #{swapnet_forward.2} parent=1 // pred_region
      %104 = dma.done [#allocation13], 2048
    $region49: #{swapnet_forward.2} parent=1 // pred_fallthru
      _
    // Predicated region
    $region50: #{swapnet_forward.2} parent=1 // pred_check
      _
    $region51: #{swapnet_forward.2} parent=1 // pred_check_branch
      %106 = sbr.rel (0) target = $region53
    $region52: #{swapnet_forward.2} parent=1 // pred_region
      %107 = dma.done [#allocation16], 16
    $region53: #{swapnet_forward.2} parent=1 // pred_fallthru
      _
    %s109 = sor.u32 3, 1
    %s110 = sand.u32 %s109, 1
    %v111 = vld [vmem:[%s6] sm:%s110]
    %v112 = vunpack.c.l.bf16 %v111
    %v113 = vunpack.c.h.bf16 %v111
    %v114 = vlaneseq
    %v115 = vshrl.u32 %v114, 7
    %vm117 = vcmp.lt.s32.totalorder %v115, 2
    %v118 = vsel %vm117, %v112, %v14
    %v119 = vpack.c.bf16 0.0, %v118
    %121 = vst [vmem:[#allocation17] sm:$0xf] %v119
    %s122 = scalar_lea.vmem %s6, 1
    %s124 = sor.u32 3, 1
    %s125 = sand.u32 %s124, 1
    %v126 = vld [vmem:[%s122] sm:%s125]
    %v127 = vunpack.c.l.bf16 %v126
    %v128 = vunpack.c.h.bf16 %v126
    %v129 = vlaneseq
    %v130 = vshrl.u32 %v129, 7
    %vm132 = vcmp.lt.s32.totalorder %v130, 2
    %v133 = vsel %vm132, %v127, %v14
    %s134 = scalar_lea.vmem [#allocation17], 4
    %v135 = vpack.c.bf16 0.0, %v133
    %137 = vst [vmem:[%s134] sm:$0xf] %v135
    %s138 = scalar_lea.vmem %s6, 2
    %s140 = sor.u32 3, 1
    %s141 = sand.u32 %s140, 1
    %v142 = vld [vmem:[%s138] sm:%s141]
    %v143 = vunpack.c.l.bf16 %v142
    %v144 = vunpack.c.h.bf16 %v142
    %v145 = vlaneseq
    %v146 = vshrl.u32 %v145, 7
    %vm148 = vcmp.lt.s32.totalorder %v146, 2
    %v149 = vsel %vm148, %v143, %v14
    %s150 = scalar_lea.vmem [#allocation17], 8
    %v151 = vpack.c.bf16 0.0, %v149
    %153 = vst [vmem:[%s150] sm:$0xf] %v151
    %s154 = scalar_lea.vmem %s6, 3
    %s156 = sor.u32 3, 1
    %s157 = sand.u32 %s156, 1
    %v158 = vld [vmem:[%s154] sm:%s157]
    %v159 = vunpack.c.l.bf16 %v158
    %v160 = vunpack.c.h.bf16 %v158
    %v161 = vlaneseq
    %v162 = vshrl.u32 %v161, 7
    %vm164 = vcmp.lt.s32.totalorder %v162, 2
    %v165 = vsel %vm164, %v159, %v14
    %s166 = scalar_lea.vmem [#allocation17], 12
    %v167 = vpack.c.bf16 0.0, %v165
    %169 = vst [vmem:[%s166] sm:$0xf] %v167
    %s170 = scalar_lea.vmem %s6, 4
    %s172 = sor.u32 3, 1
    %s173 = sand.u32 %s172, 1
    %v174 = vld [vmem:[%s170] sm:%s173]
    %v175 = vunpack.c.l.bf16 %v174
    %v176 = vunpack.c.h.bf16 %v174
    %v177 = vlaneseq
    %v178 = vshrl.u32 %v177, 7
    %vm180 = vcmp.lt.s32.totalorder %v178, 2
    %v181 = vsel %vm180, %v175, %v14
    %s182 = scalar_lea.vmem [#allocation17], 16
    %v183 = vpack.c.bf16 0.0, %v181
    %185 = vst [vmem:[%s182] sm:$0xf] %v183
    %s186 = scalar_lea.vmem %s6, 5
    %s188 = sor.u32 3, 1
    %s189 = sand.u32 %s188, 1
    %v190 = vld [vmem:[%s186] sm:%s189]
    %v191 = vunpack.c.l.bf16 %v190
    %v192 = vunpack.c.h.bf16 %v190
    %v193 = vlaneseq
    %v194 = vshrl.u32 %v193, 7
    %vm196 = vcmp.lt.s32.totalorder %v194, 2
    %v197 = vsel %vm196, %v191, %v14
    %s198 = scalar_lea.vmem [#allocation17], 20
    %v199 = vpack.c.bf16 0.0, %v197
    %201 = vst [vmem:[%s198] sm:$0xf] %v199
    %s202 = scalar_lea.vmem %s6, 6
    %s204 = sor.u32 3, 1
    %s205 = sand.u32 %s204, 1
    %v206 = vld [vmem:[%s202] sm:%s205]
    %v207 = vunpack.c.l.bf16 %v206
    %v208 = vunpack.c.h.bf16 %v206
    %v209 = vlaneseq
    %v210 = vshrl.u32 %v209, 7
    %vm212 = vcmp.lt.s32.totalorder %v210, 2
    %v213 = vsel %vm212, %v207, %v14
    %s214 = scalar_lea.vmem [#allocation17], 24
    %v215 = vpack.c.bf16 0.0, %v213
    %217 = vst [vmem:[%s214] sm:$0xf] %v215
    %s218 = scalar_lea.vmem %s6, 7
    %s220 = sor.u32 3, 1
    %s221 = sand.u32 %s220, 1
    %v222 = vld [vmem:[%s218] sm:%s221]
    %v223 = vunpack.c.l.bf16 %v222
    %v224 = vunpack.c.h.bf16 %v222
    %v225 = vlaneseq
    %v226 = vshrl.u32 %v225, 7
    %vm228 = vcmp.lt.s32.totalorder %v226, 2
    %v229 = vsel %vm228, %v223, %v14
    %s230 = scalar_lea.vmem [#allocation17], 28
    %v231 = vpack.c.bf16 0.0, %v229
    %233 = vst [vmem:[%s230] sm:$0xf] %v231
    %s234 = scalar_lea.vmem %s6, 8
    %s236 = sor.u32 3, 1
    %s237 = sand.u32 %s236, 1
    %v238 = vld [vmem:[%s234] sm:%s237]
    %v239 = vunpack.c.l.bf16 %v238
    %v240 = vunpack.c.h.bf16 %v238
    %v241 = vlaneseq
    %v242 = vshrl.u32 %v241, 7
    %vm244 = vcmp.lt.s32.totalorder %v242, 2
    %v245 = vsel %vm244, %v239, %v14
    %s246 = scalar_lea.vmem [#allocation17], 32
    %v247 = vpack.c.bf16 0.0, %v245
    %249 = vst [vmem:[%s246] sm:$0xf] %v247
    %s250 = scalar_lea.vmem %s6, 9
    %s252 = sor.u32 3, 1
    %s253 = sand.u32 %s252, 1
    %v254 = vld [vmem:[%s250] sm:%s253]
    %v255 = vunpack.c.l.bf16 %v254
    %v256 = vunpack.c.h.bf16 %v254
    %v257 = vlaneseq
    %v258 = vshrl.u32 %v257, 7
    %vm260 = vcmp.lt.s32.totalorder %v258, 2
    %v261 = vsel %vm260, %v255, %v14
    %s262 = scalar_lea.vmem [#allocation17], 36
    %v263 = vpack.c.bf16 0.0, %v261
    %265 = vst [vmem:[%s262] sm:$0xf] %v263
    %s266 = scalar_lea.vmem %s6, 10
    %s268 = sor.u32 3, 1
    %s269 = sand.u32 %s268, 1
    %v270 = vld [vmem:[%s266] sm:%s269]
    %v271 = vunpack.c.l.bf16 %v270
    %v272 = vunpack.c.h.bf16 %v270
    %v273 = vlaneseq
    %v274 = vshrl.u32 %v273, 7
    %vm276 = vcmp.lt.s32.totalorder %v274, 2
    %v277 = vsel %vm276, %v271, %v14
    %s278 = scalar_lea.vmem [#allocation17], 40
    %v279 = vpack.c.bf16 0.0, %v277
    %281 = vst [vmem:[%s278] sm:$0xf] %v279
    %s282 = scalar_lea.vmem %s6, 11
    %s284 = sor.u32 3, 1
    %s285 = sand.u32 %s284, 1
    %v286 = vld [vmem:[%s282] sm:%s285]
    %v287 = vunpack.c.l.bf16 %v286
    %v288 = vunpack.c.h.bf16 %v286
    %v289 = vlaneseq
    %v290 = vshrl.u32 %v289, 7
    %vm292 = vcmp.lt.s32.totalorder %v290, 2
    %v293 = vsel %vm292, %v287, %v14
    %s294 = scalar_lea.vmem [#allocation17], 44
    %v295 = vpack.c.bf16 0.0, %v293
    %297 = vst [vmem:[%s294] sm:$0xf] %v295
    %s298 = scalar_lea.vmem %s6, 12
    %s300 = sor.u32 3, 1
    %s301 = sand.u32 %s300, 1
    %v302 = vld [vmem:[%s298] sm:%s301]
    %v303 = vunpack.c.l.bf16 %v302
    %v304 = vunpack.c.h.bf16 %v302
    %v305 = vlaneseq
    %v306 = vshrl.u32 %v305, 7
    %vm308 = vcmp.lt.s32.totalorder %v306, 2
    %v309 = vsel %vm308, %v303, %v14
    %s310 = scalar_lea.vmem [#allocation17], 48
    %v311 = vpack.c.bf16 0.0, %v309
    %313 = vst [vmem:[%s310] sm:$0xf] %v311
    %s314 = scalar_lea.vmem %s6, 13
    %s316 = sor.u32 3, 1
    %s317 = sand.u32 %s316, 1
    %v318 = vld [vmem:[%s314] sm:%s317]
    %v319 = vunpack.c.l.bf16 %v318
    %v320 = vunpack.c.h.bf16 %v318
    %v321 = vlaneseq
    %v322 = vshrl.u32 %v321, 7
    %vm324 = vcmp.lt.s32.totalorder %v322, 2
    %v325 = vsel %vm324, %v319, %v14
    %s326 = scalar_lea.vmem [#allocation17], 52
    %v327 = vpack.c.bf16 0.0, %v325
    %329 = vst [vmem:[%s326] sm:$0xf] %v327
    %s330 = scalar_lea.vmem %s6, 14
    %s332 = sor.u32 3, 1
    %s333 = sand.u32 %s332, 1
    %v334 = vld [vmem:[%s330] sm:%s333]
    %v335 = vunpack.c.l.bf16 %v334
    %v336 = vunpack.c.h.bf16 %v334
    %v337 = vlaneseq
    %v338 = vshrl.u32 %v337, 7
    %vm340 = vcmp.lt.s32.totalorder %v338, 2
    %v341 = vsel %vm340, %v335, %v14
    %s342 = scalar_lea.vmem [#allocation17], 56
    %v343 = vpack.c.bf16 0.0, %v341
    %345 = vst [vmem:[%s342] sm:$0xf] %v343
    %s346 = scalar_lea.vmem %s6, 15
    %s348 = sor.u32 3, 1
    %s349 = sand.u32 %s348, 1
    %v350 = vld [vmem:[%s346] sm:%s349]
    %v351 = vunpack.c.l.bf16 %v350
    %v352 = vunpack.c.h.bf16 %v350
    %v353 = vlaneseq
    %v354 = vshrl.u32 %v353, 7
    %vm356 = vcmp.lt.s32.totalorder %v354, 2
    %v357 = vsel %vm356, %v351, %v14
    %s358 = scalar_lea.vmem [#allocation17], 60
    %v359 = vpack.c.bf16 0.0, %v357
    %361 = vst [vmem:[%s358] sm:$0xf] %v359
    %s362 = scalar_lea.vmem %s6, 16
    %s364 = sor.u32 3, 1
    %s365 = sand.u32 %s364, 1
    %v366 = vld [vmem:[%s362] sm:%s365]
    %v367 = vunpack.c.l.bf16 %v366
    %v368 = vunpack.c.h.bf16 %v366
    %v369 = vlaneseq
    %v370 = vshrl.u32 %v369, 7
    %vm372 = vcmp.lt.s32.totalorder %v370, 2
    %v373 = vsel %vm372, %v367, %v14
    %s374 = scalar_lea.vmem [#allocation17], 64
    %v375 = vpack.c.bf16 0.0, %v373
    %377 = vst [vmem:[%s374] sm:$0xf] %v375
    %s378 = scalar_lea.vmem %s6, 17
    %s380 = sor.u32 3, 1
    %s381 = sand.u32 %s380, 1
    %v382 = vld [vmem:[%s378] sm:%s381]
    %v383 = vunpack.c.l.bf16 %v382
    %v384 = vunpack.c.h.bf16 %v382
    %v385 = vlaneseq
    %v386 = vshrl.u32 %v385, 7
    %vm388 = vcmp.lt.s32.totalorder %v386, 2
    %v389 = vsel %vm388, %v383, %v14
    %s390 = scalar_lea.vmem [#allocation17], 68
    %v391 = vpack.c.bf16 0.0, %v389
    %393 = vst [vmem:[%s390] sm:$0xf] %v391
    %s394 = scalar_lea.vmem %s6, 18
    %s396 = sor.u32 3, 1
    %s397 = sand.u32 %s396, 1
    %v398 = vld [vmem:[%s394] sm:%s397]
    %v399 = vunpack.c.l.bf16 %v398
    %v400 = vunpack.c.h.bf16 %v398
    %v401 = vlaneseq
    %v402 = vshrl.u32 %v401, 7
    %vm404 = vcmp.lt.s32.totalorder %v402, 2
    %v405 = vsel %vm404, %v399, %v14
    %s406 = scalar_lea.vmem [#allocation17], 72
    %v407 = vpack.c.bf16 0.0, %v405
    %409 = vst [vmem:[%s406] sm:$0xf] %v407
    %s410 = scalar_lea.vmem %s6, 19
    %s412 = sor.u32 3, 1
    %s413 = sand.u32 %s412, 1
    %v414 = vld [vmem:[%s410] sm:%s413]
    %v415 = vunpack.c.l.bf16 %v414
    %v416 = vunpack.c.h.bf16 %v414
    %v417 = vlaneseq
    %v418 = vshrl.u32 %v417, 7
    %vm420 = vcmp.lt.s32.totalorder %v418, 2
    %v421 = vsel %vm420, %v415, %v14
    %s422 = scalar_lea.vmem [#allocation17], 76
    %v423 = vpack.c.bf16 0.0, %v421
    %425 = vst [vmem:[%s422] sm:$0xf] %v423
    %s426 = scalar_lea.vmem %s6, 20
    %s428 = sor.u32 3, 1
    %s429 = sand.u32 %s428, 1
    %v430 = vld [vmem:[%s426] sm:%s429]
    %v431 = vunpack.c.l.bf16 %v430
    %v432 = vunpack.c.h.bf16 %v430
    %v433 = vlaneseq
    %v434 = vshrl.u32 %v433, 7
    %vm436 = vcmp.lt.s32.totalorder %v434, 2
    %v437 = vsel %vm436, %v431, %v14
    %s438 = scalar_lea.vmem [#allocation17], 80
    %v439 = vpack.c.bf16 0.0, %v437
    %441 = vst [vmem:[%s438] sm:$0xf] %v439
    %s442 = scalar_lea.vmem %s6, 21
    %s444 = sor.u32 3, 1
    %s445 = sand.u32 %s444, 1
    %v446 = vld [vmem:[%s442] sm:%s445]
    %v447 = vunpack.c.l.bf16 %v446
    %v448 = vunpack.c.h.bf16 %v446
    %v449 = vlaneseq
    %v450 = vshrl.u32 %v449, 7
    %vm452 = vcmp.lt.s32.totalorder %v450, 2
    %v453 = vsel %vm452, %v447, %v14
    %s454 = scalar_lea.vmem [#allocation17], 84
    %v455 = vpack.c.bf16 0.0, %v453
    %457 = vst [vmem:[%s454] sm:$0xf] %v455
    %s458 = scalar_lea.vmem %s6, 22
    %s460 = sor.u32 3, 1
    %s461 = sand.u32 %s460, 1
    %v462 = vld [vmem:[%s458] sm:%s461]
    %v463 = vunpack.c.l.bf16 %v462
    %v464 = vunpack.c.h.bf16 %v462
    %v465 = vlaneseq
    %v466 = vshrl.u32 %v465, 7
    %vm468 = vcmp.lt.s32.totalorder %v466, 2
    %v469 = vsel %vm468, %v463, %v14
    %s470 = scalar_lea.vmem [#allocation17], 88
    %v471 = vpack.c.bf16 0.0, %v469
    %473 = vst [vmem:[%s470] sm:$0xf] %v471
    %s474 = scalar_lea.vmem %s6, 23
    %s476 = sor.u32 3, 1
    %s477 = sand.u32 %s476, 1
    %v478 = vld [vmem:[%s474] sm:%s477]
    %v479 = vunpack.c.l.bf16 %v478
    %v480 = vunpack.c.h.bf16 %v478
    %v481 = vlaneseq
    %v482 = vshrl.u32 %v481, 7
    %vm484 = vcmp.lt.s32.totalorder %v482, 2
    %v485 = vsel %vm484, %v479, %v14
    %s486 = scalar_lea.vmem [#allocation17], 92
    %v487 = vpack.c.bf16 0.0, %v485
    %489 = vst [vmem:[%s486] sm:$0xf] %v487
    %v491 = vld [vmem:[#allocation17] sm:$0xff]
    %v492 = vld [vmem:[#allocation17 + $0x8] sm:$0xff]
    %v493 = vld [vmem:[#allocation17 + $0x10] sm:$0xff]
    %v494 = vld [vmem:[#allocation17 + $0x18] sm:$0xff]
    %v495 = vld [vmem:[#allocation17 + $0x20] sm:$0xff]
    %v496 = vld [vmem:[#allocation17 + $0x28] sm:$0xff]
    %v497 = vld [vmem:[#allocation17 + $0x30] sm:$0xff]
    %v498 = vld [vmem:[#allocation17 + $0x38] sm:$0xff]
    %v499 = vld [vmem:[#allocation17 + $0x40] sm:$0xff]
    %v500 = vld [vmem:[#allocation17 + $0x48] sm:$0xff]
    %v501 = vld [vmem:[#allocation17 + $0x50] sm:$0xff]
    %v502 = vld [vmem:[#allocation17 + $0x58] sm:$0xff]
    %v503 = vld [vmem:[#allocation7] sm:$0xff]
    %v504 = vld [vmem:[#allocation7 + $0x8] sm:$0xff]
    %v505 = vld [vmem:[#allocation7 + $0x10] sm:$0xff]
    %v506 = vld [vmem:[#allocation7 + $0x18] sm:$0xff]
    %v507 = vld [vmem:[#allocation7 + $0x20] sm:$0xff]
    %v508 = vld [vmem:[#allocation7 + $0x28] sm:$0xff]
    %v509 = vld [vmem:[#allocation7 + $0x30] sm:$0xff]
    %v510 = vld [vmem:[#allocation7 + $0x38] sm:$0xff]
    %v511 = vld [vmem:[#allocation7 + $0x40] sm:$0xff]
    %v512 = vld [vmem:[#allocation7 + $0x48] sm:$0xff]
    %v513 = vld [vmem:[#allocation7 + $0x50] sm:$0xff]
    %v514 = vld [vmem:[#allocation7 + $0x58] sm:$0xff]
    %v515 = vld [vmem:[#allocation7 + $0x60] sm:$0xff]
    %v516 = vld [vmem:[#allocation7 + $0x68] sm:$0xff]
    %v517 = vld [vmem:[#allocation7 + $0x70] sm:$0xff]
    %v518 = vld [vmem:[#allocation7 + $0x78] sm:$0xff]
    %v519 = vld [vmem:[#allocation7 + $0x80] sm:$0xff]
    %v520 = vld [vmem:[#allocation7 + $0x88] sm:$0xff]
    %v521 = vld [vmem:[#allocation7 + $0x90] sm:$0xff]
    %v522 = vld [vmem:[#allocation7 + $0x98] sm:$0xff]
    %v523 = vld [vmem:[#allocation7 + $0xa0] sm:$0xff]
    %v524 = vld [vmem:[#allocation7 + $0xa8] sm:$0xff]
    %v525 = vld [vmem:[#allocation7 + $0xb0] sm:$0xff]
    %v526 = vld [vmem:[#allocation7 + $0xb8] sm:$0xff]
    %v527 = vld [vmem:[#allocation7 + $0xc0] sm:$0xff]
    %v528 = vld [vmem:[#allocation7 + $0xc8] sm:$0xff]
    %v529 = vld [vmem:[#allocation7 + $0xd0] sm:$0xff]
    %v530 = vld [vmem:[#allocation7 + $0xd8] sm:$0xff]
    %v531 = vld [vmem:[#allocation7 + $0xe0] sm:$0xff]
    %v532 = vld [vmem:[#allocation7 + $0xe8] sm:$0xff]
    %v533 = vld [vmem:[#allocation7 + $0xf0] sm:$0xff]
    %v534 = vld [vmem:[#allocation7 + $0xf8] sm:$0xff]
    %v535 = vld [vmem:[#allocation7 + $0x100] sm:$0xff]
    %v536 = vld [vmem:[#allocation7 + $0x108] sm:$0xff]
    %v537 = vld [vmem:[#allocation7 + $0x110] sm:$0xff]
    %v538 = vld [vmem:[#allocation7 + $0x118] sm:$0xff]
    %v539 = vld [vmem:[#allocation7 + $0x120] sm:$0xff]
    %v540 = vld [vmem:[#allocation7 + $0x128] sm:$0xff]
    %v541 = vld [vmem:[#allocation7 + $0x130] sm:$0xff]
    %v542 = vld [vmem:[#allocation7 + $0x138] sm:$0xff]
    %v543 = vld [vmem:[#allocation7 + $0x140] sm:$0xff]
    %v544 = vld [vmem:[#allocation7 + $0x148] sm:$0xff]
    %v545 = vld [vmem:[#allocation7 + $0x150] sm:$0xff]
    %v546 = vld [vmem:[#allocation7 + $0x158] sm:$0xff]
    %v547 = vld [vmem:[#allocation7 + $0x160] sm:$0xff]
    %v548 = vld [vmem:[#allocation7 + $0x168] sm:$0xff]
    %v549 = vld [vmem:[#allocation7 + $0x170] sm:$0xff]
    %v550 = vld [vmem:[#allocation7 + $0x178] sm:$0xff]
    %v551 = vld [vmem:[#allocation7 + $0x180] sm:$0xff]
    %v552 = vld [vmem:[#allocation7 + $0x188] sm:$0xff]
    %v553 = vld [vmem:[#allocation7 + $0x190] sm:$0xff]
    %v554 = vld [vmem:[#allocation7 + $0x198] sm:$0xff]
    %v555 = vld [vmem:[#allocation7 + $0x1a0] sm:$0xff]
    %v556 = vld [vmem:[#allocation7 + $0x1a8] sm:$0xff]
    %v557 = vld [vmem:[#allocation7 + $0x1b0] sm:$0xff]
    %v558 = vld [vmem:[#allocation7 + $0x1b8] sm:$0xff]
    %v559 = vld [vmem:[#allocation7 + $0x1c0] sm:$0xff]
    %v560 = vld [vmem:[#allocation7 + $0x1c8] sm:$0xff]
    %v561 = vld [vmem:[#allocation7 + $0x1d0] sm:$0xff]
    %v562 = vld [vmem:[#allocation7 + $0x1d8] sm:$0xff]
    %v563 = vld [vmem:[#allocation7 + $0x1e0] sm:$0xff]
    %v564 = vld [vmem:[#allocation7 + $0x1e8] sm:$0xff]
    %v565 = vld [vmem:[#allocation7 + $0x1f0] sm:$0xff]
    %v566 = vld [vmem:[#allocation7 + $0x1f8] sm:$0xff]
    %v567 = vld [vmem:[#allocation7 + $0x200] sm:$0xff]
    %v568 = vld [vmem:[#allocation7 + $0x208] sm:$0xff]
    %v569 = vld [vmem:[#allocation7 + $0x210] sm:$0xff]
    %v570 = vld [vmem:[#allocation7 + $0x218] sm:$0xff]
    %v571 = vld [vmem:[#allocation7 + $0x220] sm:$0xff]
    %v572 = vld [vmem:[#allocation7 + $0x228] sm:$0xff]
    %v573 = vld [vmem:[#allocation7 + $0x230] sm:$0xff]
    %v574 = vld [vmem:[#allocation7 + $0x238] sm:$0xff]
    %v575 = vld [vmem:[#allocation7 + $0x240] sm:$0xff]
    %v576 = vld [vmem:[#allocation7 + $0x248] sm:$0xff]
    %v577 = vld [vmem:[#allocation7 + $0x250] sm:$0xff]
    %v578 = vld [vmem:[#allocation7 + $0x258] sm:$0xff]
    %v579 = vld [vmem:[#allocation7 + $0x260] sm:$0xff]
    %v580 = vld [vmem:[#allocation7 + $0x268] sm:$0xff]
    %v581 = vld [vmem:[#allocation7 + $0x270] sm:$0xff]
    %v582 = vld [vmem:[#allocation7 + $0x278] sm:$0xff]
    %v583 = vld [vmem:[#allocation7 + $0x280] sm:$0xff]
    %v584 = vld [vmem:[#allocation7 + $0x288] sm:$0xff]
    %v585 = vld [vmem:[#allocation7 + $0x290] sm:$0xff]
    %v586 = vld [vmem:[#allocation7 + $0x298] sm:$0xff]
    %v587 = vld [vmem:[#allocation7 + $0x2a0] sm:$0xff]
    %v588 = vld [vmem:[#allocation7 + $0x2a8] sm:$0xff]
    %v589 = vld [vmem:[#allocation7 + $0x2b0] sm:$0xff]
    %v590 = vld [vmem:[#allocation7 + $0x2b8] sm:$0xff]
    %v591 = vld [vmem:[#allocation7 + $0x2c0] sm:$0xff]
    %v592 = vld [vmem:[#allocation7 + $0x2c8] sm:$0xff]
    %v593 = vld [vmem:[#allocation7 + $0x2d0] sm:$0xff]
    %v594 = vld [vmem:[#allocation7 + $0x2d8] sm:$0xff]
    %v595 = vld [vmem:[#allocation7 + $0x2e0] sm:$0xff]
    %v596 = vld [vmem:[#allocation7 + $0x2e8] sm:$0xff]
    %v597 = vld [vmem:[#allocation7 + $0x2f0] sm:$0xff]
    %v598 = vld [vmem:[#allocation7 + $0x2f8] sm:$0xff]
    %v599 = vld [vmem:[#allocation7 + $0x300] sm:$0xff]
    %v600 = vld [vmem:[#allocation7 + $0x308] sm:$0xff]
    %v601 = vld [vmem:[#allocation7 + $0x310] sm:$0xff]
    %v602 = vld [vmem:[#allocation7 + $0x318] sm:$0xff]
    %v603 = vld [vmem:[#allocation7 + $0x320] sm:$0xff]
    %v604 = vld [vmem:[#allocation7 + $0x328] sm:$0xff]
    %v605 = vld [vmem:[#allocation7 + $0x330] sm:$0xff]
    %v606 = vld [vmem:[#allocation7 + $0x338] sm:$0xff]
    %v607 = vld [vmem:[#allocation7 + $0x340] sm:$0xff]
    %v608 = vld [vmem:[#allocation7 + $0x348] sm:$0xff]
    %v609 = vld [vmem:[#allocation7 + $0x350] sm:$0xff]
    %v610 = vld [vmem:[#allocation7 + $0x358] sm:$0xff]
    %v611 = vld [vmem:[#allocation7 + $0x360] sm:$0xff]
    %v612 = vld [vmem:[#allocation7 + $0x368] sm:$0xff]
    %v613 = vld [vmem:[#allocation7 + $0x370] sm:$0xff]
    %v614 = vld [vmem:[#allocation7 + $0x378] sm:$0xff]
    %v615 = vld [vmem:[#allocation7 + $0x380] sm:$0xff]
    %v616 = vld [vmem:[#allocation7 + $0x388] sm:$0xff]
    %v617 = vld [vmem:[#allocation7 + $0x390] sm:$0xff]
    %v618 = vld [vmem:[#allocation7 + $0x398] sm:$0xff]
    %v619 = vld [vmem:[#allocation7 + $0x3a0] sm:$0xff]
    %v620 = vld [vmem:[#allocation7 + $0x3a8] sm:$0xff]
    %v621 = vld [vmem:[#allocation7 + $0x3b0] sm:$0xff]
    %v622 = vld [vmem:[#allocation7 + $0x3b8] sm:$0xff]
    %v623 = vld [vmem:[#allocation7 + $0x3c0] sm:$0xff]
    %v624 = vld [vmem:[#allocation7 + $0x3c8] sm:$0xff]
    %v625 = vld [vmem:[#allocation7 + $0x3d0] sm:$0xff]
    %v626 = vld [vmem:[#allocation7 + $0x3d8] sm:$0xff]
    %v627 = vld [vmem:[#allocation7 + $0x3e0] sm:$0xff]
    %v628 = vld [vmem:[#allocation7 + $0x3e8] sm:$0xff]
    %v629 = vld [vmem:[#allocation7 + $0x3f0] sm:$0xff]
    %v630 = vld [vmem:[#allocation7 + $0x3f8] sm:$0xff]
    %v631 = vld [vmem:[#allocation7 + $0x400] sm:$0xff]
    %v632 = vld [vmem:[#allocation7 + $0x408] sm:$0xff]
    %v633 = vld [vmem:[#allocation7 + $0x410] sm:$0xff]
    %v634 = vld [vmem:[#allocation7 + $0x418] sm:$0xff]
    %v635 = vld [vmem:[#allocation7 + $0x420] sm:$0xff]
    %v636 = vld [vmem:[#allocation7 + $0x428] sm:$0xff]
    %v637 = vld [vmem:[#allocation7 + $0x430] sm:$0xff]
    %v638 = vld [vmem:[#allocation7 + $0x438] sm:$0xff]
    %v639 = vld [vmem:[#allocation7 + $0x440] sm:$0xff]
    %v640 = vld [vmem:[#allocation7 + $0x448] sm:$0xff]
    %v641 = vld [vmem:[#allocation7 + $0x450] sm:$0xff]
    %v642 = vld [vmem:[#allocation7 + $0x458] sm:$0xff]
    %v643 = vld [vmem:[#allocation7 + $0x460] sm:$0xff]
    %v644 = vld [vmem:[#allocation7 + $0x468] sm:$0xff]
    %v645 = vld [vmem:[#allocation7 + $0x470] sm:$0xff]
    %v646 = vld [vmem:[#allocation7 + $0x478] sm:$0xff]
    %v647 = vld [vmem:[#allocation7 + $0x480] sm:$0xff]
    %v648 = vld [vmem:[#allocation7 + $0x488] sm:$0xff]
    %v649 = vld [vmem:[#allocation7 + $0x490] sm:$0xff]
    %v650 = vld [vmem:[#allocation7 + $0x498] sm:$0xff]
    %v651 = vld [vmem:[#allocation7 + $0x4a0] sm:$0xff]
    %v652 = vld [vmem:[#allocation7 + $0x4a8] sm:$0xff]
    %v653 = vld [vmem:[#allocation7 + $0x4b0] sm:$0xff]
    %v654 = vld [vmem:[#allocation7 + $0x4b8] sm:$0xff]
    %v655 = vld [vmem:[#allocation7 + $0x4c0] sm:$0xff]
    %v656 = vld [vmem:[#allocation7 + $0x4c8] sm:$0xff]
    %v657 = vld [vmem:[#allocation7 + $0x4d0] sm:$0xff]
    %v658 = vld [vmem:[#allocation7 + $0x4d8] sm:$0xff]
    %v659 = vld [vmem:[#allocation7 + $0x4e0] sm:$0xff]
    %v660 = vld [vmem:[#allocation7 + $0x4e8] sm:$0xff]
    %v661 = vld [vmem:[#allocation7 + $0x4f0] sm:$0xff]
    %v662 = vld [vmem:[#allocation7 + $0x4f8] sm:$0xff]
    %v663 = vld [vmem:[#allocation7 + $0x500] sm:$0xff]
    %v664 = vld [vmem:[#allocation7 + $0x508] sm:$0xff]
    %v665 = vld [vmem:[#allocation7 + $0x510] sm:$0xff]
    %v666 = vld [vmem:[#allocation7 + $0x518] sm:$0xff]
    %v667 = vld [vmem:[#allocation7 + $0x520] sm:$0xff]
    %v668 = vld [vmem:[#allocation7 + $0x528] sm:$0xff]
    %v669 = vld [vmem:[#allocation7 + $0x530] sm:$0xff]
    %v670 = vld [vmem:[#allocation7 + $0x538] sm:$0xff]
    %v671 = vld [vmem:[#allocation7 + $0x540] sm:$0xff]
    %v672 = vld [vmem:[#allocation7 + $0x548] sm:$0xff]
    %v673 = vld [vmem:[#allocation7 + $0x550] sm:$0xff]
    %v674 = vld [vmem:[#allocation7 + $0x558] sm:$0xff]
    %v675 = vld [vmem:[#allocation7 + $0x560] sm:$0xff]
    %v676 = vld [vmem:[#allocation7 + $0x568] sm:$0xff]
    %v677 = vld [vmem:[#allocation7 + $0x570] sm:$0xff]
    %v678 = vld [vmem:[#allocation7 + $0x578] sm:$0xff]
    %v679 = vld [vmem:[#allocation7 + $0x580] sm:$0xff]
    %v680 = vld [vmem:[#allocation7 + $0x588] sm:$0xff]
    %v681 = vld [vmem:[#allocation7 + $0x590] sm:$0xff]
    %v682 = vld [vmem:[#allocation7 + $0x598] sm:$0xff]
    %v683 = vld [vmem:[#allocation7 + $0x5a0] sm:$0xff]
    %v684 = vld [vmem:[#allocation7 + $0x5a8] sm:$0xff]
    %v685 = vld [vmem:[#allocation7 + $0x5b0] sm:$0xff]
    %v686 = vld [vmem:[#allocation7 + $0x5b8] sm:$0xff]
    %v687 = vld [vmem:[#allocation7 + $0x5c0] sm:$0xff]
    %v688 = vld [vmem:[#allocation7 + $0x5c8] sm:$0xff]
    %v689 = vld [vmem:[#allocation7 + $0x5d0] sm:$0xff]
    %v690 = vld [vmem:[#allocation7 + $0x5d8] sm:$0xff]
    %v691 = vld [vmem:[#allocation7 + $0x5e0] sm:$0xff]
    %v692 = vld [vmem:[#allocation7 + $0x5e8] sm:$0xff]
    %v693 = vld [vmem:[#allocation7 + $0x5f0] sm:$0xff]
    %v694 = vld [vmem:[#allocation7 + $0x5f8] sm:$0xff]
    %v695 = vld [vmem:[#allocation7 + $0x600] sm:$0xff]
    %v696 = vld [vmem:[#allocation7 + $0x608] sm:$0xff]
    %v697 = vld [vmem:[#allocation7 + $0x610] sm:$0xff]
    %v698 = vld [vmem:[#allocation7 + $0x618] sm:$0xff]
    %v699 = vld [vmem:[#allocation7 + $0x620] sm:$0xff]
    %v700 = vld [vmem:[#allocation7 + $0x628] sm:$0xff]
    %v701 = vld [vmem:[#allocation7 + $0x630] sm:$0xff]
    %v702 = vld [vmem:[#allocation7 + $0x638] sm:$0xff]
    %v703 = vld [vmem:[#allocation7 + $0x640] sm:$0xff]
    %v704 = vld [vmem:[#allocation7 + $0x648] sm:$0xff]
    %v705 = vld [vmem:[#allocation7 + $0x650] sm:$0xff]
    %v706 = vld [vmem:[#allocation7 + $0x658] sm:$0xff]
    %v707 = vld [vmem:[#allocation7 + $0x660] sm:$0xff]
    %v708 = vld [vmem:[#allocation7 + $0x668] sm:$0xff]
    %v709 = vld [vmem:[#allocation7 + $0x670] sm:$0xff]
    %v710 = vld [vmem:[#allocation7 + $0x678] sm:$0xff]
    %v711 = vld [vmem:[#allocation7 + $0x680] sm:$0xff]
    %v712 = vld [vmem:[#allocation7 + $0x688] sm:$0xff]
    %v713 = vld [vmem:[#allocation7 + $0x690] sm:$0xff]
    %v714 = vld [vmem:[#allocation7 + $0x698] sm:$0xff]
    %v715 = vld [vmem:[#allocation7 + $0x6a0] sm:$0xff]
    %v716 = vld [vmem:[#allocation7 + $0x6a8] sm:$0xff]
    %v717 = vld [vmem:[#allocation7 + $0x6b0] sm:$0xff]
    %v718 = vld [vmem:[#allocation7 + $0x6b8] sm:$0xff]
    %v719 = vld [vmem:[#allocation7 + $0x6c0] sm:$0xff]
    %v720 = vld [vmem:[#allocation7 + $0x6c8] sm:$0xff]
    %v721 = vld [vmem:[#allocation7 + $0x6d0] sm:$0xff]
    %v722 = vld [vmem:[#allocation7 + $0x6d8] sm:$0xff]
    %v723 = vld [vmem:[#allocation7 + $0x6e0] sm:$0xff]
    %v724 = vld [vmem:[#allocation7 + $0x6e8] sm:$0xff]
    %v725 = vld [vmem:[#allocation7 + $0x6f0] sm:$0xff]
    %v726 = vld [vmem:[#allocation7 + $0x6f8] sm:$0xff]
    %v727 = vld [vmem:[#allocation7 + $0x700] sm:$0xff]
    %v728 = vld [vmem:[#allocation7 + $0x708] sm:$0xff]
    %v729 = vld [vmem:[#allocation7 + $0x710] sm:$0xff]
    %v730 = vld [vmem:[#allocation7 + $0x718] sm:$0xff]
    %v731 = vld [vmem:[#allocation7 + $0x720] sm:$0xff]
    %v732 = vld [vmem:[#allocation7 + $0x728] sm:$0xff]
    %v733 = vld [vmem:[#allocation7 + $0x730] sm:$0xff]
    %v734 = vld [vmem:[#allocation7 + $0x738] sm:$0xff]
    %v735 = vld [vmem:[#allocation7 + $0x740] sm:$0xff]
    %v736 = vld [vmem:[#allocation7 + $0x748] sm:$0xff]
    %v737 = vld [vmem:[#allocation7 + $0x750] sm:$0xff]
    %v738 = vld [vmem:[#allocation7 + $0x758] sm:$0xff]
    %v739 = vld [vmem:[#allocation7 + $0x760] sm:$0xff]
    %v740 = vld [vmem:[#allocation7 + $0x768] sm:$0xff]
    %v741 = vld [vmem:[#allocation7 + $0x770] sm:$0xff]
    %v742 = vld [vmem:[#allocation7 + $0x778] sm:$0xff]
    %v743 = vld [vmem:[#allocation7 + $0x780] sm:$0xff]
    %v744 = vld [vmem:[#allocation7 + $0x788] sm:$0xff]
    %v745 = vld [vmem:[#allocation7 + $0x790] sm:$0xff]
    %v746 = vld [vmem:[#allocation7 + $0x798] sm:$0xff]
    %v747 = vld [vmem:[#allocation7 + $0x7a0] sm:$0xff]
    %v748 = vld [vmem:[#allocation7 + $0x7a8] sm:$0xff]
    %v749 = vld [vmem:[#allocation7 + $0x7b0] sm:$0xff]
    %v750 = vld [vmem:[#allocation7 + $0x7b8] sm:$0xff]
    %v751 = vld [vmem:[#allocation7 + $0x7c0] sm:$0xff]
    %v752 = vld [vmem:[#allocation7 + $0x7c8] sm:$0xff]
    %v753 = vld [vmem:[#allocation7 + $0x7d0] sm:$0xff]
    %v754 = vld [vmem:[#allocation7 + $0x7d8] sm:$0xff]
    %v755 = vld [vmem:[#allocation7 + $0x7e0] sm:$0xff]
    %v756 = vld [vmem:[#allocation7 + $0x7e8] sm:$0xff]
    %v757 = vld [vmem:[#allocation7 + $0x7f0] sm:$0xff]
    %v758 = vld [vmem:[#allocation7 + $0x7f8] sm:$0xff]
    %v759 = vld [vmem:[#allocation7 + $0x800] sm:$0xff]
    %v760 = vld [vmem:[#allocation7 + $0x808] sm:$0xff]
    %v761 = vld [vmem:[#allocation7 + $0x810] sm:$0xff]
    %v762 = vld [vmem:[#allocation7 + $0x818] sm:$0xff]
    %v763 = vld [vmem:[#allocation7 + $0x820] sm:$0xff]
    %v764 = vld [vmem:[#allocation7 + $0x828] sm:$0xff]
    %v765 = vld [vmem:[#allocation7 + $0x830] sm:$0xff]
    %v766 = vld [vmem:[#allocation7 + $0x838] sm:$0xff]
    %v767 = vld [vmem:[#allocation7 + $0x840] sm:$0xff]
    %v768 = vld [vmem:[#allocation7 + $0x848] sm:$0xff]
    %v769 = vld [vmem:[#allocation7 + $0x850] sm:$0xff]
    %v770 = vld [vmem:[#allocation7 + $0x858] sm:$0xff]
    %v771 = vld [vmem:[#allocation7 + $0x860] sm:$0xff]
    %v772 = vld [vmem:[#allocation7 + $0x868] sm:$0xff]
    %v773 = vld [vmem:[#allocation7 + $0x870] sm:$0xff]
    %v774 = vld [vmem:[#allocation7 + $0x878] sm:$0xff]
    %v775 = vld [vmem:[#allocation7 + $0x880] sm:$0xff]
    %v776 = vld [vmem:[#allocation7 + $0x888] sm:$0xff]
    %v777 = vld [vmem:[#allocation7 + $0x890] sm:$0xff]
    %v778 = vld [vmem:[#allocation7 + $0x898] sm:$0xff]
    %v779 = vld [vmem:[#allocation7 + $0x8a0] sm:$0xff]
    %v780 = vld [vmem:[#allocation7 + $0x8a8] sm:$0xff]
    %v781 = vld [vmem:[#allocation7 + $0x8b0] sm:$0xff]
    %v782 = vld [vmem:[#allocation7 + $0x8b8] sm:$0xff]
    %v783 = vld [vmem:[#allocation7 + $0x8c0] sm:$0xff]
    %v784 = vld [vmem:[#allocation7 + $0x8c8] sm:$0xff]
    %v785 = vld [vmem:[#allocation7 + $0x8d0] sm:$0xff]
    %v786 = vld [vmem:[#allocation7 + $0x8d8] sm:$0xff]
    %v787 = vld [vmem:[#allocation7 + $0x8e0] sm:$0xff]
    %v788 = vld [vmem:[#allocation7 + $0x8e8] sm:$0xff]
    %v789 = vld [vmem:[#allocation7 + $0x8f0] sm:$0xff]
    %v790 = vld [vmem:[#allocation7 + $0x8f8] sm:$0xff]
    %v791 = vld [vmem:[#allocation7 + $0x900] sm:$0xff]
    %v792 = vld [vmem:[#allocation7 + $0x908] sm:$0xff]
    %v793 = vld [vmem:[#allocation7 + $0x910] sm:$0xff]
    %v794 = vld [vmem:[#allocation7 + $0x918] sm:$0xff]
    %v795 = vld [vmem:[#allocation7 + $0x920] sm:$0xff]
    %v796 = vld [vmem:[#allocation7 + $0x928] sm:$0xff]
    %v797 = vld [vmem:[#allocation7 + $0x930] sm:$0xff]
    %v798 = vld [vmem:[#allocation7 + $0x938] sm:$0xff]
    %v799 = vld [vmem:[#allocation7 + $0x940] sm:$0xff]
    %v800 = vld [vmem:[#allocation7 + $0x948] sm:$0xff]
    %v801 = vld [vmem:[#allocation7 + $0x950] sm:$0xff]
    %v802 = vld [vmem:[#allocation7 + $0x958] sm:$0xff]
    %v803 = vld [vmem:[#allocation7 + $0x960] sm:$0xff]
    %v804 = vld [vmem:[#allocation7 + $0x968] sm:$0xff]
    %v805 = vld [vmem:[#allocation7 + $0x970] sm:$0xff]
    %v806 = vld [vmem:[#allocation7 + $0x978] sm:$0xff]
    %v807 = vld [vmem:[#allocation7 + $0x980] sm:$0xff]
    %v808 = vld [vmem:[#allocation7 + $0x988] sm:$0xff]
    %v809 = vld [vmem:[#allocation7 + $0x990] sm:$0xff]
    %v810 = vld [vmem:[#allocation7 + $0x998] sm:$0xff]
    %v811 = vld [vmem:[#allocation7 + $0x9a0] sm:$0xff]
    %v812 = vld [vmem:[#allocation7 + $0x9a8] sm:$0xff]
    %v813 = vld [vmem:[#allocation7 + $0x9b0] sm:$0xff]
    %v814 = vld [vmem:[#allocation7 + $0x9b8] sm:$0xff]
    %v815 = vld [vmem:[#allocation7 + $0x9c0] sm:$0xff]
    %v816 = vld [vmem:[#allocation7 + $0x9c8] sm:$0xff]
    %v817 = vld [vmem:[#allocation7 + $0x9d0] sm:$0xff]
    %v818 = vld [vmem:[#allocation7 + $0x9d8] sm:$0xff]
    %v819 = vld [vmem:[#allocation7 + $0x9e0] sm:$0xff]
    %v820 = vld [vmem:[#allocation7 + $0x9e8] sm:$0xff]
    %v821 = vld [vmem:[#allocation7 + $0x9f0] sm:$0xff]
    %v822 = vld [vmem:[#allocation7 + $0x9f8] sm:$0xff]
    %v823 = vld [vmem:[#allocation7 + $0xa00] sm:$0xff]
    %v824 = vld [vmem:[#allocation7 + $0xa08] sm:$0xff]
    %v825 = vld [vmem:[#allocation7 + $0xa10] sm:$0xff]
    %v826 = vld [vmem:[#allocation7 + $0xa18] sm:$0xff]
    %v827 = vld [vmem:[#allocation7 + $0xa20] sm:$0xff]
    %v828 = vld [vmem:[#allocation7 + $0xa28] sm:$0xff]
    %v829 = vld [vmem:[#allocation7 + $0xa30] sm:$0xff]
    %v830 = vld [vmem:[#allocation7 + $0xa38] sm:$0xff]
    %v831 = vld [vmem:[#allocation7 + $0xa40] sm:$0xff]
    %v832 = vld [vmem:[#allocation7 + $0xa48] sm:$0xff]
    %v833 = vld [vmem:[#allocation7 + $0xa50] sm:$0xff]
    %v834 = vld [vmem:[#allocation7 + $0xa58] sm:$0xff]
    %v835 = vld [vmem:[#allocation7 + $0xa60] sm:$0xff]
    %v836 = vld [vmem:[#allocation7 + $0xa68] sm:$0xff]
    %v837 = vld [vmem:[#allocation7 + $0xa70] sm:$0xff]
    %v838 = vld [vmem:[#allocation7 + $0xa78] sm:$0xff]
    %v839 = vld [vmem:[#allocation7 + $0xa80] sm:$0xff]
    %v840 = vld [vmem:[#allocation7 + $0xa88] sm:$0xff]
    %v841 = vld [vmem:[#allocation7 + $0xa90] sm:$0xff]
    %v842 = vld [vmem:[#allocation7 + $0xa98] sm:$0xff]
    %v843 = vld [vmem:[#allocation7 + $0xaa0] sm:$0xff]
    %v844 = vld [vmem:[#allocation7 + $0xaa8] sm:$0xff]
    %v845 = vld [vmem:[#allocation7 + $0xab0] sm:$0xff]
    %v846 = vld [vmem:[#allocation7 + $0xab8] sm:$0xff]
    %v847 = vld [vmem:[#allocation7 + $0xac0] sm:$0xff]
    %v848 = vld [vmem:[#allocation7 + $0xac8] sm:$0xff]
    %v849 = vld [vmem:[#allocation7 + $0xad0] sm:$0xff]
    %v850 = vld [vmem:[#allocation7 + $0xad8] sm:$0xff]
    %v851 = vld [vmem:[#allocation7 + $0xae0] sm:$0xff]
    %v852 = vld [vmem:[#allocation7 + $0xae8] sm:$0xff]
    %v853 = vld [vmem:[#allocation7 + $0xaf0] sm:$0xff]
    %v854 = vld [vmem:[#allocation7 + $0xaf8] sm:$0xff]
    %v855 = vld [vmem:[#allocation7 + $0xb00] sm:$0xff]
    %v856 = vld [vmem:[#allocation7 + $0xb08] sm:$0xff]
    %v857 = vld [vmem:[#allocation7 + $0xb10] sm:$0xff]
    %v858 = vld [vmem:[#allocation7 + $0xb18] sm:$0xff]
    %v859 = vld [vmem:[#allocation7 + $0xb20] sm:$0xff]
    %v860 = vld [vmem:[#allocation7 + $0xb28] sm:$0xff]
    %v861 = vld [vmem:[#allocation7 + $0xb30] sm:$0xff]
    %v862 = vld [vmem:[#allocation7 + $0xb38] sm:$0xff]
    %v863 = vld [vmem:[#allocation7 + $0xb40] sm:$0xff]
    %v864 = vld [vmem:[#allocation7 + $0xb48] sm:$0xff]
    %v865 = vld [vmem:[#allocation7 + $0xb50] sm:$0xff]
    %v866 = vld [vmem:[#allocation7 + $0xb58] sm:$0xff]
    %v867 = vld [vmem:[#allocation7 + $0xb60] sm:$0xff]
    %v868 = vld [vmem:[#allocation7 + $0xb68] sm:$0xff]
    %v869 = vld [vmem:[#allocation7 + $0xb70] sm:$0xff]
    %v870 = vld [vmem:[#allocation7 + $0xb78] sm:$0xff]
    %v871 = vld [vmem:[#allocation7 + $0xb80] sm:$0xff]
    %v872 = vld [vmem:[#allocation7 + $0xb88] sm:$0xff]
    %v873 = vld [vmem:[#allocation7 + $0xb90] sm:$0xff]
    %v874 = vld [vmem:[#allocation7 + $0xb98] sm:$0xff]
    %v875 = vld [vmem:[#allocation7 + $0xba0] sm:$0xff]
    %v876 = vld [vmem:[#allocation7 + $0xba8] sm:$0xff]
    %v877 = vld [vmem:[#allocation7 + $0xbb0] sm:$0xff]
    %v878 = vld [vmem:[#allocation7 + $0xbb8] sm:$0xff]
    %v879 = vld [vmem:[#allocation7 + $0xbc0] sm:$0xff]
    %v880 = vld [vmem:[#allocation7 + $0xbc8] sm:$0xff]
    %v881 = vld [vmem:[#allocation7 + $0xbd0] sm:$0xff]
    %v882 = vld [vmem:[#allocation7 + $0xbd8] sm:$0xff]
    %v883 = vld [vmem:[#allocation7 + $0xbe0] sm:$0xff]
    %v884 = vld [vmem:[#allocation7 + $0xbe8] sm:$0xff]
    %v885 = vld [vmem:[#allocation7 + $0xbf0] sm:$0xff]
    %v886 = vld [vmem:[#allocation7 + $0xbf8] sm:$0xff]
    %v887 = vld [vmem:[#allocation7 + $0xc00] sm:$0xff]
    %v888 = vld [vmem:[#allocation7 + $0xc08] sm:$0xff]
    %v889 = vld [vmem:[#allocation7 + $0xc10] sm:$0xff]
    %v890 = vld [vmem:[#allocation7 + $0xc18] sm:$0xff]
    %v891 = vld [vmem:[#allocation7 + $0xc20] sm:$0xff]
    %v892 = vld [vmem:[#allocation7 + $0xc28] sm:$0xff]
    %v893 = vld [vmem:[#allocation7 + $0xc30] sm:$0xff]
    %v894 = vld [vmem:[#allocation7 + $0xc38] sm:$0xff]
    %v895 = vld [vmem:[#allocation7 + $0xc40] sm:$0xff]
    %v896 = vld [vmem:[#allocation7 + $0xc48] sm:$0xff]
    %v897 = vld [vmem:[#allocation7 + $0xc50] sm:$0xff]
    %v898 = vld [vmem:[#allocation7 + $0xc58] sm:$0xff]
    %v899 = vld [vmem:[#allocation7 + $0xc60] sm:$0xff]
    %v900 = vld [vmem:[#allocation7 + $0xc68] sm:$0xff]
    %v901 = vld [vmem:[#allocation7 + $0xc70] sm:$0xff]
    %v902 = vld [vmem:[#allocation7 + $0xc78] sm:$0xff]
    %v903 = vld [vmem:[#allocation7 + $0xc80] sm:$0xff]
    %v904 = vld [vmem:[#allocation7 + $0xc88] sm:$0xff]
    %v905 = vld [vmem:[#allocation7 + $0xc90] sm:$0xff]
    %v906 = vld [vmem:[#allocation7 + $0xc98] sm:$0xff]
    %v907 = vld [vmem:[#allocation7 + $0xca0] sm:$0xff]
    %v908 = vld [vmem:[#allocation7 + $0xca8] sm:$0xff]
    %v909 = vld [vmem:[#allocation7 + $0xcb0] sm:$0xff]
    %v910 = vld [vmem:[#allocation7 + $0xcb8] sm:$0xff]
    %v911 = vld [vmem:[#allocation7 + $0xcc0] sm:$0xff]
    %v912 = vld [vmem:[#allocation7 + $0xcc8] sm:$0xff]
    %v913 = vld [vmem:[#allocation7 + $0xcd0] sm:$0xff]
    %v914 = vld [vmem:[#allocation7 + $0xcd8] sm:$0xff]
    %v915 = vld [vmem:[#allocation7 + $0xce0] sm:$0xff]
    %v916 = vld [vmem:[#allocation7 + $0xce8] sm:$0xff]
    %v917 = vld [vmem:[#allocation7 + $0xcf0] sm:$0xff]
    %v918 = vld [vmem:[#allocation7 + $0xcf8] sm:$0xff]
    %v919 = vld [vmem:[#allocation7 + $0xd00] sm:$0xff]
    %v920 = vld [vmem:[#allocation7 + $0xd08] sm:$0xff]
    %v921 = vld [vmem:[#allocation7 + $0xd10] sm:$0xff]
    %v922 = vld [vmem:[#allocation7 + $0xd18] sm:$0xff]
    %v923 = vld [vmem:[#allocation7 + $0xd20] sm:$0xff]
    %v924 = vld [vmem:[#allocation7 + $0xd28] sm:$0xff]
    %v925 = vld [vmem:[#allocation7 + $0xd30] sm:$0xff]
    %v926 = vld [vmem:[#allocation7 + $0xd38] sm:$0xff]
    %v927 = vld [vmem:[#allocation7 + $0xd40] sm:$0xff]
    %v928 = vld [vmem:[#allocation7 + $0xd48] sm:$0xff]
    %v929 = vld [vmem:[#allocation7 + $0xd50] sm:$0xff]
    %v930 = vld [vmem:[#allocation7 + $0xd58] sm:$0xff]
    %v931 = vld [vmem:[#allocation7 + $0xd60] sm:$0xff]
    %v932 = vld [vmem:[#allocation7 + $0xd68] sm:$0xff]
    %v933 = vld [vmem:[#allocation7 + $0xd70] sm:$0xff]
    %v934 = vld [vmem:[#allocation7 + $0xd78] sm:$0xff]
    %v935 = vld [vmem:[#allocation7 + $0xd80] sm:$0xff]
    %v936 = vld [vmem:[#allocation7 + $0xd88] sm:$0xff]
    %v937 = vld [vmem:[#allocation7 + $0xd90] sm:$0xff]
    %v938 = vld [vmem:[#allocation7 + $0xd98] sm:$0xff]
    %v939 = vld [vmem:[#allocation7 + $0xda0] sm:$0xff]
    %v940 = vld [vmem:[#allocation7 + $0xda8] sm:$0xff]
    %v941 = vld [vmem:[#allocation7 + $0xdb0] sm:$0xff]
    %v942 = vld [vmem:[#allocation7 + $0xdb8] sm:$0xff]
    %v943 = vld [vmem:[#allocation7 + $0xdc0] sm:$0xff]
    %v944 = vld [vmem:[#allocation7 + $0xdc8] sm:$0xff]
    %v945 = vld [vmem:[#allocation7 + $0xdd0] sm:$0xff]
    %v946 = vld [vmem:[#allocation7 + $0xdd8] sm:$0xff]
    %v947 = vld [vmem:[#allocation7 + $0xde0] sm:$0xff]
    %v948 = vld [vmem:[#allocation7 + $0xde8] sm:$0xff]
    %v949 = vld [vmem:[#allocation7 + $0xdf0] sm:$0xff]
    %v950 = vld [vmem:[#allocation7 + $0xdf8] sm:$0xff]
    %v951 = vld [vmem:[#allocation7 + $0xe00] sm:$0xff]
    %v952 = vld [vmem:[#allocation7 + $0xe08] sm:$0xff]
    %v953 = vld [vmem:[#allocation7 + $0xe10] sm:$0xff]
    %v954 = vld [vmem:[#allocation7 + $0xe18] sm:$0xff]
    %v955 = vld [vmem:[#allocation7 + $0xe20] sm:$0xff]
    %v956 = vld [vmem:[#allocation7 + $0xe28] sm:$0xff]
    %v957 = vld [vmem:[#allocation7 + $0xe30] sm:$0xff]
    %v958 = vld [vmem:[#allocation7 + $0xe38] sm:$0xff]
    %v959 = vld [vmem:[#allocation7 + $0xe40] sm:$0xff]
    %v960 = vld [vmem:[#allocation7 + $0xe48] sm:$0xff]
    %v961 = vld [vmem:[#allocation7 + $0xe50] sm:$0xff]
    %v962 = vld [vmem:[#allocation7 + $0xe58] sm:$0xff]
    %v963 = vld [vmem:[#allocation7 + $0xe60] sm:$0xff]
    %v964 = vld [vmem:[#allocation7 + $0xe68] sm:$0xff]
    %v965 = vld [vmem:[#allocation7 + $0xe70] sm:$0xff]
    %v966 = vld [vmem:[#allocation7 + $0xe78] sm:$0xff]
    %v967 = vld [vmem:[#allocation7 + $0xe80] sm:$0xff]
    %v968 = vld [vmem:[#allocation7 + $0xe88] sm:$0xff]
    %v969 = vld [vmem:[#allocation7 + $0xe90] sm:$0xff]
    %v970 = vld [vmem:[#allocation7 + $0xe98] sm:$0xff]
    %v971 = vld [vmem:[#allocation7 + $0xea0] sm:$0xff]
    %v972 = vld [vmem:[#allocation7 + $0xea8] sm:$0xff]
    %v973 = vld [vmem:[#allocation7 + $0xeb0] sm:$0xff]
    %v974 = vld [vmem:[#allocation7 + $0xeb8] sm:$0xff]
    %v975 = vld [vmem:[#allocation7 + $0xec0] sm:$0xff]
    %v976 = vld [vmem:[#allocation7 + $0xec8] sm:$0xff]
    %v977 = vld [vmem:[#allocation7 + $0xed0] sm:$0xff]
    %v978 = vld [vmem:[#allocation7 + $0xed8] sm:$0xff]
    %v979 = vld [vmem:[#allocation7 + $0xee0] sm:$0xff]
    %v980 = vld [vmem:[#allocation7 + $0xee8] sm:$0xff]
    %v981 = vld [vmem:[#allocation7 + $0xef0] sm:$0xff]
    %v982 = vld [vmem:[#allocation7 + $0xef8] sm:$0xff]
    %v983 = vld [vmem:[#allocation7 + $0xf00] sm:$0xff]
    %v984 = vld [vmem:[#allocation7 + $0xf08] sm:$0xff]
    %v985 = vld [vmem:[#allocation7 + $0xf10] sm:$0xff]
    %v986 = vld [vmem:[#allocation7 + $0xf18] sm:$0xff]
    %v987 = vld [vmem:[#allocation7 + $0xf20] sm:$0xff]
    %v988 = vld [vmem:[#allocation7 + $0xf28] sm:$0xff]
    %v989 = vld [vmem:[#allocation7 + $0xf30] sm:$0xff]
    %v990 = vld [vmem:[#allocation7 + $0xf38] sm:$0xff]
    %v991 = vld [vmem:[#allocation7 + $0xf40] sm:$0xff]
    %v992 = vld [vmem:[#allocation7 + $0xf48] sm:$0xff]
    %v993 = vld [vmem:[#allocation7 + $0xf50] sm:$0xff]
    %v994 = vld [vmem:[#allocation7 + $0xf58] sm:$0xff]
    %v995 = vld [vmem:[#allocation7 + $0xf60] sm:$0xff]
    %v996 = vld [vmem:[#allocation7 + $0xf68] sm:$0xff]
    %v997 = vld [vmem:[#allocation7 + $0xf70] sm:$0xff]
    %v998 = vld [vmem:[#allocation7 + $0xf78] sm:$0xff]
    %v999 = vld [vmem:[#allocation7 + $0xf80] sm:$0xff]
    %v1000 = vld [vmem:[#allocation7 + $0xf88] sm:$0xff]
    %v1001 = vld [vmem:[#allocation7 + $0xf90] sm:$0xff]
    %v1002 = vld [vmem:[#allocation7 + $0xf98] sm:$0xff]
    %v1003 = vld [vmem:[#allocation7 + $0xfa0] sm:$0xff]
    %v1004 = vld [vmem:[#allocation7 + $0xfa8] sm:$0xff]
    %v1005 = vld [vmem:[#allocation7 + $0xfb0] sm:$0xff]
    %v1006 = vld [vmem:[#allocation7 + $0xfb8] sm:$0xff]
    %v1007 = vld [vmem:[#allocation7 + $0xfc0] sm:$0xff]
    %v1008 = vld [vmem:[#allocation7 + $0xfc8] sm:$0xff]
    %v1009 = vld [vmem:[#allocation7 + $0xfd0] sm:$0xff]
    %v1010 = vld [vmem:[#allocation7 + $0xfd8] sm:$0xff]
    %v1011 = vld [vmem:[#allocation7 + $0xfe0] sm:$0xff]
    %v1012 = vld [vmem:[#allocation7 + $0xfe8] sm:$0xff]
    %v1013 = vld [vmem:[#allocation7 + $0xff0] sm:$0xff]
    %v1014 = vld [vmem:[#allocation7 + $0xff8] sm:$0xff]
    %v1015 = vld [vmem:[#allocation7 + $0x1000] sm:$0xff]
    %v1016 = vld [vmem:[#allocation7 + $0x1008] sm:$0xff]
    %v1017 = vld [vmem:[#allocation7 + $0x1010] sm:$0xff]
    %v1018 = vld [vmem:[#allocation7 + $0x1018] sm:$0xff]
    %v1019 = vld [vmem:[#allocation7 + $0x1020] sm:$0xff]
    %v1020 = vld [vmem:[#allocation7 + $0x1028] sm:$0xff]
    %v1021 = vld [vmem:[#allocation7 + $0x1030] sm:$0xff]
    %v1022 = vld [vmem:[#allocation7 + $0x1038] sm:$0xff]
    %v1023 = vld [vmem:[#allocation7 + $0x1040] sm:$0xff]
    %v1024 = vld [vmem:[#allocation7 + $0x1048] sm:$0xff]
    %v1025 = vld [vmem:[#allocation7 + $0x1050] sm:$0xff]
    %v1026 = vld [vmem:[#allocation7 + $0x1058] sm:$0xff]
    %v1027 = vld [vmem:[#allocation7 + $0x1060] sm:$0xff]
    %v1028 = vld [vmem:[#allocation7 + $0x1068] sm:$0xff]
    %v1029 = vld [vmem:[#allocation7 + $0x1070] sm:$0xff]
    %v1030 = vld [vmem:[#allocation7 + $0x1078] sm:$0xff]
    %v1031 = vld [vmem:[#allocation7 + $0x1080] sm:$0xff]
    %v1032 = vld [vmem:[#allocation7 + $0x1088] sm:$0xff]
    %v1033 = vld [vmem:[#allocation7 + $0x1090] sm:$0xff]
    %v1034 = vld [vmem:[#allocation7 + $0x1098] sm:$0xff]
    %v1035 = vld [vmem:[#allocation7 + $0x10a0] sm:$0xff]
    %v1036 = vld [vmem:[#allocation7 + $0x10a8] sm:$0xff]
    %v1037 = vld [vmem:[#allocation7 + $0x10b0] sm:$0xff]
    %v1038 = vld [vmem:[#allocation7 + $0x10b8] sm:$0xff]
    %v1039 = vld [vmem:[#allocation7 + $0x10c0] sm:$0xff]
    %v1040 = vld [vmem:[#allocation7 + $0x10c8] sm:$0xff]
    %v1041 = vld [vmem:[#allocation7 + $0x10d0] sm:$0xff]
    %v1042 = vld [vmem:[#allocation7 + $0x10d8] sm:$0xff]
    %v1043 = vld [vmem:[#allocation7 + $0x10e0] sm:$0xff]
    %v1044 = vld [vmem:[#allocation7 + $0x10e8] sm:$0xff]
    %v1045 = vld [vmem:[#allocation7 + $0x10f0] sm:$0xff]
    %v1046 = vld [vmem:[#allocation7 + $0x10f8] sm:$0xff]
    %v1047 = vld [vmem:[#allocation7 + $0x1100] sm:$0xff]
    %v1048 = vld [vmem:[#allocation7 + $0x1108] sm:$0xff]
    %v1049 = vld [vmem:[#allocation7 + $0x1110] sm:$0xff]
    %v1050 = vld [vmem:[#allocation7 + $0x1118] sm:$0xff]
    %v1051 = vld [vmem:[#allocation7 + $0x1120] sm:$0xff]
    %v1052 = vld [vmem:[#allocation7 + $0x1128] sm:$0xff]
    %v1053 = vld [vmem:[#allocation7 + $0x1130] sm:$0xff]
    %v1054 = vld [vmem:[#allocation7 + $0x1138] sm:$0xff]
    %v1055 = vld [vmem:[#allocation7 + $0x1140] sm:$0xff]
    %v1056 = vld [vmem:[#allocation7 + $0x1148] sm:$0xff]
    %v1057 = vld [vmem:[#allocation7 + $0x1150] sm:$0xff]
    %v1058 = vld [vmem:[#allocation7 + $0x1158] sm:$0xff]
    %v1059 = vld [vmem:[#allocation7 + $0x1160] sm:$0xff]
    %v1060 = vld [vmem:[#allocation7 + $0x1168] sm:$0xff]
    %v1061 = vld [vmem:[#allocation7 + $0x1170] sm:$0xff]
    %v1062 = vld [vmem:[#allocation7 + $0x1178] sm:$0xff]
    %v1063 = vld [vmem:[#allocation7 + $0x1180] sm:$0xff]
    %v1064 = vld [vmem:[#allocation7 + $0x1188] sm:$0xff]
    %v1065 = vld [vmem:[#allocation7 + $0x1190] sm:$0xff]
    %v1066 = vld [vmem:[#allocation7 + $0x1198] sm:$0xff]
    %v1067 = vld [vmem:[#allocation7 + $0x11a0] sm:$0xff]
    %v1068 = vld [vmem:[#allocation7 + $0x11a8] sm:$0xff]
    %v1069 = vld [vmem:[#allocation7 + $0x11b0] sm:$0xff]
    %v1070 = vld [vmem:[#allocation7 + $0x11b8] sm:$0xff]
    %v1071 = vld [vmem:[#allocation7 + $0x11c0] sm:$0xff]
    %v1072 = vld [vmem:[#allocation7 + $0x11c8] sm:$0xff]
    %v1073 = vld [vmem:[#allocation7 + $0x11d0] sm:$0xff]
    %v1074 = vld [vmem:[#allocation7 + $0x11d8] sm:$0xff]
    %v1075 = vld [vmem:[#allocation7 + $0x11e0] sm:$0xff]
    %v1076 = vld [vmem:[#allocation7 + $0x11e8] sm:$0xff]
    %v1077 = vld [vmem:[#allocation7 + $0x11f0] sm:$0xff]
    %v1078 = vld [vmem:[#allocation7 + $0x11f8] sm:$0xff]
    %v1079 = vld [vmem:[#allocation7 + $0x1200] sm:$0xff]
    %v1080 = vld [vmem:[#allocation7 + $0x1208] sm:$0xff]
    %v1081 = vld [vmem:[#allocation7 + $0x1210] sm:$0xff]
    %v1082 = vld [vmem:[#allocation7 + $0x1218] sm:$0xff]
    %v1083 = vld [vmem:[#allocation7 + $0x1220] sm:$0xff]
    %v1084 = vld [vmem:[#allocation7 + $0x1228] sm:$0xff]
    %v1085 = vld [vmem:[#allocation7 + $0x1230] sm:$0xff]
    %v1086 = vld [vmem:[#allocation7 + $0x1238] sm:$0xff]
    %v1087 = vld [vmem:[#allocation7 + $0x1240] sm:$0xff]
    %v1088 = vld [vmem:[#allocation7 + $0x1248] sm:$0xff]
    %v1089 = vld [vmem:[#allocation7 + $0x1250] sm:$0xff]
    %v1090 = vld [vmem:[#allocation7 + $0x1258] sm:$0xff]
    %v1091 = vld [vmem:[#allocation7 + $0x1260] sm:$0xff]
    %v1092 = vld [vmem:[#allocation7 + $0x1268] sm:$0xff]
    %v1093 = vld [vmem:[#allocation7 + $0x1270] sm:$0xff]
    %v1094 = vld [vmem:[#allocation7 + $0x1278] sm:$0xff]
    %v1095 = vld [vmem:[#allocation7 + $0x1280] sm:$0xff]
    %v1096 = vld [vmem:[#allocation7 + $0x1288] sm:$0xff]
    %v1097 = vld [vmem:[#allocation7 + $0x1290] sm:$0xff]
    %v1098 = vld [vmem:[#allocation7 + $0x1298] sm:$0xff]
    %v1099 = vld [vmem:[#allocation7 + $0x12a0] sm:$0xff]
    %v1100 = vld [vmem:[#allocation7 + $0x12a8] sm:$0xff]
    %v1101 = vld [vmem:[#allocation7 + $0x12b0] sm:$0xff]
    %v1102 = vld [vmem:[#allocation7 + $0x12b8] sm:$0xff]
    %v1103 = vld [vmem:[#allocation7 + $0x12c0] sm:$0xff]
    %v1104 = vld [vmem:[#allocation7 + $0x12c8] sm:$0xff]
    %v1105 = vld [vmem:[#allocation7 + $0x12d0] sm:$0xff]
    %v1106 = vld [vmem:[#allocation7 + $0x12d8] sm:$0xff]
    %v1107 = vld [vmem:[#allocation7 + $0x12e0] sm:$0xff]
    %v1108 = vld [vmem:[#allocation7 + $0x12e8] sm:$0xff]
    %v1109 = vld [vmem:[#allocation7 + $0x12f0] sm:$0xff]
    %v1110 = vld [vmem:[#allocation7 + $0x12f8] sm:$0xff]
    %v1111 = vld [vmem:[#allocation7 + $0x1300] sm:$0xff]
    %v1112 = vld [vmem:[#allocation7 + $0x1308] sm:$0xff]
    %v1113 = vld [vmem:[#allocation7 + $0x1310] sm:$0xff]
    %v1114 = vld [vmem:[#allocation7 + $0x1318] sm:$0xff]
    %v1115 = vld [vmem:[#allocation7 + $0x1320] sm:$0xff]
    %v1116 = vld [vmem:[#allocation7 + $0x1328] sm:$0xff]
    %v1117 = vld [vmem:[#allocation7 + $0x1330] sm:$0xff]
    %v1118 = vld [vmem:[#allocation7 + $0x1338] sm:$0xff]
    %v1119 = vld [vmem:[#allocation7 + $0x1340] sm:$0xff]
    %v1120 = vld [vmem:[#allocation7 + $0x1348] sm:$0xff]
    %v1121 = vld [vmem:[#allocation7 + $0x1350] sm:$0xff]
    %v1122 = vld [vmem:[#allocation7 + $0x1358] sm:$0xff]
    %v1123 = vld [vmem:[#allocation7 + $0x1360] sm:$0xff]
    %v1124 = vld [vmem:[#allocation7 + $0x1368] sm:$0xff]
    %v1125 = vld [vmem:[#allocation7 + $0x1370] sm:$0xff]
    %v1126 = vld [vmem:[#allocation7 + $0x1378] sm:$0xff]
    %v1127 = vld [vmem:[#allocation7 + $0x1380] sm:$0xff]
    %v1128 = vld [vmem:[#allocation7 + $0x1388] sm:$0xff]
    %v1129 = vld [vmem:[#allocation7 + $0x1390] sm:$0xff]
    %v1130 = vld [vmem:[#allocation7 + $0x1398] sm:$0xff]
    %v1131 = vld [vmem:[#allocation7 + $0x13a0] sm:$0xff]
    %v1132 = vld [vmem:[#allocation7 + $0x13a8] sm:$0xff]
    %v1133 = vld [vmem:[#allocation7 + $0x13b0] sm:$0xff]
    %v1134 = vld [vmem:[#allocation7 + $0x13b8] sm:$0xff]
    %v1135 = vld [vmem:[#allocation7 + $0x13c0] sm:$0xff]
    %v1136 = vld [vmem:[#allocation7 + $0x13c8] sm:$0xff]
    %v1137 = vld [vmem:[#allocation7 + $0x13d0] sm:$0xff]
    %v1138 = vld [vmem:[#allocation7 + $0x13d8] sm:$0xff]
    %v1139 = vld [vmem:[#allocation7 + $0x13e0] sm:$0xff]
    %v1140 = vld [vmem:[#allocation7 + $0x13e8] sm:$0xff]
    %v1141 = vld [vmem:[#allocation7 + $0x13f0] sm:$0xff]
    %v1142 = vld [vmem:[#allocation7 + $0x13f8] sm:$0xff]
    %v1143 = vld [vmem:[#allocation7 + $0x1400] sm:$0xff]
    %v1144 = vld [vmem:[#allocation7 + $0x1408] sm:$0xff]
    %v1145 = vld [vmem:[#allocation7 + $0x1410] sm:$0xff]
    %v1146 = vld [vmem:[#allocation7 + $0x1418] sm:$0xff]
    %v1147 = vld [vmem:[#allocation7 + $0x1420] sm:$0xff]
    %v1148 = vld [vmem:[#allocation7 + $0x1428] sm:$0xff]
    %v1149 = vld [vmem:[#allocation7 + $0x1430] sm:$0xff]
    %v1150 = vld [vmem:[#allocation7 + $0x1438] sm:$0xff]
    %v1151 = vld [vmem:[#allocation7 + $0x1440] sm:$0xff]
    %v1152 = vld [vmem:[#allocation7 + $0x1448] sm:$0xff]
    %v1153 = vld [vmem:[#allocation7 + $0x1450] sm:$0xff]
    %v1154 = vld [vmem:[#allocation7 + $0x1458] sm:$0xff]
    %v1155 = vld [vmem:[#allocation7 + $0x1460] sm:$0xff]
    %v1156 = vld [vmem:[#allocation7 + $0x1468] sm:$0xff]
    %v1157 = vld [vmem:[#allocation7 + $0x1470] sm:$0xff]
    %v1158 = vld [vmem:[#allocation7 + $0x1478] sm:$0xff]
    %v1159 = vld [vmem:[#allocation7 + $0x1480] sm:$0xff]
    %v1160 = vld [vmem:[#allocation7 + $0x1488] sm:$0xff]
    %v1161 = vld [vmem:[#allocation7 + $0x1490] sm:$0xff]
    %v1162 = vld [vmem:[#allocation7 + $0x1498] sm:$0xff]
    %v1163 = vld [vmem:[#allocation7 + $0x14a0] sm:$0xff]
    %v1164 = vld [vmem:[#allocation7 + $0x14a8] sm:$0xff]
    %v1165 = vld [vmem:[#allocation7 + $0x14b0] sm:$0xff]
    %v1166 = vld [vmem:[#allocation7 + $0x14b8] sm:$0xff]
    %v1167 = vld [vmem:[#allocation7 + $0x14c0] sm:$0xff]
    %v1168 = vld [vmem:[#allocation7 + $0x14c8] sm:$0xff]
    %v1169 = vld [vmem:[#allocation7 + $0x14d0] sm:$0xff]
    %v1170 = vld [vmem:[#allocation7 + $0x14d8] sm:$0xff]
    %v1171 = vld [vmem:[#allocation7 + $0x14e0] sm:$0xff]
    %v1172 = vld [vmem:[#allocation7 + $0x14e8] sm:$0xff]
    %v1173 = vld [vmem:[#allocation7 + $0x14f0] sm:$0xff]
    %v1174 = vld [vmem:[#allocation7 + $0x14f8] sm:$0xff]
    %v1175 = vld [vmem:[#allocation7 + $0x1500] sm:$0xff]
    %v1176 = vld [vmem:[#allocation7 + $0x1508] sm:$0xff]
    %v1177 = vld [vmem:[#allocation7 + $0x1510] sm:$0xff]
    %v1178 = vld [vmem:[#allocation7 + $0x1518] sm:$0xff]
    %v1179 = vld [vmem:[#allocation7 + $0x1520] sm:$0xff]
    %v1180 = vld [vmem:[#allocation7 + $0x1528] sm:$0xff]
    %v1181 = vld [vmem:[#allocation7 + $0x1530] sm:$0xff]
    %v1182 = vld [vmem:[#allocation7 + $0x1538] sm:$0xff]
    %v1183 = vld [vmem:[#allocation7 + $0x1540] sm:$0xff]
    %v1184 = vld [vmem:[#allocation7 + $0x1548] sm:$0xff]
    %v1185 = vld [vmem:[#allocation7 + $0x1550] sm:$0xff]
    %v1186 = vld [vmem:[#allocation7 + $0x1558] sm:$0xff]
    %v1187 = vld [vmem:[#allocation7 + $0x1560] sm:$0xff]
    %v1188 = vld [vmem:[#allocation7 + $0x1568] sm:$0xff]
    %v1189 = vld [vmem:[#allocation7 + $0x1570] sm:$0xff]
    %v1190 = vld [vmem:[#allocation7 + $0x1578] sm:$0xff]
    %v1191 = vld [vmem:[#allocation7 + $0x1580] sm:$0xff]
    %v1192 = vld [vmem:[#allocation7 + $0x1588] sm:$0xff]
    %v1193 = vld [vmem:[#allocation7 + $0x1590] sm:$0xff]
    %v1194 = vld [vmem:[#allocation7 + $0x1598] sm:$0xff]
    %v1195 = vld [vmem:[#allocation7 + $0x15a0] sm:$0xff]
    %v1196 = vld [vmem:[#allocation7 + $0x15a8] sm:$0xff]
    %v1197 = vld [vmem:[#allocation7 + $0x15b0] sm:$0xff]
    %v1198 = vld [vmem:[#allocation7 + $0x15b8] sm:$0xff]
    %v1199 = vld [vmem:[#allocation7 + $0x15c0] sm:$0xff]
    %v1200 = vld [vmem:[#allocation7 + $0x15c8] sm:$0xff]
    %v1201 = vld [vmem:[#allocation7 + $0x15d0] sm:$0xff]
    %v1202 = vld [vmem:[#allocation7 + $0x15d8] sm:$0xff]
    %v1203 = vld [vmem:[#allocation7 + $0x15e0] sm:$0xff]
    %v1204 = vld [vmem:[#allocation7 + $0x15e8] sm:$0xff]
    %v1205 = vld [vmem:[#allocation7 + $0x15f0] sm:$0xff]
    %v1206 = vld [vmem:[#allocation7 + $0x15f8] sm:$0xff]
    %v1207 = vld [vmem:[#allocation7 + $0x1600] sm:$0xff]
    %v1208 = vld [vmem:[#allocation7 + $0x1608] sm:$0xff]
    %v1209 = vld [vmem:[#allocation7 + $0x1610] sm:$0xff]
    %v1210 = vld [vmem:[#allocation7 + $0x1618] sm:$0xff]
    %v1211 = vld [vmem:[#allocation7 + $0x1620] sm:$0xff]
    %v1212 = vld [vmem:[#allocation7 + $0x1628] sm:$0xff]
    %v1213 = vld [vmem:[#allocation7 + $0x1630] sm:$0xff]
    %v1214 = vld [vmem:[#allocation7 + $0x1638] sm:$0xff]
    %v1215 = vld [vmem:[#allocation7 + $0x1640] sm:$0xff]
    %v1216 = vld [vmem:[#allocation7 + $0x1648] sm:$0xff]
    %v1217 = vld [vmem:[#allocation7 + $0x1650] sm:$0xff]
    %v1218 = vld [vmem:[#allocation7 + $0x1658] sm:$0xff]
    %v1219 = vld [vmem:[#allocation7 + $0x1660] sm:$0xff]
    %v1220 = vld [vmem:[#allocation7 + $0x1668] sm:$0xff]
    %v1221 = vld [vmem:[#allocation7 + $0x1670] sm:$0xff]
    %v1222 = vld [vmem:[#allocation7 + $0x1678] sm:$0xff]
    %v1223 = vld [vmem:[#allocation7 + $0x1680] sm:$0xff]
    %v1224 = vld [vmem:[#allocation7 + $0x1688] sm:$0xff]
    %v1225 = vld [vmem:[#allocation7 + $0x1690] sm:$0xff]
    %v1226 = vld [vmem:[#allocation7 + $0x1698] sm:$0xff]
    %v1227 = vld [vmem:[#allocation7 + $0x16a0] sm:$0xff]
    %v1228 = vld [vmem:[#allocation7 + $0x16a8] sm:$0xff]
    %v1229 = vld [vmem:[#allocation7 + $0x16b0] sm:$0xff]
    %v1230 = vld [vmem:[#allocation7 + $0x16b8] sm:$0xff]
    %v1231 = vld [vmem:[#allocation7 + $0x16c0] sm:$0xff]
    %v1232 = vld [vmem:[#allocation7 + $0x16c8] sm:$0xff]
    %v1233 = vld [vmem:[#allocation7 + $0x16d0] sm:$0xff]
    %v1234 = vld [vmem:[#allocation7 + $0x16d8] sm:$0xff]
    %v1235 = vld [vmem:[#allocation7 + $0x16e0] sm:$0xff]
    %v1236 = vld [vmem:[#allocation7 + $0x16e8] sm:$0xff]
    %v1237 = vld [vmem:[#allocation7 + $0x16f0] sm:$0xff]
    %v1238 = vld [vmem:[#allocation7 + $0x16f8] sm:$0xff]
    %v1239 = vld [vmem:[#allocation7 + $0x1700] sm:$0xff]
    %v1240 = vld [vmem:[#allocation7 + $0x1708] sm:$0xff]
    %v1241 = vld [vmem:[#allocation7 + $0x1710] sm:$0xff]
    %v1242 = vld [vmem:[#allocation7 + $0x1718] sm:$0xff]
    %v1243 = vld [vmem:[#allocation7 + $0x1720] sm:$0xff]
    %v1244 = vld [vmem:[#allocation7 + $0x1728] sm:$0xff]
    %v1245 = vld [vmem:[#allocation7 + $0x1730] sm:$0xff]
    %v1246 = vld [vmem:[#allocation7 + $0x1738] sm:$0xff]
    %v1247 = vld [vmem:[#allocation7 + $0x1740] sm:$0xff]
    %v1248 = vld [vmem:[#allocation7 + $0x1748] sm:$0xff]
    %v1249 = vld [vmem:[#allocation7 + $0x1750] sm:$0xff]
    %v1250 = vld [vmem:[#allocation7 + $0x1758] sm:$0xff]
    %v1251 = vld [vmem:[#allocation7 + $0x1760] sm:$0xff]
    %v1252 = vld [vmem:[#allocation7 + $0x1768] sm:$0xff]
    %v1253 = vld [vmem:[#allocation7 + $0x1770] sm:$0xff]
    %v1254 = vld [vmem:[#allocation7 + $0x1778] sm:$0xff]
    %v1255 = vld [vmem:[#allocation7 + $0x1780] sm:$0xff]
    %v1256 = vld [vmem:[#allocation7 + $0x1788] sm:$0xff]
    %v1257 = vld [vmem:[#allocation7 + $0x1790] sm:$0xff]
    %v1258 = vld [vmem:[#allocation7 + $0x1798] sm:$0xff]
    %v1259 = vld [vmem:[#allocation7 + $0x17a0] sm:$0xff]
    %v1260 = vld [vmem:[#allocation7 + $0x17a8] sm:$0xff]
    %v1261 = vld [vmem:[#allocation7 + $0x17b0] sm:$0xff]
    %v1262 = vld [vmem:[#allocation7 + $0x17b8] sm:$0xff]
    %v1263 = vld [vmem:[#allocation7 + $0x17c0] sm:$0xff]
    %v1264 = vld [vmem:[#allocation7 + $0x17c8] sm:$0xff]
    %v1265 = vld [vmem:[#allocation7 + $0x17d0] sm:$0xff]
    %v1266 = vld [vmem:[#allocation7 + $0x17d8] sm:$0xff]
    %v1267 = vld [vmem:[#allocation7 + $0x17e0] sm:$0xff]
    %v1268 = vld [vmem:[#allocation7 + $0x17e8] sm:$0xff]
    %v1269 = vld [vmem:[#allocation7 + $0x17f0] sm:$0xff]
    %v1270 = vld [vmem:[#allocation7 + $0x17f8] sm:$0xff]
    %v1271 = vld [vmem:[#allocation9] sm:$0xf]
    %v1273 = vlaneseq
    %v1274 = vshrl.u32 %v1273, 7
    %v1275 = vsub.s32 0, %v1274
    %v1276 = vrot.slane %v1271, %v1275
    %v1277 = vlaneseq
    %v1278 = vshrl.u32 %v1277, 7
    %v1279 = vsub.s32 1, %v1278
    %v1280 = vrot.slane %v1271, %v1279
    %v1281 = vlaneseq
    %v1282 = vshrl.u32 %v1281, 7
    %v1283 = vsub.s32 2, %v1282
    %v1284 = vrot.slane %v1271, %v1283
    %v1285 = vlaneseq
    %v1286 = vshrl.u32 %v1285, 7
    %v1287 = vsub.s32 3, %v1286
    %v1288 = vrot.slane %v1271, %v1287
    %v1305 = vunpack.c.l.b16 %v491
    %v1306 = vunpack.c.h.b16 %v491
    %v1307 = vunpack.c.l.b16 %v492
    %v1308 = vunpack.c.h.b16 %v492
    %v1309 = vunpack.c.l.b16 %v493
    %v1310 = vunpack.c.h.b16 %v493
    %v1311 = vunpack.c.l.b16 %v494
    %v1312 = vunpack.c.h.b16 %v494
    %v1313 = vunpack.c.l.b16 %v495
    %v1314 = vunpack.c.h.b16 %v495
    %v1315 = vunpack.c.l.b16 %v496
    %v1316 = vunpack.c.h.b16 %v496
    %v1317 = vunpack.c.l.b16 %v497
    %v1318 = vunpack.c.h.b16 %v497
    %v1319 = vunpack.c.l.b16 %v498
    %v1320 = vunpack.c.h.b16 %v498
    %v1321 = vunpack.c.l.b16 %v499
    %v1322 = vunpack.c.h.b16 %v499
    %v1323 = vunpack.c.l.b16 %v500
    %v1324 = vunpack.c.h.b16 %v500
    %v1325 = vunpack.c.l.b16 %v501
    %v1326 = vunpack.c.h.b16 %v501
    %v1327 = vunpack.c.l.b16 %v502
    %v1328 = vunpack.c.h.b16 %v502
    %v1329 = vpack.c.b16 %v1305, %v1305
    %v1330 = vpack.c.b16 %v1306, %v1306
    %v1331 = vpack.c.b16 %v1307, %v1307
    %v1332 = vpack.c.b16 %v1308, %v1308
    %v1333 = vpack.c.b16 %v1309, %v1309
    %v1334 = vpack.c.b16 %v1310, %v1310
    %v1335 = vpack.c.b16 %v1311, %v1311
    %v1336 = vpack.c.b16 %v1312, %v1312
    %v1337 = vpack.c.b16 %v1313, %v1313
    %v1338 = vpack.c.b16 %v1314, %v1314
    %v1339 = vpack.c.b16 %v1315, %v1315
    %v1340 = vpack.c.b16 %v1316, %v1316
    %v1341 = vpack.c.b16 %v1317, %v1317
    %v1342 = vpack.c.b16 %v1318, %v1318
    %v1343 = vpack.c.b16 %v1319, %v1319
    %v1344 = vpack.c.b16 %v1320, %v1320
    %v1345 = vpack.c.b16 %v1321, %v1321
    %v1346 = vpack.c.b16 %v1322, %v1322
    %v1347 = vpack.c.b16 %v1323, %v1323
    %v1348 = vpack.c.b16 %v1324, %v1324
    %v1349 = vpack.c.b16 %v1325, %v1325
    %v1350 = vpack.c.b16 %v1326, %v1326
    %v1351 = vpack.c.b16 %v1327, %v1327
    %v1352 = vpack.c.b16 %v1328, %v1328
    %v2145 = vunpack.c.l.b16 %v503
    %v2146 = vunpack.c.h.b16 %v503
    %v2147 = vunpack.c.l.b16 %v504
    %v2148 = vunpack.c.h.b16 %v504
    %v2149 = vunpack.c.l.b16 %v505
    %v2150 = vunpack.c.h.b16 %v505
    %v2151 = vunpack.c.l.b16 %v506
    %v2152 = vunpack.c.h.b16 %v506
    %v2153 = vunpack.c.l.b16 %v507
    %v2154 = vunpack.c.h.b16 %v507
    %v2155 = vunpack.c.l.b16 %v508
    %v2156 = vunpack.c.h.b16 %v508
    %v2157 = vunpack.c.l.b16 %v509
    %v2158 = vunpack.c.h.b16 %v509
    %v2159 = vunpack.c.l.b16 %v510
    %v2160 = vunpack.c.h.b16 %v510
    %v2161 = vunpack.c.l.b16 %v511
    %v2162 = vunpack.c.h.b16 %v511
    %v2163 = vunpack.c.l.b16 %v512
    %v2164 = vunpack.c.h.b16 %v512
    %v2165 = vunpack.c.l.b16 %v513
    %v2166 = vunpack.c.h.b16 %v513
    %v2167 = vunpack.c.l.b16 %v514
    %v2168 = vunpack.c.h.b16 %v514
    %v2169 = vunpack.c.l.b16 %v515
    %v2170 = vunpack.c.h.b16 %v515
    %v2171 = vunpack.c.l.b16 %v516
    %v2172 = vunpack.c.h.b16 %v516
    %v2173 = vunpack.c.l.b16 %v517
    %v2174 = vunpack.c.h.b16 %v517
    %v2175 = vunpack.c.l.b16 %v518
    %v2176 = vunpack.c.h.b16 %v518
    %v2177 = vunpack.c.l.b16 %v519
    %v2178 = vunpack.c.h.b16 %v519
    %v2179 = vunpack.c.l.b16 %v520
    %v2180 = vunpack.c.h.b16 %v520
    %v2181 = vunpack.c.l.b16 %v521
    %v2182 = vunpack.c.h.b16 %v521
    %v2183 = vunpack.c.l.b16 %v522
    %v2184 = vunpack.c.h.b16 %v522
    %v2185 = vunpack.c.l.b16 %v523
    %v2186 = vunpack.c.h.b16 %v523
    %v2187 = vunpack.c.l.b16 %v524
    %v2188 = vunpack.c.h.b16 %v524
    %v2189 = vunpack.c.l.b16 %v525
    %v2190 = vunpack.c.h.b16 %v525
    %v2191 = vunpack.c.l.b16 %v526
    %v2192 = vunpack.c.h.b16 %v526
    %v2193 = vunpack.c.l.b16 %v527
    %v2194 = vunpack.c.h.b16 %v527
    %v2195 = vunpack.c.l.b16 %v528
    %v2196 = vunpack.c.h.b16 %v528
    %v2197 = vunpack.c.l.b16 %v529
    %v2198 = vunpack.c.h.b16 %v529
    %v2199 = vunpack.c.l.b16 %v530
    %v2200 = vunpack.c.h.b16 %v530
    %v2201 = vunpack.c.l.b16 %v531
    %v2202 = vunpack.c.h.b16 %v531
    %v2203 = vunpack.c.l.b16 %v532
    %v2204 = vunpack.c.h.b16 %v532
    %v2205 = vunpack.c.l.b16 %v533
    %v2206 = vunpack.c.h.b16 %v533
    %v2207 = vunpack.c.l.b16 %v534
    %v2208 = vunpack.c.h.b16 %v534
    %v2209 = vunpack.c.l.b16 %v535
    %v2210 = vunpack.c.h.b16 %v535
    %v2211 = vunpack.c.l.b16 %v536
    %v2212 = vunpack.c.h.b16 %v536
    %v2213 = vunpack.c.l.b16 %v537
    %v2214 = vunpack.c.h.b16 %v537
    %v2215 = vunpack.c.l.b16 %v538
    %v2216 = vunpack.c.h.b16 %v538
    %v2217 = vunpack.c.l.b16 %v539
    %v2218 = vunpack.c.h.b16 %v539
    %v2219 = vunpack.c.l.b16 %v540
    %v2220 = vunpack.c.h.b16 %v540
    %v2221 = vunpack.c.l.b16 %v541
    %v2222 = vunpack.c.h.b16 %v541
    %v2223 = vunpack.c.l.b16 %v542
    %v2224 = vunpack.c.h.b16 %v542
    %v2225 = vunpack.c.l.b16 %v543
    %v2226 = vunpack.c.h.b16 %v543
    %v2227 = vunpack.c.l.b16 %v544
    %v2228 = vunpack.c.h.b16 %v544
    %v2229 = vunpack.c.l.b16 %v545
    %v2230 = vunpack.c.h.b16 %v545
    %v2231 = vunpack.c.l.b16 %v546
    %v2232 = vunpack.c.h.b16 %v546
    %v2233 = vunpack.c.l.b16 %v547
    %v2234 = vunpack.c.h.b16 %v547
    %v2235 = vunpack.c.l.b16 %v548
    %v2236 = vunpack.c.h.b16 %v548
    %v2237 = vunpack.c.l.b16 %v549
    %v2238 = vunpack.c.h.b16 %v549
    %v2239 = vunpack.c.l.b16 %v550
    %v2240 = vunpack.c.h.b16 %v550
    %v2241 = vunpack.c.l.b16 %v551
    %v2242 = vunpack.c.h.b16 %v551
    %v2243 = vunpack.c.l.b16 %v552
    %v2244 = vunpack.c.h.b16 %v552
    %v2245 = vunpack.c.l.b16 %v553
    %v2246 = vunpack.c.h.b16 %v553
    %v2247 = vunpack.c.l.b16 %v554
    %v2248 = vunpack.c.h.b16 %v554
    %v2249 = vunpack.c.l.b16 %v555
    %v2250 = vunpack.c.h.b16 %v555
    %v2251 = vunpack.c.l.b16 %v556
    %v2252 = vunpack.c.h.b16 %v556
    %v2253 = vunpack.c.l.b16 %v557
    %v2254 = vunpack.c.h.b16 %v557
    %v2255 = vunpack.c.l.b16 %v558
    %v2256 = vunpack.c.h.b16 %v558
    %v2257 = vunpack.c.l.b16 %v559
    %v2258 = vunpack.c.h.b16 %v559
    %v2259 = vunpack.c.l.b16 %v560
    %v2260 = vunpack.c.h.b16 %v560
    %v2261 = vunpack.c.l.b16 %v561
    %v2262 = vunpack.c.h.b16 %v561
    %v2263 = vunpack.c.l.b16 %v562
    %v2264 = vunpack.c.h.b16 %v562
    %v2265 = vunpack.c.l.b16 %v563
    %v2266 = vunpack.c.h.b16 %v563
    %v2267 = vunpack.c.l.b16 %v564
    %v2268 = vunpack.c.h.b16 %v564
    %v2269 = vunpack.c.l.b16 %v565
    %v2270 = vunpack.c.h.b16 %v565
    %v2271 = vunpack.c.l.b16 %v566
    %v2272 = vunpack.c.h.b16 %v566
    %v2273 = vunpack.c.l.b16 %v567
    %v2274 = vunpack.c.h.b16 %v567
    %v2275 = vunpack.c.l.b16 %v568
    %v2276 = vunpack.c.h.b16 %v568
    %v2277 = vunpack.c.l.b16 %v569
    %v2278 = vunpack.c.h.b16 %v569
    %v2279 = vunpack.c.l.b16 %v570
    %v2280 = vunpack.c.h.b16 %v570
    %v2281 = vunpack.c.l.b16 %v571
    %v2282 = vunpack.c.h.b16 %v571
    %v2283 = vunpack.c.l.b16 %v572
    %v2284 = vunpack.c.h.b16 %v572
    %v2285 = vunpack.c.l.b16 %v573
    %v2286 = vunpack.c.h.b16 %v573
    %v2287 = vunpack.c.l.b16 %v574
    %v2288 = vunpack.c.h.b16 %v574
    %v2289 = vunpack.c.l.b16 %v575
    %v2290 = vunpack.c.h.b16 %v575
    %v2291 = vunpack.c.l.b16 %v576
    %v2292 = vunpack.c.h.b16 %v576
    %v2293 = vunpack.c.l.b16 %v577
    %v2294 = vunpack.c.h.b16 %v577
    %v2295 = vunpack.c.l.b16 %v578
    %v2296 = vunpack.c.h.b16 %v578
    %v2297 = vunpack.c.l.b16 %v579
    %v2298 = vunpack.c.h.b16 %v579
    %v2299 = vunpack.c.l.b16 %v580
    %v2300 = vunpack.c.h.b16 %v580
    %v2301 = vunpack.c.l.b16 %v581
    %v2302 = vunpack.c.h.b16 %v581
    %v2303 = vunpack.c.l.b16 %v582
    %v2304 = vunpack.c.h.b16 %v582
    %v2305 = vunpack.c.l.b16 %v583
    %v2306 = vunpack.c.h.b16 %v583
    %v2307 = vunpack.c.l.b16 %v584
    %v2308 = vunpack.c.h.b16 %v584
    %v2309 = vunpack.c.l.b16 %v585
    %v2310 = vunpack.c.h.b16 %v585
    %v2311 = vunpack.c.l.b16 %v586
    %v2312 = vunpack.c.h.b16 %v586
    %v2313 = vunpack.c.l.b16 %v587
    %v2314 = vunpack.c.h.b16 %v587
    %v2315 = vunpack.c.l.b16 %v588
    %v2316 = vunpack.c.h.b16 %v588
    %v2317 = vunpack.c.l.b16 %v589
    %v2318 = vunpack.c.h.b16 %v589
    %v2319 = vunpack.c.l.b16 %v590
    %v2320 = vunpack.c.h.b16 %v590
    %v2321 = vunpack.c.l.b16 %v591
    %v2322 = vunpack.c.h.b16 %v591
    %v2323 = vunpack.c.l.b16 %v592
    %v2324 = vunpack.c.h.b16 %v592
    %v2325 = vunpack.c.l.b16 %v593
    %v2326 = vunpack.c.h.b16 %v593
    %v2327 = vunpack.c.l.b16 %v594
    %v2328 = vunpack.c.h.b16 %v594
    %v2329 = vunpack.c.l.b16 %v595
    %v2330 = vunpack.c.h.b16 %v595
    %v2331 = vunpack.c.l.b16 %v596
    %v2332 = vunpack.c.h.b16 %v596
    %v2333 = vunpack.c.l.b16 %v597
    %v2334 = vunpack.c.h.b16 %v597
    %v2335 = vunpack.c.l.b16 %v598
    %v2336 = vunpack.c.h.b16 %v598
    %v2337 = vunpack.c.l.b16 %v599
    %v2338 = vunpack.c.h.b16 %v599
    %v2339 = vunpack.c.l.b16 %v600
    %v2340 = vunpack.c.h.b16 %v600
    %v2341 = vunpack.c.l.b16 %v601
    %v2342 = vunpack.c.h.b16 %v601
    %v2343 = vunpack.c.l.b16 %v602
    %v2344 = vunpack.c.h.b16 %v602
    %v2345 = vunpack.c.l.b16 %v603
    %v2346 = vunpack.c.h.b16 %v603
    %v2347 = vunpack.c.l.b16 %v604
    %v2348 = vunpack.c.h.b16 %v604
    %v2349 = vunpack.c.l.b16 %v605
    %v2350 = vunpack.c.h.b16 %v605
    %v2351 = vunpack.c.l.b16 %v606
    %v2352 = vunpack.c.h.b16 %v606
    %v2353 = vunpack.c.l.b16 %v607
    %v2354 = vunpack.c.h.b16 %v607
    %v2355 = vunpack.c.l.b16 %v608
    %v2356 = vunpack.c.h.b16 %v608
    %v2357 = vunpack.c.l.b16 %v609
    %v2358 = vunpack.c.h.b16 %v609
    %v2359 = vunpack.c.l.b16 %v610
    %v2360 = vunpack.c.h.b16 %v610
    %v2361 = vunpack.c.l.b16 %v611
    %v2362 = vunpack.c.h.b16 %v611
    %v2363 = vunpack.c.l.b16 %v612
    %v2364 = vunpack.c.h.b16 %v612
    %v2365 = vunpack.c.l.b16 %v613
    %v2366 = vunpack.c.h.b16 %v613
    %v2367 = vunpack.c.l.b16 %v614
    %v2368 = vunpack.c.h.b16 %v614
    %v2369 = vunpack.c.l.b16 %v615
    %v2370 = vunpack.c.h.b16 %v615
    %v2371 = vunpack.c.l.b16 %v616
    %v2372 = vunpack.c.h.b16 %v616
    %v2373 = vunpack.c.l.b16 %v617
    %v2374 = vunpack.c.h.b16 %v617
    %v2375 = vunpack.c.l.b16 %v618
    %v2376 = vunpack.c.h.b16 %v618
    %v2377 = vunpack.c.l.b16 %v619
    %v2378 = vunpack.c.h.b16 %v619
    %v2379 = vunpack.c.l.b16 %v620
    %v2380 = vunpack.c.h.b16 %v620
    %v2381 = vunpack.c.l.b16 %v621
    %v2382 = vunpack.c.h.b16 %v621
    %v2383 = vunpack.c.l.b16 %v622
    %v2384 = vunpack.c.h.b16 %v622
    %v2385 = vunpack.c.l.b16 %v623
    %v2386 = vunpack.c.h.b16 %v623
    %v2387 = vunpack.c.l.b16 %v624
    %v2388 = vunpack.c.h.b16 %v624
    %v2389 = vunpack.c.l.b16 %v625
    %v2390 = vunpack.c.h.b16 %v625
    %v2391 = vunpack.c.l.b16 %v626
    %v2392 = vunpack.c.h.b16 %v626
    %v2393 = vunpack.c.l.b16 %v627
    %v2394 = vunpack.c.h.b16 %v627
    %v2395 = vunpack.c.l.b16 %v628
    %v2396 = vunpack.c.h.b16 %v628
    %v2397 = vunpack.c.l.b16 %v629
    %v2398 = vunpack.c.h.b16 %v629
    %v2399 = vunpack.c.l.b16 %v630
    %v2400 = vunpack.c.h.b16 %v630
    %v2401 = vunpack.c.l.b16 %v631
    %v2402 = vunpack.c.h.b16 %v631
    %v2403 = vunpack.c.l.b16 %v632
    %v2404 = vunpack.c.h.b16 %v632
    %v2405 = vunpack.c.l.b16 %v633
    %v2406 = vunpack.c.h.b16 %v633
    %v2407 = vunpack.c.l.b16 %v634
    %v2408 = vunpack.c.h.b16 %v634
    %v2409 = vunpack.c.l.b16 %v635
    %v2410 = vunpack.c.h.b16 %v635
    %v2411 = vunpack.c.l.b16 %v636
    %v2412 = vunpack.c.h.b16 %v636
    %v2413 = vunpack.c.l.b16 %v637
    %v2414 = vunpack.c.h.b16 %v637
    %v2415 = vunpack.c.l.b16 %v638
    %v2416 = vunpack.c.h.b16 %v638
    %v2417 = vunpack.c.l.b16 %v639
    %v2418 = vunpack.c.h.b16 %v639
    %v2419 = vunpack.c.l.b16 %v640
    %v2420 = vunpack.c.h.b16 %v640
    %v2421 = vunpack.c.l.b16 %v641
    %v2422 = vunpack.c.h.b16 %v641
    %v2423 = vunpack.c.l.b16 %v642
    %v2424 = vunpack.c.h.b16 %v642
    %v2425 = vunpack.c.l.b16 %v643
    %v2426 = vunpack.c.h.b16 %v643
    %v2427 = vunpack.c.l.b16 %v644
    %v2428 = vunpack.c.h.b16 %v644
    %v2429 = vunpack.c.l.b16 %v645
    %v2430 = vunpack.c.h.b16 %v645
    %v2431 = vunpack.c.l.b16 %v646
    %v2432 = vunpack.c.h.b16 %v646
    %v2433 = vunpack.c.l.b16 %v647
    %v2434 = vunpack.c.h.b16 %v647
    %v2435 = vunpack.c.l.b16 %v648
    %v2436 = vunpack.c.h.b16 %v648
    %v2437 = vunpack.c.l.b16 %v649
    %v2438 = vunpack.c.h.b16 %v649
    %v2439 = vunpack.c.l.b16 %v650
    %v2440 = vunpack.c.h.b16 %v650
    %v2441 = vunpack.c.l.b16 %v651
    %v2442 = vunpack.c.h.b16 %v651
    %v2443 = vunpack.c.l.b16 %v652
    %v2444 = vunpack.c.h.b16 %v652
    %v2445 = vunpack.c.l.b16 %v653
    %v2446 = vunpack.c.h.b16 %v653
    %v2447 = vunpack.c.l.b16 %v654
    %v2448 = vunpack.c.h.b16 %v654
    %v2449 = vunpack.c.l.b16 %v655
    %v2450 = vunpack.c.h.b16 %v655
    %v2451 = vunpack.c.l.b16 %v656
    %v2452 = vunpack.c.h.b16 %v656
    %v2453 = vunpack.c.l.b16 %v657
    %v2454 = vunpack.c.h.b16 %v657
    %v2455 = vunpack.c.l.b16 %v658
    %v2456 = vunpack.c.h.b16 %v658
    %v2457 = vunpack.c.l.b16 %v659
    %v2458 = vunpack.c.h.b16 %v659
    %v2459 = vunpack.c.l.b16 %v660
    %v2460 = vunpack.c.h.b16 %v660
    %v2461 = vunpack.c.l.b16 %v661
    %v2462 = vunpack.c.h.b16 %v661
    %v2463 = vunpack.c.l.b16 %v662
    %v2464 = vunpack.c.h.b16 %v662
    %v2465 = vunpack.c.l.b16 %v663
    %v2466 = vunpack.c.h.b16 %v663
    %v2467 = vunpack.c.l.b16 %v664
    %v2468 = vunpack.c.h.b16 %v664
    %v2469 = vunpack.c.l.b16 %v665
    %v2470 = vunpack.c.h.b16 %v665
    %v2471 = vunpack.c.l.b16 %v666
    %v2472 = vunpack.c.h.b16 %v666
    %v2473 = vunpack.c.l.b16 %v667
    %v2474 = vunpack.c.h.b16 %v667
    %v2475 = vunpack.c.l.b16 %v668
    %v2476 = vunpack.c.h.b16 %v668
    %v2477 = vunpack.c.l.b16 %v669
    %v2478 = vunpack.c.h.b16 %v669
    %v2479 = vunpack.c.l.b16 %v670
    %v2480 = vunpack.c.h.b16 %v670
    %v2481 = vunpack.c.l.b16 %v671
    %v2482 = vunpack.c.h.b16 %v671
    %v2483 = vunpack.c.l.b16 %v672
    %v2484 = vunpack.c.h.b16 %v672
    %v2485 = vunpack.c.l.b16 %v673
    %v2486 = vunpack.c.h.b16 %v673
    %v2487 = vunpack.c.l.b16 %v674
    %v2488 = vunpack.c.h.b16 %v674
    %v2489 = vunpack.c.l.b16 %v675
    %v2490 = vunpack.c.h.b16 %v675
    %v2491 = vunpack.c.l.b16 %v676
    %v2492 = vunpack.c.h.b16 %v676
    %v2493 = vunpack.c.l.b16 %v677
    %v2494 = vunpack.c.h.b16 %v677
    %v2495 = vunpack.c.l.b16 %v678
    %v2496 = vunpack.c.h.b16 %v678
    %v2497 = vunpack.c.l.b16 %v679
    %v2498 = vunpack.c.h.b16 %v679
    %v2499 = vunpack.c.l.b16 %v680
    %v2500 = vunpack.c.h.b16 %v680
    %v2501 = vunpack.c.l.b16 %v681
    %v2502 = vunpack.c.h.b16 %v681
    %v2503 = vunpack.c.l.b16 %v682
    %v2504 = vunpack.c.h.b16 %v682
    %v2505 = vunpack.c.l.b16 %v683
    %v2506 = vunpack.c.h.b16 %v683
    %v2507 = vunpack.c.l.b16 %v684
    %v2508 = vunpack.c.h.b16 %v684
    %v2509 = vunpack.c.l.b16 %v685
    %v2510 = vunpack.c.h.b16 %v685
    %v2511 = vunpack.c.l.b16 %v686
    %v2512 = vunpack.c.h.b16 %v686
    %v2513 = vunpack.c.l.b16 %v687
    %v2514 = vunpack.c.h.b16 %v687
    %v2515 = vunpack.c.l.b16 %v688
    %v2516 = vunpack.c.h.b16 %v688
    %v2517 = vunpack.c.l.b16 %v689
    %v2518 = vunpack.c.h.b16 %v689
    %v2519 = vunpack.c.l.b16 %v690
    %v2520 = vunpack.c.h.b16 %v690
    %v2521 = vunpack.c.l.b16 %v691
    %v2522 = vunpack.c.h.b16 %v691
    %v2523 = vunpack.c.l.b16 %v692
    %v2524 = vunpack.c.h.b16 %v692
    %v2525 = vunpack.c.l.b16 %v693
    %v2526 = vunpack.c.h.b16 %v693
    %v2527 = vunpack.c.l.b16 %v694
    %v2528 = vunpack.c.h.b16 %v694
    %v2529 = vunpack.c.l.b16 %v695
    %v2530 = vunpack.c.h.b16 %v695
    %v2531 = vunpack.c.l.b16 %v696
    %v2532 = vunpack.c.h.b16 %v696
    %v2533 = vunpack.c.l.b16 %v697
    %v2534 = vunpack.c.h.b16 %v697
    %v2535 = vunpack.c.l.b16 %v698
    %v2536 = vunpack.c.h.b16 %v698
    %v2537 = vunpack.c.l.b16 %v699
    %v2538 = vunpack.c.h.b16 %v699
    %v2539 = vunpack.c.l.b16 %v700
    %v2540 = vunpack.c.h.b16 %v700
    %v2541 = vunpack.c.l.b16 %v701
    %v2542 = vunpack.c.h.b16 %v701
    %v2543 = vunpack.c.l.b16 %v702
    %v2544 = vunpack.c.h.b16 %v702
    %v2545 = vunpack.c.l.b16 %v703
    %v2546 = vunpack.c.h.b16 %v703
    %v2547 = vunpack.c.l.b16 %v704
    %v2548 = vunpack.c.h.b16 %v704
    %v2549 = vunpack.c.l.b16 %v705
    %v2550 = vunpack.c.h.b16 %v705
    %v2551 = vunpack.c.l.b16 %v706
    %v2552 = vunpack.c.h.b16 %v706
    %v2553 = vunpack.c.l.b16 %v707
    %v2554 = vunpack.c.h.b16 %v707
    %v2555 = vunpack.c.l.b16 %v708
    %v2556 = vunpack.c.h.b16 %v708
    %v2557 = vunpack.c.l.b16 %v709
    %v2558 = vunpack.c.h.b16 %v709
    %v2559 = vunpack.c.l.b16 %v710
    %v2560 = vunpack.c.h.b16 %v710
    %v2561 = vunpack.c.l.b16 %v711
    %v2562 = vunpack.c.h.b16 %v711
    %v2563 = vunpack.c.l.b16 %v712
    %v2564 = vunpack.c.h.b16 %v712
    %v2565 = vunpack.c.l.b16 %v713
    %v2566 = vunpack.c.h.b16 %v713
    %v2567 = vunpack.c.l.b16 %v714
    %v2568 = vunpack.c.h.b16 %v714
    %v2569 = vunpack.c.l.b16 %v715
    %v2570 = vunpack.c.h.b16 %v715
    %v2571 = vunpack.c.l.b16 %v716
    %v2572 = vunpack.c.h.b16 %v716
    %v2573 = vunpack.c.l.b16 %v717
    %v2574 = vunpack.c.h.b16 %v717
    %v2575 = vunpack.c.l.b16 %v718
    %v2576 = vunpack.c.h.b16 %v718
    %v2577 = vunpack.c.l.b16 %v719
    %v2578 = vunpack.c.h.b16 %v719
    %v2579 = vunpack.c.l.b16 %v720
    %v2580 = vunpack.c.h.b16 %v720
    %v2581 = vunpack.c.l.b16 %v721
    %v2582 = vunpack.c.h.b16 %v721
    %v2583 = vunpack.c.l.b16 %v722
    %v2584 = vunpack.c.h.b16 %v722
    %v2585 = vunpack.c.l.b16 %v723
    %v2586 = vunpack.c.h.b16 %v723
    %v2587 = vunpack.c.l.b16 %v724
    %v2588 = vunpack.c.h.b16 %v724
    %v2589 = vunpack.c.l.b16 %v725
    %v2590 = vunpack.c.h.b16 %v725
    %v2591 = vunpack.c.l.b16 %v726
    %v2592 = vunpack.c.h.b16 %v726
    %v2593 = vunpack.c.l.b16 %v727
    %v2594 = vunpack.c.h.b16 %v727
    %v2595 = vunpack.c.l.b16 %v728
    %v2596 = vunpack.c.h.b16 %v728
    %v2597 = vunpack.c.l.b16 %v729
    %v2598 = vunpack.c.h.b16 %v729
    %v2599 = vunpack.c.l.b16 %v730
    %v2600 = vunpack.c.h.b16 %v730
    %v2601 = vunpack.c.l.b16 %v731
    %v2602 = vunpack.c.h.b16 %v731
    %v2603 = vunpack.c.l.b16 %v732
    %v2604 = vunpack.c.h.b16 %v732
    %v2605 = vunpack.c.l.b16 %v733
    %v2606 = vunpack.c.h.b16 %v733
    %v2607 = vunpack.c.l.b16 %v734
    %v2608 = vunpack.c.h.b16 %v734
    %v2609 = vunpack.c.l.b16 %v735
    %v2610 = vunpack.c.h.b16 %v735
    %v2611 = vunpack.c.l.b16 %v736
    %v2612 = vunpack.c.h.b16 %v736
    %v2613 = vunpack.c.l.b16 %v737
    %v2614 = vunpack.c.h.b16 %v737
    %v2615 = vunpack.c.l.b16 %v738
    %v2616 = vunpack.c.h.b16 %v738
    %v2617 = vunpack.c.l.b16 %v739
    %v2618 = vunpack.c.h.b16 %v739
    %v2619 = vunpack.c.l.b16 %v740
    %v2620 = vunpack.c.h.b16 %v740
    %v2621 = vunpack.c.l.b16 %v741
    %v2622 = vunpack.c.h.b16 %v741
    %v2623 = vunpack.c.l.b16 %v742
    %v2624 = vunpack.c.h.b16 %v742
    %v2625 = vunpack.c.l.b16 %v743
    %v2626 = vunpack.c.h.b16 %v743
    %v2627 = vunpack.c.l.b16 %v744
    %v2628 = vunpack.c.h.b16 %v744
    %v2629 = vunpack.c.l.b16 %v745
    %v2630 = vunpack.c.h.b16 %v745
    %v2631 = vunpack.c.l.b16 %v746
    %v2632 = vunpack.c.h.b16 %v746
    %v2633 = vunpack.c.l.b16 %v747
    %v2634 = vunpack.c.h.b16 %v747
    %v2635 = vunpack.c.l.b16 %v748
    %v2636 = vunpack.c.h.b16 %v748
    %v2637 = vunpack.c.l.b16 %v749
    %v2638 = vunpack.c.h.b16 %v749
    %v2639 = vunpack.c.l.b16 %v750
    %v2640 = vunpack.c.h.b16 %v750
    %v2641 = vunpack.c.l.b16 %v751
    %v2642 = vunpack.c.h.b16 %v751
    %v2643 = vunpack.c.l.b16 %v752
    %v2644 = vunpack.c.h.b16 %v752
    %v2645 = vunpack.c.l.b16 %v753
    %v2646 = vunpack.c.h.b16 %v753
    %v2647 = vunpack.c.l.b16 %v754
    %v2648 = vunpack.c.h.b16 %v754
    %v2649 = vunpack.c.l.b16 %v755
    %v2650 = vunpack.c.h.b16 %v755
    %v2651 = vunpack.c.l.b16 %v756
    %v2652 = vunpack.c.h.b16 %v756
    %v2653 = vunpack.c.l.b16 %v757
    %v2654 = vunpack.c.h.b16 %v757
    %v2655 = vunpack.c.l.b16 %v758
    %v2656 = vunpack.c.h.b16 %v758
    %v2657 = vunpack.c.l.b16 %v759
    %v2658 = vunpack.c.h.b16 %v759
    %v2659 = vunpack.c.l.b16 %v760
    %v2660 = vunpack.c.h.b16 %v760
    %v2661 = vunpack.c.l.b16 %v761
    %v2662 = vunpack.c.h.b16 %v761
    %v2663 = vunpack.c.l.b16 %v762
    %v2664 = vunpack.c.h.b16 %v762
    %v2665 = vunpack.c.l.b16 %v763
    %v2666 = vunpack.c.h.b16 %v763
    %v2667 = vunpack.c.l.b16 %v764
    %v2668 = vunpack.c.h.b16 %v764
    %v2669 = vunpack.c.l.b16 %v765
    %v2670 = vunpack.c.h.b16 %v765
    %v2671 = vunpack.c.l.b16 %v766
    %v2672 = vunpack.c.h.b16 %v766
    %v2673 = vunpack.c.l.b16 %v767
    %v2674 = vunpack.c.h.b16 %v767
    %v2675 = vunpack.c.l.b16 %v768
    %v2676 = vunpack.c.h.b16 %v768
    %v2677 = vunpack.c.l.b16 %v769
    %v2678 = vunpack.c.h.b16 %v769
    %v2679 = vunpack.c.l.b16 %v770
    %v2680 = vunpack.c.h.b16 %v770
    %v2681 = vunpack.c.l.b16 %v771
    %v2682 = vunpack.c.h.b16 %v771
    %v2683 = vunpack.c.l.b16 %v772
    %v2684 = vunpack.c.h.b16 %v772
    %v2685 = vunpack.c.l.b16 %v773
    %v2686 = vunpack.c.h.b16 %v773
    %v2687 = vunpack.c.l.b16 %v774
    %v2688 = vunpack.c.h.b16 %v774
    %v2689 = vunpack.c.l.b16 %v775
    %v2690 = vunpack.c.h.b16 %v775
    %v2691 = vunpack.c.l.b16 %v776
    %v2692 = vunpack.c.h.b16 %v776
    %v2693 = vunpack.c.l.b16 %v777
    %v2694 = vunpack.c.h.b16 %v777
    %v2695 = vunpack.c.l.b16 %v778
    %v2696 = vunpack.c.h.b16 %v778
    %v2697 = vunpack.c.l.b16 %v779
    %v2698 = vunpack.c.h.b16 %v779
    %v2699 = vunpack.c.l.b16 %v780
    %v2700 = vunpack.c.h.b16 %v780
    %v2701 = vunpack.c.l.b16 %v781
    %v2702 = vunpack.c.h.b16 %v781
    %v2703 = vunpack.c.l.b16 %v782
    %v2704 = vunpack.c.h.b16 %v782
    %v2705 = vunpack.c.l.b16 %v783
    %v2706 = vunpack.c.h.b16 %v783
    %v2707 = vunpack.c.l.b16 %v784
    %v2708 = vunpack.c.h.b16 %v784
    %v2709 = vunpack.c.l.b16 %v785
    %v2710 = vunpack.c.h.b16 %v785
    %v2711 = vunpack.c.l.b16 %v786
    %v2712 = vunpack.c.h.b16 %v786
    %v2713 = vunpack.c.l.b16 %v787
    %v2714 = vunpack.c.h.b16 %v787
    %v2715 = vunpack.c.l.b16 %v788
    %v2716 = vunpack.c.h.b16 %v788
    %v2717 = vunpack.c.l.b16 %v789
    %v2718 = vunpack.c.h.b16 %v789
    %v2719 = vunpack.c.l.b16 %v790
    %v2720 = vunpack.c.h.b16 %v790
    %v2721 = vunpack.c.l.b16 %v791
    %v2722 = vunpack.c.h.b16 %v791
    %v2723 = vunpack.c.l.b16 %v792
    %v2724 = vunpack.c.h.b16 %v792
    %v2725 = vunpack.c.l.b16 %v793
    %v2726 = vunpack.c.h.b16 %v793
    %v2727 = vunpack.c.l.b16 %v794
    %v2728 = vunpack.c.h.b16 %v794
    %v2729 = vunpack.c.l.b16 %v795
    %v2730 = vunpack.c.h.b16 %v795
    %v2731 = vunpack.c.l.b16 %v796
    %v2732 = vunpack.c.h.b16 %v796
    %v2733 = vunpack.c.l.b16 %v797
    %v2734 = vunpack.c.h.b16 %v797
    %v2735 = vunpack.c.l.b16 %v798
    %v2736 = vunpack.c.h.b16 %v798
    %v2737 = vunpack.c.l.b16 %v799
    %v2738 = vunpack.c.h.b16 %v799
    %v2739 = vunpack.c.l.b16 %v800
    %v2740 = vunpack.c.h.b16 %v800
    %v2741 = vunpack.c.l.b16 %v801
    %v2742 = vunpack.c.h.b16 %v801
    %v2743 = vunpack.c.l.b16 %v802
    %v2744 = vunpack.c.h.b16 %v802
    %v2745 = vunpack.c.l.b16 %v803
    %v2746 = vunpack.c.h.b16 %v803
    %v2747 = vunpack.c.l.b16 %v804
    %v2748 = vunpack.c.h.b16 %v804
    %v2749 = vunpack.c.l.b16 %v805
    %v2750 = vunpack.c.h.b16 %v805
    %v2751 = vunpack.c.l.b16 %v806
    %v2752 = vunpack.c.h.b16 %v806
    %v2753 = vunpack.c.l.b16 %v807
    %v2754 = vunpack.c.h.b16 %v807
    %v2755 = vunpack.c.l.b16 %v808
    %v2756 = vunpack.c.h.b16 %v808
    %v2757 = vunpack.c.l.b16 %v809
    %v2758 = vunpack.c.h.b16 %v809
    %v2759 = vunpack.c.l.b16 %v810
    %v2760 = vunpack.c.h.b16 %v810
    %v2761 = vunpack.c.l.b16 %v811
    %v2762 = vunpack.c.h.b16 %v811
    %v2763 = vunpack.c.l.b16 %v812
    %v2764 = vunpack.c.h.b16 %v812
    %v2765 = vunpack.c.l.b16 %v813
    %v2766 = vunpack.c.h.b16 %v813
    %v2767 = vunpack.c.l.b16 %v814
    %v2768 = vunpack.c.h.b16 %v814
    %v2769 = vunpack.c.l.b16 %v815
    %v2770 = vunpack.c.h.b16 %v815
    %v2771 = vunpack.c.l.b16 %v816
    %v2772 = vunpack.c.h.b16 %v816
    %v2773 = vunpack.c.l.b16 %v817
    %v2774 = vunpack.c.h.b16 %v817
    %v2775 = vunpack.c.l.b16 %v818
    %v2776 = vunpack.c.h.b16 %v818
    %v2777 = vunpack.c.l.b16 %v819
    %v2778 = vunpack.c.h.b16 %v819
    %v2779 = vunpack.c.l.b16 %v820
    %v2780 = vunpack.c.h.b16 %v820
    %v2781 = vunpack.c.l.b16 %v821
    %v2782 = vunpack.c.h.b16 %v821
    %v2783 = vunpack.c.l.b16 %v822
    %v2784 = vunpack.c.h.b16 %v822
    %v2785 = vunpack.c.l.b16 %v823
    %v2786 = vunpack.c.h.b16 %v823
    %v2787 = vunpack.c.l.b16 %v824
    %v2788 = vunpack.c.h.b16 %v824
    %v2789 = vunpack.c.l.b16 %v825
    %v2790 = vunpack.c.h.b16 %v825
    %v2791 = vunpack.c.l.b16 %v826
    %v2792 = vunpack.c.h.b16 %v826
    %v2793 = vunpack.c.l.b16 %v827
    %v2794 = vunpack.c.h.b16 %v827
    %v2795 = vunpack.c.l.b16 %v828
    %v2796 = vunpack.c.h.b16 %v828
    %v2797 = vunpack.c.l.b16 %v829
    %v2798 = vunpack.c.h.b16 %v829
    %v2799 = vunpack.c.l.b16 %v830
    %v2800 = vunpack.c.h.b16 %v830
    %v2801 = vunpack.c.l.b16 %v831
    %v2802 = vunpack.c.h.b16 %v831
    %v2803 = vunpack.c.l.b16 %v832
    %v2804 = vunpack.c.h.b16 %v832
    %v2805 = vunpack.c.l.b16 %v833
    %v2806 = vunpack.c.h.b16 %v833
    %v2807 = vunpack.c.l.b16 %v834
    %v2808 = vunpack.c.h.b16 %v834
    %v2809 = vunpack.c.l.b16 %v835
    %v2810 = vunpack.c.h.b16 %v835
    %v2811 = vunpack.c.l.b16 %v836
    %v2812 = vunpack.c.h.b16 %v836
    %v2813 = vunpack.c.l.b16 %v837
    %v2814 = vunpack.c.h.b16 %v837
    %v2815 = vunpack.c.l.b16 %v838
    %v2816 = vunpack.c.h.b16 %v838
    %v2817 = vunpack.c.l.b16 %v839
    %v2818 = vunpack.c.h.b16 %v839
    %v2819 = vunpack.c.l.b16 %v840
    %v2820 = vunpack.c.h.b16 %v840
    %v2821 = vunpack.c.l.b16 %v841
    %v2822 = vunpack.c.h.b16 %v841
    %v2823 = vunpack.c.l.b16 %v842
    %v2824 = vunpack.c.h.b16 %v842
    %v2825 = vunpack.c.l.b16 %v843
    %v2826 = vunpack.c.h.b16 %v843
    %v2827 = vunpack.c.l.b16 %v844
    %v2828 = vunpack.c.h.b16 %v844
    %v2829 = vunpack.c.l.b16 %v845
    %v2830 = vunpack.c.h.b16 %v845
    %v2831 = vunpack.c.l.b16 %v846
    %v2832 = vunpack.c.h.b16 %v846
    %v2833 = vunpack.c.l.b16 %v847
    %v2834 = vunpack.c.h.b16 %v847
    %v2835 = vunpack.c.l.b16 %v848
    %v2836 = vunpack.c.h.b16 %v848
    %v2837 = vunpack.c.l.b16 %v849
    %v2838 = vunpack.c.h.b16 %v849
    %v2839 = vunpack.c.l.b16 %v850
    %v2840 = vunpack.c.h.b16 %v850
    %v2841 = vunpack.c.l.b16 %v851
    %v2842 = vunpack.c.h.b16 %v851
    %v2843 = vunpack.c.l.b16 %v852
    %v2844 = vunpack.c.h.b16 %v852
    %v2845 = vunpack.c.l.b16 %v853
    %v2846 = vunpack.c.h.b16 %v853
    %v2847 = vunpack.c.l.b16 %v854
    %v2848 = vunpack.c.h.b16 %v854
    %v2849 = vunpack.c.l.b16 %v855
    %v2850 = vunpack.c.h.b16 %v855
    %v2851 = vunpack.c.l.b16 %v856
    %v2852 = vunpack.c.h.b16 %v856
    %v2853 = vunpack.c.l.b16 %v857
    %v2854 = vunpack.c.h.b16 %v857
    %v2855 = vunpack.c.l.b16 %v858
    %v2856 = vunpack.c.h.b16 %v858
    %v2857 = vunpack.c.l.b16 %v859
    %v2858 = vunpack.c.h.b16 %v859
    %v2859 = vunpack.c.l.b16 %v860
    %v2860 = vunpack.c.h.b16 %v860
    %v2861 = vunpack.c.l.b16 %v861
    %v2862 = vunpack.c.h.b16 %v861
    %v2863 = vunpack.c.l.b16 %v862
    %v2864 = vunpack.c.h.b16 %v862
    %v2865 = vunpack.c.l.b16 %v863
    %v2866 = vunpack.c.h.b16 %v863
    %v2867 = vunpack.c.l.b16 %v864
    %v2868 = vunpack.c.h.b16 %v864
    %v2869 = vunpack.c.l.b16 %v865
    %v2870 = vunpack.c.h.b16 %v865
    %v2871 = vunpack.c.l.b16 %v866
    %v2872 = vunpack.c.h.b16 %v866
    %v2873 = vunpack.c.l.b16 %v867
    %v2874 = vunpack.c.h.b16 %v867
    %v2875 = vunpack.c.l.b16 %v868
    %v2876 = vunpack.c.h.b16 %v868
    %v2877 = vunpack.c.l.b16 %v869
    %v2878 = vunpack.c.h.b16 %v869
    %v2879 = vunpack.c.l.b16 %v870
    %v2880 = vunpack.c.h.b16 %v870
    %v2881 = vunpack.c.l.b16 %v871
    %v2882 = vunpack.c.h.b16 %v871
    %v2883 = vunpack.c.l.b16 %v872
    %v2884 = vunpack.c.h.b16 %v872
    %v2885 = vunpack.c.l.b16 %v873
    %v2886 = vunpack.c.h.b16 %v873
    %v2887 = vunpack.c.l.b16 %v874
    %v2888 = vunpack.c.h.b16 %v874
    %v2889 = vunpack.c.l.b16 %v875
    %v2890 = vunpack.c.h.b16 %v875
    %v2891 = vunpack.c.l.b16 %v876
    %v2892 = vunpack.c.h.b16 %v876
    %v2893 = vunpack.c.l.b16 %v877
    %v2894 = vunpack.c.h.b16 %v877
    %v2895 = vunpack.c.l.b16 %v878
    %v2896 = vunpack.c.h.b16 %v878
    %v2897 = vunpack.c.l.b16 %v879
    %v2898 = vunpack.c.h.b16 %v879
    %v2899 = vunpack.c.l.b16 %v880
    %v2900 = vunpack.c.h.b16 %v880
    %v2901 = vunpack.c.l.b16 %v881
    %v2902 = vunpack.c.h.b16 %v881
    %v2903 = vunpack.c.l.b16 %v882
    %v2904 = vunpack.c.h.b16 %v882
    %v2905 = vunpack.c.l.b16 %v883
    %v2906 = vunpack.c.h.b16 %v883
    %v2907 = vunpack.c.l.b16 %v884
    %v2908 = vunpack.c.h.b16 %v884
    %v2909 = vunpack.c.l.b16 %v885
    %v2910 = vunpack.c.h.b16 %v885
    %v2911 = vunpack.c.l.b16 %v886
    %v2912 = vunpack.c.h.b16 %v886
    %v2913 = vunpack.c.l.b16 %v887
    %v2914 = vunpack.c.h.b16 %v887
    %v2915 = vunpack.c.l.b16 %v888
    %v2916 = vunpack.c.h.b16 %v888
    %v2917 = vunpack.c.l.b16 %v889
    %v2918 = vunpack.c.h.b16 %v889
    %v2919 = vunpack.c.l.b16 %v890
    %v2920 = vunpack.c.h.b16 %v890
    %v2921 = vunpack.c.l.b16 %v891
    %v2922 = vunpack.c.h.b16 %v891
    %v2923 = vunpack.c.l.b16 %v892
    %v2924 = vunpack.c.h.b16 %v892
    %v2925 = vunpack.c.l.b16 %v893
    %v2926 = vunpack.c.h.b16 %v893
    %v2927 = vunpack.c.l.b16 %v894
    %v2928 = vunpack.c.h.b16 %v894
    %v2929 = vunpack.c.l.b16 %v895
    %v2930 = vunpack.c.h.b16 %v895
    %v2931 = vunpack.c.l.b16 %v896
    %v2932 = vunpack.c.h.b16 %v896
    %v2933 = vunpack.c.l.b16 %v897
    %v2934 = vunpack.c.h.b16 %v897
    %v2935 = vunpack.c.l.b16 %v898
    %v2936 = vunpack.c.h.b16 %v898
    %v2937 = vunpack.c.l.b16 %v899
    %v2938 = vunpack.c.h.b16 %v899
    %v2939 = vunpack.c.l.b16 %v900
    %v2940 = vunpack.c.h.b16 %v900
    %v2941 = vunpack.c.l.b16 %v901
    %v2942 = vunpack.c.h.b16 %v901
    %v2943 = vunpack.c.l.b16 %v902
    %v2944 = vunpack.c.h.b16 %v902
    %v2945 = vunpack.c.l.b16 %v903
    %v2946 = vunpack.c.h.b16 %v903
    %v2947 = vunpack.c.l.b16 %v904
    %v2948 = vunpack.c.h.b16 %v904
    %v2949 = vunpack.c.l.b16 %v905
    %v2950 = vunpack.c.h.b16 %v905
    %v2951 = vunpack.c.l.b16 %v906
    %v2952 = vunpack.c.h.b16 %v906
    %v2953 = vunpack.c.l.b16 %v907
    %v2954 = vunpack.c.h.b16 %v907
    %v2955 = vunpack.c.l.b16 %v908
    %v2956 = vunpack.c.h.b16 %v908
    %v2957 = vunpack.c.l.b16 %v909
    %v2958 = vunpack.c.h.b16 %v909
    %v2959 = vunpack.c.l.b16 %v910
    %v2960 = vunpack.c.h.b16 %v910
    %v2961 = vunpack.c.l.b16 %v911
    %v2962 = vunpack.c.h.b16 %v911
    %v2963 = vunpack.c.l.b16 %v912
    %v2964 = vunpack.c.h.b16 %v912
    %v2965 = vunpack.c.l.b16 %v913
    %v2966 = vunpack.c.h.b16 %v913
    %v2967 = vunpack.c.l.b16 %v914
    %v2968 = vunpack.c.h.b16 %v914
    %v2969 = vunpack.c.l.b16 %v915
    %v2970 = vunpack.c.h.b16 %v915
    %v2971 = vunpack.c.l.b16 %v916
    %v2972 = vunpack.c.h.b16 %v916
    %v2973 = vunpack.c.l.b16 %v917
    %v2974 = vunpack.c.h.b16 %v917
    %v2975 = vunpack.c.l.b16 %v918
    %v2976 = vunpack.c.h.b16 %v918
    %v2977 = vunpack.c.l.b16 %v919
    %v2978 = vunpack.c.h.b16 %v919
    %v2979 = vunpack.c.l.b16 %v920
    %v2980 = vunpack.c.h.b16 %v920
    %v2981 = vunpack.c.l.b16 %v921
    %v2982 = vunpack.c.h.b16 %v921
    %v2983 = vunpack.c.l.b16 %v922
    %v2984 = vunpack.c.h.b16 %v922
    %v2985 = vunpack.c.l.b16 %v923
    %v2986 = vunpack.c.h.b16 %v923
    %v2987 = vunpack.c.l.b16 %v924
    %v2988 = vunpack.c.h.b16 %v924
    %v2989 = vunpack.c.l.b16 %v925
    %v2990 = vunpack.c.h.b16 %v925
    %v2991 = vunpack.c.l.b16 %v926
    %v2992 = vunpack.c.h.b16 %v926
    %v2993 = vunpack.c.l.b16 %v927
    %v2994 = vunpack.c.h.b16 %v927
    %v2995 = vunpack.c.l.b16 %v928
    %v2996 = vunpack.c.h.b16 %v928
    %v2997 = vunpack.c.l.b16 %v929
    %v2998 = vunpack.c.h.b16 %v929
    %v2999 = vunpack.c.l.b16 %v930
    %v3000 = vunpack.c.h.b16 %v930
    %v3001 = vunpack.c.l.b16 %v931
    %v3002 = vunpack.c.h.b16 %v931
    %v3003 = vunpack.c.l.b16 %v932
    %v3004 = vunpack.c.h.b16 %v932
    %v3005 = vunpack.c.l.b16 %v933
    %v3006 = vunpack.c.h.b16 %v933
    %v3007 = vunpack.c.l.b16 %v934
    %v3008 = vunpack.c.h.b16 %v934
    %v3009 = vunpack.c.l.b16 %v935
    %v3010 = vunpack.c.h.b16 %v935
    %v3011 = vunpack.c.l.b16 %v936
    %v3012 = vunpack.c.h.b16 %v936
    %v3013 = vunpack.c.l.b16 %v937
    %v3014 = vunpack.c.h.b16 %v937
    %v3015 = vunpack.c.l.b16 %v938
    %v3016 = vunpack.c.h.b16 %v938
    %v3017 = vunpack.c.l.b16 %v939
    %v3018 = vunpack.c.h.b16 %v939
    %v3019 = vunpack.c.l.b16 %v940
    %v3020 = vunpack.c.h.b16 %v940
    %v3021 = vunpack.c.l.b16 %v941
    %v3022 = vunpack.c.h.b16 %v941
    %v3023 = vunpack.c.l.b16 %v942
    %v3024 = vunpack.c.h.b16 %v942
    %v3025 = vunpack.c.l.b16 %v943
    %v3026 = vunpack.c.h.b16 %v943
    %v3027 = vunpack.c.l.b16 %v944
    %v3028 = vunpack.c.h.b16 %v944
    %v3029 = vunpack.c.l.b16 %v945
    %v3030 = vunpack.c.h.b16 %v945
    %v3031 = vunpack.c.l.b16 %v946
    %v3032 = vunpack.c.h.b16 %v946
    %v3033 = vunpack.c.l.b16 %v947
    %v3034 = vunpack.c.h.b16 %v947
    %v3035 = vunpack.c.l.b16 %v948
    %v3036 = vunpack.c.h.b16 %v948
    %v3037 = vunpack.c.l.b16 %v949
    %v3038 = vunpack.c.h.b16 %v949
    %v3039 = vunpack.c.l.b16 %v950
    %v3040 = vunpack.c.h.b16 %v950
    %v3041 = vunpack.c.l.b16 %v951
    %v3042 = vunpack.c.h.b16 %v951
    %v3043 = vunpack.c.l.b16 %v952
    %v3044 = vunpack.c.h.b16 %v952
    %v3045 = vunpack.c.l.b16 %v953
    %v3046 = vunpack.c.h.b16 %v953
    %v3047 = vunpack.c.l.b16 %v954
    %v3048 = vunpack.c.h.b16 %v954
    %v3049 = vunpack.c.l.b16 %v955
    %v3050 = vunpack.c.h.b16 %v955
    %v3051 = vunpack.c.l.b16 %v956
    %v3052 = vunpack.c.h.b16 %v956
    %v3053 = vunpack.c.l.b16 %v957
    %v3054 = vunpack.c.h.b16 %v957
    %v3055 = vunpack.c.l.b16 %v958
    %v3056 = vunpack.c.h.b16 %v958
    %v3057 = vunpack.c.l.b16 %v959
    %v3058 = vunpack.c.h.b16 %v959
    %v3059 = vunpack.c.l.b16 %v960
    %v3060 = vunpack.c.h.b16 %v960
    %v3061 = vunpack.c.l.b16 %v961
    %v3062 = vunpack.c.h.b16 %v961
    %v3063 = vunpack.c.l.b16 %v962
    %v3064 = vunpack.c.h.b16 %v962
    %v3065 = vunpack.c.l.b16 %v963
    %v3066 = vunpack.c.h.b16 %v963
    %v3067 = vunpack.c.l.b16 %v964
    %v3068 = vunpack.c.h.b16 %v964
    %v3069 = vunpack.c.l.b16 %v965
    %v3070 = vunpack.c.h.b16 %v965
    %v3071 = vunpack.c.l.b16 %v966
    %v3072 = vunpack.c.h.b16 %v966
    %v3073 = vunpack.c.l.b16 %v967
    %v3074 = vunpack.c.h.b16 %v967
    %v3075 = vunpack.c.l.b16 %v968
    %v3076 = vunpack.c.h.b16 %v968
    %v3077 = vunpack.c.l.b16 %v969
    %v3078 = vunpack.c.h.b16 %v969
    %v3079 = vunpack.c.l.b16 %v970
    %v3080 = vunpack.c.h.b16 %v970
    %v3081 = vunpack.c.l.b16 %v971
    %v3082 = vunpack.c.h.b16 %v971
    %v3083 = vunpack.c.l.b16 %v972
    %v3084 = vunpack.c.h.b16 %v972
    %v3085 = vunpack.c.l.b16 %v973
    %v3086 = vunpack.c.h.b16 %v973
    %v3087 = vunpack.c.l.b16 %v974
    %v3088 = vunpack.c.h.b16 %v974
    %v3089 = vunpack.c.l.b16 %v975
    %v3090 = vunpack.c.h.b16 %v975
    %v3091 = vunpack.c.l.b16 %v976
    %v3092 = vunpack.c.h.b16 %v976
    %v3093 = vunpack.c.l.b16 %v977
    %v3094 = vunpack.c.h.b16 %v977
    %v3095 = vunpack.c.l.b16 %v978
    %v3096 = vunpack.c.h.b16 %v978
    %v3097 = vunpack.c.l.b16 %v979
    %v3098 = vunpack.c.h.b16 %v979
    %v3099 = vunpack.c.l.b16 %v980
    %v3100 = vunpack.c.h.b16 %v980
    %v3101 = vunpack.c.l.b16 %v981
    %v3102 = vunpack.c.h.b16 %v981
    %v3103 = vunpack.c.l.b16 %v982
    %v3104 = vunpack.c.h.b16 %v982
    %v3105 = vunpack.c.l.b16 %v983
    %v3106 = vunpack.c.h.b16 %v983
    %v3107 = vunpack.c.l.b16 %v984
    %v3108 = vunpack.c.h.b16 %v984
    %v3109 = vunpack.c.l.b16 %v985
    %v3110 = vunpack.c.h.b16 %v985
    %v3111 = vunpack.c.l.b16 %v986
    %v3112 = vunpack.c.h.b16 %v986
    %v3113 = vunpack.c.l.b16 %v987
    %v3114 = vunpack.c.h.b16 %v987
    %v3115 = vunpack.c.l.b16 %v988
    %v3116 = vunpack.c.h.b16 %v988
    %v3117 = vunpack.c.l.b16 %v989
    %v3118 = vunpack.c.h.b16 %v989
    %v3119 = vunpack.c.l.b16 %v990
    %v3120 = vunpack.c.h.b16 %v990
    %v3121 = vunpack.c.l.b16 %v991
    %v3122 = vunpack.c.h.b16 %v991
    %v3123 = vunpack.c.l.b16 %v992
    %v3124 = vunpack.c.h.b16 %v992
    %v3125 = vunpack.c.l.b16 %v993
    %v3126 = vunpack.c.h.b16 %v993
    %v3127 = vunpack.c.l.b16 %v994
    %v3128 = vunpack.c.h.b16 %v994
    %v3129 = vunpack.c.l.b16 %v995
    %v3130 = vunpack.c.h.b16 %v995
    %v3131 = vunpack.c.l.b16 %v996
    %v3132 = vunpack.c.h.b16 %v996
    %v3133 = vunpack.c.l.b16 %v997
    %v3134 = vunpack.c.h.b16 %v997
    %v3135 = vunpack.c.l.b16 %v998
    %v3136 = vunpack.c.h.b16 %v998
    %v3137 = vunpack.c.l.b16 %v999
    %v3138 = vunpack.c.h.b16 %v999
    %v3139 = vunpack.c.l.b16 %v1000
    %v3140 = vunpack.c.h.b16 %v1000
    %v3141 = vunpack.c.l.b16 %v1001
    %v3142 = vunpack.c.h.b16 %v1001
    %v3143 = vunpack.c.l.b16 %v1002
    %v3144 = vunpack.c.h.b16 %v1002
    %v3145 = vunpack.c.l.b16 %v1003
    %v3146 = vunpack.c.h.b16 %v1003
    %v3147 = vunpack.c.l.b16 %v1004
    %v3148 = vunpack.c.h.b16 %v1004
    %v3149 = vunpack.c.l.b16 %v1005
    %v3150 = vunpack.c.h.b16 %v1005
    %v3151 = vunpack.c.l.b16 %v1006
    %v3152 = vunpack.c.h.b16 %v1006
    %v3153 = vunpack.c.l.b16 %v1007
    %v3154 = vunpack.c.h.b16 %v1007
    %v3155 = vunpack.c.l.b16 %v1008
    %v3156 = vunpack.c.h.b16 %v1008
    %v3157 = vunpack.c.l.b16 %v1009
    %v3158 = vunpack.c.h.b16 %v1009
    %v3159 = vunpack.c.l.b16 %v1010
    %v3160 = vunpack.c.h.b16 %v1010
    %v3161 = vunpack.c.l.b16 %v1011
    %v3162 = vunpack.c.h.b16 %v1011
    %v3163 = vunpack.c.l.b16 %v1012
    %v3164 = vunpack.c.h.b16 %v1012
    %v3165 = vunpack.c.l.b16 %v1013
    %v3166 = vunpack.c.h.b16 %v1013
    %v3167 = vunpack.c.l.b16 %v1014
    %v3168 = vunpack.c.h.b16 %v1014
    %v3169 = vunpack.c.l.b16 %v1015
    %v3170 = vunpack.c.h.b16 %v1015
    %v3171 = vunpack.c.l.b16 %v1016
    %v3172 = vunpack.c.h.b16 %v1016
    %v3173 = vunpack.c.l.b16 %v1017
    %v3174 = vunpack.c.h.b16 %v1017
    %v3175 = vunpack.c.l.b16 %v1018
    %v3176 = vunpack.c.h.b16 %v1018
    %v3177 = vunpack.c.l.b16 %v1019
    %v3178 = vunpack.c.h.b16 %v1019
    %v3179 = vunpack.c.l.b16 %v1020
    %v3180 = vunpack.c.h.b16 %v1020
    %v3181 = vunpack.c.l.b16 %v1021
    %v3182 = vunpack.c.h.b16 %v1021
    %v3183 = vunpack.c.l.b16 %v1022
    %v3184 = vunpack.c.h.b16 %v1022
    %v3185 = vunpack.c.l.b16 %v1023
    %v3186 = vunpack.c.h.b16 %v1023
    %v3187 = vunpack.c.l.b16 %v1024
    %v3188 = vunpack.c.h.b16 %v1024
    %v3189 = vunpack.c.l.b16 %v1025
    %v3190 = vunpack.c.h.b16 %v1025
    %v3191 = vunpack.c.l.b16 %v1026
    %v3192 = vunpack.c.h.b16 %v1026
    %v3193 = vunpack.c.l.b16 %v1027
    %v3194 = vunpack.c.h.b16 %v1027
    %v3195 = vunpack.c.l.b16 %v1028
    %v3196 = vunpack.c.h.b16 %v1028
    %v3197 = vunpack.c.l.b16 %v1029
    %v3198 = vunpack.c.h.b16 %v1029
    %v3199 = vunpack.c.l.b16 %v1030
    %v3200 = vunpack.c.h.b16 %v1030
    %v3201 = vunpack.c.l.b16 %v1031
    %v3202 = vunpack.c.h.b16 %v1031
    %v3203 = vunpack.c.l.b16 %v1032
    %v3204 = vunpack.c.h.b16 %v1032
    %v3205 = vunpack.c.l.b16 %v1033
    %v3206 = vunpack.c.h.b16 %v1033
    %v3207 = vunpack.c.l.b16 %v1034
    %v3208 = vunpack.c.h.b16 %v1034
    %v3209 = vunpack.c.l.b16 %v1035
    %v3210 = vunpack.c.h.b16 %v1035
    %v3211 = vunpack.c.l.b16 %v1036
    %v3212 = vunpack.c.h.b16 %v1036
    %v3213 = vunpack.c.l.b16 %v1037
    %v3214 = vunpack.c.h.b16 %v1037
    %v3215 = vunpack.c.l.b16 %v1038
    %v3216 = vunpack.c.h.b16 %v1038
    %v3217 = vunpack.c.l.b16 %v1039
    %v3218 = vunpack.c.h.b16 %v1039
    %v3219 = vunpack.c.l.b16 %v1040
    %v3220 = vunpack.c.h.b16 %v1040
    %v3221 = vunpack.c.l.b16 %v1041
    %v3222 = vunpack.c.h.b16 %v1041
    %v3223 = vunpack.c.l.b16 %v1042
    %v3224 = vunpack.c.h.b16 %v1042
    %v3225 = vunpack.c.l.b16 %v1043
    %v3226 = vunpack.c.h.b16 %v1043
    %v3227 = vunpack.c.l.b16 %v1044
    %v3228 = vunpack.c.h.b16 %v1044
    %v3229 = vunpack.c.l.b16 %v1045
    %v3230 = vunpack.c.h.b16 %v1045
    %v3231 = vunpack.c.l.b16 %v1046
    %v3232 = vunpack.c.h.b16 %v1046
    %v3233 = vunpack.c.l.b16 %v1047
    %v3234 = vunpack.c.h.b16 %v1047
    %v3235 = vunpack.c.l.b16 %v1048
    %v3236 = vunpack.c.h.b16 %v1048
    %v3237 = vunpack.c.l.b16 %v1049
    %v3238 = vunpack.c.h.b16 %v1049
    %v3239 = vunpack.c.l.b16 %v1050
    %v3240 = vunpack.c.h.b16 %v1050
    %v3241 = vunpack.c.l.b16 %v1051
    %v3242 = vunpack.c.h.b16 %v1051
    %v3243 = vunpack.c.l.b16 %v1052
    %v3244 = vunpack.c.h.b16 %v1052
    %v3245 = vunpack.c.l.b16 %v1053
    %v3246 = vunpack.c.h.b16 %v1053
    %v3247 = vunpack.c.l.b16 %v1054
    %v3248 = vunpack.c.h.b16 %v1054
    %v3249 = vunpack.c.l.b16 %v1055
    %v3250 = vunpack.c.h.b16 %v1055
    %v3251 = vunpack.c.l.b16 %v1056
    %v3252 = vunpack.c.h.b16 %v1056
    %v3253 = vunpack.c.l.b16 %v1057
    %v3254 = vunpack.c.h.b16 %v1057
    %v3255 = vunpack.c.l.b16 %v1058
    %v3256 = vunpack.c.h.b16 %v1058
    %v3257 = vunpack.c.l.b16 %v1059
    %v3258 = vunpack.c.h.b16 %v1059
    %v3259 = vunpack.c.l.b16 %v1060
    %v3260 = vunpack.c.h.b16 %v1060
    %v3261 = vunpack.c.l.b16 %v1061
    %v3262 = vunpack.c.h.b16 %v1061
    %v3263 = vunpack.c.l.b16 %v1062
    %v3264 = vunpack.c.h.b16 %v1062
    %v3265 = vunpack.c.l.b16 %v1063
    %v3266 = vunpack.c.h.b16 %v1063
    %v3267 = vunpack.c.l.b16 %v1064
    %v3268 = vunpack.c.h.b16 %v1064
    %v3269 = vunpack.c.l.b16 %v1065
    %v3270 = vunpack.c.h.b16 %v1065
    %v3271 = vunpack.c.l.b16 %v1066
    %v3272 = vunpack.c.h.b16 %v1066
    %v3273 = vunpack.c.l.b16 %v1067
    %v3274 = vunpack.c.h.b16 %v1067
    %v3275 = vunpack.c.l.b16 %v1068
    %v3276 = vunpack.c.h.b16 %v1068
    %v3277 = vunpack.c.l.b16 %v1069
    %v3278 = vunpack.c.h.b16 %v1069
    %v3279 = vunpack.c.l.b16 %v1070
    %v3280 = vunpack.c.h.b16 %v1070
    %v3281 = vunpack.c.l.b16 %v1071
    %v3282 = vunpack.c.h.b16 %v1071
    %v3283 = vunpack.c.l.b16 %v1072
    %v3284 = vunpack.c.h.b16 %v1072
    %v3285 = vunpack.c.l.b16 %v1073
    %v3286 = vunpack.c.h.b16 %v1073
    %v3287 = vunpack.c.l.b16 %v1074
    %v3288 = vunpack.c.h.b16 %v1074
    %v3289 = vunpack.c.l.b16 %v1075
    %v3290 = vunpack.c.h.b16 %v1075
    %v3291 = vunpack.c.l.b16 %v1076
    %v3292 = vunpack.c.h.b16 %v1076
    %v3293 = vunpack.c.l.b16 %v1077
    %v3294 = vunpack.c.h.b16 %v1077
    %v3295 = vunpack.c.l.b16 %v1078
    %v3296 = vunpack.c.h.b16 %v1078
    %v3297 = vunpack.c.l.b16 %v1079
    %v3298 = vunpack.c.h.b16 %v1079
    %v3299 = vunpack.c.l.b16 %v1080
    %v3300 = vunpack.c.h.b16 %v1080
    %v3301 = vunpack.c.l.b16 %v1081
    %v3302 = vunpack.c.h.b16 %v1081
    %v3303 = vunpack.c.l.b16 %v1082
    %v3304 = vunpack.c.h.b16 %v1082
    %v3305 = vunpack.c.l.b16 %v1083
    %v3306 = vunpack.c.h.b16 %v1083
    %v3307 = vunpack.c.l.b16 %v1084
    %v3308 = vunpack.c.h.b16 %v1084
    %v3309 = vunpack.c.l.b16 %v1085
    %v3310 = vunpack.c.h.b16 %v1085
    %v3311 = vunpack.c.l.b16 %v1086
    %v3312 = vunpack.c.h.b16 %v1086
    %v3313 = vunpack.c.l.b16 %v1087
    %v3314 = vunpack.c.h.b16 %v1087
    %v3315 = vunpack.c.l.b16 %v1088
    %v3316 = vunpack.c.h.b16 %v1088
    %v3317 = vunpack.c.l.b16 %v1089
    %v3318 = vunpack.c.h.b16 %v1089
    %v3319 = vunpack.c.l.b16 %v1090
    %v3320 = vunpack.c.h.b16 %v1090
    %v3321 = vunpack.c.l.b16 %v1091
    %v3322 = vunpack.c.h.b16 %v1091
    %v3323 = vunpack.c.l.b16 %v1092
    %v3324 = vunpack.c.h.b16 %v1092
    %v3325 = vunpack.c.l.b16 %v1093
    %v3326 = vunpack.c.h.b16 %v1093
    %v3327 = vunpack.c.l.b16 %v1094
    %v3328 = vunpack.c.h.b16 %v1094
    %v3329 = vunpack.c.l.b16 %v1095
    %v3330 = vunpack.c.h.b16 %v1095
    %v3331 = vunpack.c.l.b16 %v1096
    %v3332 = vunpack.c.h.b16 %v1096
    %v3333 = vunpack.c.l.b16 %v1097
    %v3334 = vunpack.c.h.b16 %v1097
    %v3335 = vunpack.c.l.b16 %v1098
    %v3336 = vunpack.c.h.b16 %v1098
    %v3337 = vunpack.c.l.b16 %v1099
    %v3338 = vunpack.c.h.b16 %v1099
    %v3339 = vunpack.c.l.b16 %v1100
    %v3340 = vunpack.c.h.b16 %v1100
    %v3341 = vunpack.c.l.b16 %v1101
    %v3342 = vunpack.c.h.b16 %v1101
    %v3343 = vunpack.c.l.b16 %v1102
    %v3344 = vunpack.c.h.b16 %v1102
    %v3345 = vunpack.c.l.b16 %v1103
    %v3346 = vunpack.c.h.b16 %v1103
    %v3347 = vunpack.c.l.b16 %v1104
    %v3348 = vunpack.c.h.b16 %v1104
    %v3349 = vunpack.c.l.b16 %v1105
    %v3350 = vunpack.c.h.b16 %v1105
    %v3351 = vunpack.c.l.b16 %v1106
    %v3352 = vunpack.c.h.b16 %v1106
    %v3353 = vunpack.c.l.b16 %v1107
    %v3354 = vunpack.c.h.b16 %v1107
    %v3355 = vunpack.c.l.b16 %v1108
    %v3356 = vunpack.c.h.b16 %v1108
    %v3357 = vunpack.c.l.b16 %v1109
    %v3358 = vunpack.c.h.b16 %v1109
    %v3359 = vunpack.c.l.b16 %v1110
    %v3360 = vunpack.c.h.b16 %v1110
    %v3361 = vunpack.c.l.b16 %v1111
    %v3362 = vunpack.c.h.b16 %v1111
    %v3363 = vunpack.c.l.b16 %v1112
    %v3364 = vunpack.c.h.b16 %v1112
    %v3365 = vunpack.c.l.b16 %v1113
    %v3366 = vunpack.c.h.b16 %v1113
    %v3367 = vunpack.c.l.b16 %v1114
    %v3368 = vunpack.c.h.b16 %v1114
    %v3369 = vunpack.c.l.b16 %v1115
    %v3370 = vunpack.c.h.b16 %v1115
    %v3371 = vunpack.c.l.b16 %v1116
    %v3372 = vunpack.c.h.b16 %v1116
    %v3373 = vunpack.c.l.b16 %v1117
    %v3374 = vunpack.c.h.b16 %v1117
    %v3375 = vunpack.c.l.b16 %v1118
    %v3376 = vunpack.c.h.b16 %v1118
    %v3377 = vunpack.c.l.b16 %v1119
    %v3378 = vunpack.c.h.b16 %v1119
    %v3379 = vunpack.c.l.b16 %v1120
    %v3380 = vunpack.c.h.b16 %v1120
    %v3381 = vunpack.c.l.b16 %v1121
    %v3382 = vunpack.c.h.b16 %v1121
    %v3383 = vunpack.c.l.b16 %v1122
    %v3384 = vunpack.c.h.b16 %v1122
    %v3385 = vunpack.c.l.b16 %v1123
    %v3386 = vunpack.c.h.b16 %v1123
    %v3387 = vunpack.c.l.b16 %v1124
    %v3388 = vunpack.c.h.b16 %v1124
    %v3389 = vunpack.c.l.b16 %v1125
    %v3390 = vunpack.c.h.b16 %v1125
    %v3391 = vunpack.c.l.b16 %v1126
    %v3392 = vunpack.c.h.b16 %v1126
    %v3393 = vunpack.c.l.b16 %v1127
    %v3394 = vunpack.c.h.b16 %v1127
    %v3395 = vunpack.c.l.b16 %v1128
    %v3396 = vunpack.c.h.b16 %v1128
    %v3397 = vunpack.c.l.b16 %v1129
    %v3398 = vunpack.c.h.b16 %v1129
    %v3399 = vunpack.c.l.b16 %v1130
    %v3400 = vunpack.c.h.b16 %v1130
    %v3401 = vunpack.c.l.b16 %v1131
    %v3402 = vunpack.c.h.b16 %v1131
    %v3403 = vunpack.c.l.b16 %v1132
    %v3404 = vunpack.c.h.b16 %v1132
    %v3405 = vunpack.c.l.b16 %v1133
    %v3406 = vunpack.c.h.b16 %v1133
    %v3407 = vunpack.c.l.b16 %v1134
    %v3408 = vunpack.c.h.b16 %v1134
    %v3409 = vunpack.c.l.b16 %v1135
    %v3410 = vunpack.c.h.b16 %v1135
    %v3411 = vunpack.c.l.b16 %v1136
    %v3412 = vunpack.c.h.b16 %v1136
    %v3413 = vunpack.c.l.b16 %v1137
    %v3414 = vunpack.c.h.b16 %v1137
    %v3415 = vunpack.c.l.b16 %v1138
    %v3416 = vunpack.c.h.b16 %v1138
    %v3417 = vunpack.c.l.b16 %v1139
    %v3418 = vunpack.c.h.b16 %v1139
    %v3419 = vunpack.c.l.b16 %v1140
    %v3420 = vunpack.c.h.b16 %v1140
    %v3421 = vunpack.c.l.b16 %v1141
    %v3422 = vunpack.c.h.b16 %v1141
    %v3423 = vunpack.c.l.b16 %v1142
    %v3424 = vunpack.c.h.b16 %v1142
    %v3425 = vunpack.c.l.b16 %v1143
    %v3426 = vunpack.c.h.b16 %v1143
    %v3427 = vunpack.c.l.b16 %v1144
    %v3428 = vunpack.c.h.b16 %v1144
    %v3429 = vunpack.c.l.b16 %v1145
    %v3430 = vunpack.c.h.b16 %v1145
    %v3431 = vunpack.c.l.b16 %v1146
    %v3432 = vunpack.c.h.b16 %v1146
    %v3433 = vunpack.c.l.b16 %v1147
    %v3434 = vunpack.c.h.b16 %v1147
    %v3435 = vunpack.c.l.b16 %v1148
    %v3436 = vunpack.c.h.b16 %v1148
    %v3437 = vunpack.c.l.b16 %v1149
    %v3438 = vunpack.c.h.b16 %v1149
    %v3439 = vunpack.c.l.b16 %v1150
    %v3440 = vunpack.c.h.b16 %v1150
    %v3441 = vunpack.c.l.b16 %v1151
    %v3442 = vunpack.c.h.b16 %v1151
    %v3443 = vunpack.c.l.b16 %v1152
    %v3444 = vunpack.c.h.b16 %v1152
    %v3445 = vunpack.c.l.b16 %v1153
    %v3446 = vunpack.c.h.b16 %v1153
    %v3447 = vunpack.c.l.b16 %v1154
    %v3448 = vunpack.c.h.b16 %v1154
    %v3449 = vunpack.c.l.b16 %v1155
    %v3450 = vunpack.c.h.b16 %v1155
    %v3451 = vunpack.c.l.b16 %v1156
    %v3452 = vunpack.c.h.b16 %v1156
    %v3453 = vunpack.c.l.b16 %v1157
    %v3454 = vunpack.c.h.b16 %v1157
    %v3455 = vunpack.c.l.b16 %v1158
    %v3456 = vunpack.c.h.b16 %v1158
    %v3457 = vunpack.c.l.b16 %v1159
    %v3458 = vunpack.c.h.b16 %v1159
    %v3459 = vunpack.c.l.b16 %v1160
    %v3460 = vunpack.c.h.b16 %v1160
    %v3461 = vunpack.c.l.b16 %v1161
    %v3462 = vunpack.c.h.b16 %v1161
    %v3463 = vunpack.c.l.b16 %v1162
    %v3464 = vunpack.c.h.b16 %v1162
    %v3465 = vunpack.c.l.b16 %v1163
    %v3466 = vunpack.c.h.b16 %v1163
    %v3467 = vunpack.c.l.b16 %v1164
    %v3468 = vunpack.c.h.b16 %v1164
    %v3469 = vunpack.c.l.b16 %v1165
    %v3470 = vunpack.c.h.b16 %v1165
    %v3471 = vunpack.c.l.b16 %v1166
    %v3472 = vunpack.c.h.b16 %v1166
    %v3473 = vunpack.c.l.b16 %v1167
    %v3474 = vunpack.c.h.b16 %v1167
    %v3475 = vunpack.c.l.b16 %v1168
    %v3476 = vunpack.c.h.b16 %v1168
    %v3477 = vunpack.c.l.b16 %v1169
    %v3478 = vunpack.c.h.b16 %v1169
    %v3479 = vunpack.c.l.b16 %v1170
    %v3480 = vunpack.c.h.b16 %v1170
    %v3481 = vunpack.c.l.b16 %v1171
    %v3482 = vunpack.c.h.b16 %v1171
    %v3483 = vunpack.c.l.b16 %v1172
    %v3484 = vunpack.c.h.b16 %v1172
    %v3485 = vunpack.c.l.b16 %v1173
    %v3486 = vunpack.c.h.b16 %v1173
    %v3487 = vunpack.c.l.b16 %v1174
    %v3488 = vunpack.c.h.b16 %v1174
    %v3489 = vunpack.c.l.b16 %v1175
    %v3490 = vunpack.c.h.b16 %v1175
    %v3491 = vunpack.c.l.b16 %v1176
    %v3492 = vunpack.c.h.b16 %v1176
    %v3493 = vunpack.c.l.b16 %v1177
    %v3494 = vunpack.c.h.b16 %v1177
    %v3495 = vunpack.c.l.b16 %v1178
    %v3496 = vunpack.c.h.b16 %v1178
    %v3497 = vunpack.c.l.b16 %v1179
    %v3498 = vunpack.c.h.b16 %v1179
    %v3499 = vunpack.c.l.b16 %v1180
    %v3500 = vunpack.c.h.b16 %v1180
    %v3501 = vunpack.c.l.b16 %v1181
    %v3502 = vunpack.c.h.b16 %v1181
    %v3503 = vunpack.c.l.b16 %v1182
    %v3504 = vunpack.c.h.b16 %v1182
    %v3505 = vunpack.c.l.b16 %v1183
    %v3506 = vunpack.c.h.b16 %v1183
    %v3507 = vunpack.c.l.b16 %v1184
    %v3508 = vunpack.c.h.b16 %v1184
    %v3509 = vunpack.c.l.b16 %v1185
    %v3510 = vunpack.c.h.b16 %v1185
    %v3511 = vunpack.c.l.b16 %v1186
    %v3512 = vunpack.c.h.b16 %v1186
    %v3513 = vunpack.c.l.b16 %v1187
    %v3514 = vunpack.c.h.b16 %v1187
    %v3515 = vunpack.c.l.b16 %v1188
    %v3516 = vunpack.c.h.b16 %v1188
    %v3517 = vunpack.c.l.b16 %v1189
    %v3518 = vunpack.c.h.b16 %v1189
    %v3519 = vunpack.c.l.b16 %v1190
    %v3520 = vunpack.c.h.b16 %v1190
    %v3521 = vunpack.c.l.b16 %v1191
    %v3522 = vunpack.c.h.b16 %v1191
    %v3523 = vunpack.c.l.b16 %v1192
    %v3524 = vunpack.c.h.b16 %v1192
    %v3525 = vunpack.c.l.b16 %v1193
    %v3526 = vunpack.c.h.b16 %v1193
    %v3527 = vunpack.c.l.b16 %v1194
    %v3528 = vunpack.c.h.b16 %v1194
    %v3529 = vunpack.c.l.b16 %v1195
    %v3530 = vunpack.c.h.b16 %v1195
    %v3531 = vunpack.c.l.b16 %v1196
    %v3532 = vunpack.c.h.b16 %v1196
    %v3533 = vunpack.c.l.b16 %v1197
    %v3534 = vunpack.c.h.b16 %v1197
    %v3535 = vunpack.c.l.b16 %v1198
    %v3536 = vunpack.c.h.b16 %v1198
    %v3537 = vunpack.c.l.b16 %v1199
    %v3538 = vunpack.c.h.b16 %v1199
    %v3539 = vunpack.c.l.b16 %v1200
    %v3540 = vunpack.c.h.b16 %v1200
    %v3541 = vunpack.c.l.b16 %v1201
    %v3542 = vunpack.c.h.b16 %v1201
    %v3543 = vunpack.c.l.b16 %v1202
    %v3544 = vunpack.c.h.b16 %v1202
    %v3545 = vunpack.c.l.b16 %v1203
    %v3546 = vunpack.c.h.b16 %v1203
    %v3547 = vunpack.c.l.b16 %v1204
    %v3548 = vunpack.c.h.b16 %v1204
    %v3549 = vunpack.c.l.b16 %v1205
    %v3550 = vunpack.c.h.b16 %v1205
    %v3551 = vunpack.c.l.b16 %v1206
    %v3552 = vunpack.c.h.b16 %v1206
    %v3553 = vunpack.c.l.b16 %v1207
    %v3554 = vunpack.c.h.b16 %v1207
    %v3555 = vunpack.c.l.b16 %v1208
    %v3556 = vunpack.c.h.b16 %v1208
    %v3557 = vunpack.c.l.b16 %v1209
    %v3558 = vunpack.c.h.b16 %v1209
    %v3559 = vunpack.c.l.b16 %v1210
    %v3560 = vunpack.c.h.b16 %v1210
    %v3561 = vunpack.c.l.b16 %v1211
    %v3562 = vunpack.c.h.b16 %v1211
    %v3563 = vunpack.c.l.b16 %v1212
    %v3564 = vunpack.c.h.b16 %v1212
    %v3565 = vunpack.c.l.b16 %v1213
    %v3566 = vunpack.c.h.b16 %v1213
    %v3567 = vunpack.c.l.b16 %v1214
    %v3568 = vunpack.c.h.b16 %v1214
    %v3569 = vunpack.c.l.b16 %v1215
    %v3570 = vunpack.c.h.b16 %v1215
    %v3571 = vunpack.c.l.b16 %v1216
    %v3572 = vunpack.c.h.b16 %v1216
    %v3573 = vunpack.c.l.b16 %v1217
    %v3574 = vunpack.c.h.b16 %v1217
    %v3575 = vunpack.c.l.b16 %v1218
    %v3576 = vunpack.c.h.b16 %v1218
    %v3577 = vunpack.c.l.b16 %v1219
    %v3578 = vunpack.c.h.b16 %v1219
    %v3579 = vunpack.c.l.b16 %v1220
    %v3580 = vunpack.c.h.b16 %v1220
    %v3581 = vunpack.c.l.b16 %v1221
    %v3582 = vunpack.c.h.b16 %v1221
    %v3583 = vunpack.c.l.b16 %v1222
    %v3584 = vunpack.c.h.b16 %v1222
    %v3585 = vunpack.c.l.b16 %v1223
    %v3586 = vunpack.c.h.b16 %v1223
    %v3587 = vunpack.c.l.b16 %v1224
    %v3588 = vunpack.c.h.b16 %v1224
    %v3589 = vunpack.c.l.b16 %v1225
    %v3590 = vunpack.c.h.b16 %v1225
    %v3591 = vunpack.c.l.b16 %v1226
    %v3592 = vunpack.c.h.b16 %v1226
    %v3593 = vunpack.c.l.b16 %v1227
    %v3594 = vunpack.c.h.b16 %v1227
    %v3595 = vunpack.c.l.b16 %v1228
    %v3596 = vunpack.c.h.b16 %v1228
    %v3597 = vunpack.c.l.b16 %v1229
    %v3598 = vunpack.c.h.b16 %v1229
    %v3599 = vunpack.c.l.b16 %v1230
    %v3600 = vunpack.c.h.b16 %v1230
    %v3601 = vunpack.c.l.b16 %v1231
    %v3602 = vunpack.c.h.b16 %v1231
    %v3603 = vunpack.c.l.b16 %v1232
    %v3604 = vunpack.c.h.b16 %v1232
    %v3605 = vunpack.c.l.b16 %v1233
    %v3606 = vunpack.c.h.b16 %v1233
    %v3607 = vunpack.c.l.b16 %v1234
    %v3608 = vunpack.c.h.b16 %v1234
    %v3609 = vunpack.c.l.b16 %v1235
    %v3610 = vunpack.c.h.b16 %v1235
    %v3611 = vunpack.c.l.b16 %v1236
    %v3612 = vunpack.c.h.b16 %v1236
    %v3613 = vunpack.c.l.b16 %v1237
    %v3614 = vunpack.c.h.b16 %v1237
    %v3615 = vunpack.c.l.b16 %v1238
    %v3616 = vunpack.c.h.b16 %v1238
    %v3617 = vunpack.c.l.b16 %v1239
    %v3618 = vunpack.c.h.b16 %v1239
    %v3619 = vunpack.c.l.b16 %v1240
    %v3620 = vunpack.c.h.b16 %v1240
    %v3621 = vunpack.c.l.b16 %v1241
    %v3622 = vunpack.c.h.b16 %v1241
    %v3623 = vunpack.c.l.b16 %v1242
    %v3624 = vunpack.c.h.b16 %v1242
    %v3625 = vunpack.c.l.b16 %v1243
    %v3626 = vunpack.c.h.b16 %v1243
    %v3627 = vunpack.c.l.b16 %v1244
    %v3628 = vunpack.c.h.b16 %v1244
    %v3629 = vunpack.c.l.b16 %v1245
    %v3630 = vunpack.c.h.b16 %v1245
    %v3631 = vunpack.c.l.b16 %v1246
    %v3632 = vunpack.c.h.b16 %v1246
    %v3633 = vunpack.c.l.b16 %v1247
    %v3634 = vunpack.c.h.b16 %v1247
    %v3635 = vunpack.c.l.b16 %v1248
    %v3636 = vunpack.c.h.b16 %v1248
    %v3637 = vunpack.c.l.b16 %v1249
    %v3638 = vunpack.c.h.b16 %v1249
    %v3639 = vunpack.c.l.b16 %v1250
    %v3640 = vunpack.c.h.b16 %v1250
    %v3641 = vunpack.c.l.b16 %v1251
    %v3642 = vunpack.c.h.b16 %v1251
    %v3643 = vunpack.c.l.b16 %v1252
    %v3644 = vunpack.c.h.b16 %v1252
    %v3645 = vunpack.c.l.b16 %v1253
    %v3646 = vunpack.c.h.b16 %v1253
    %v3647 = vunpack.c.l.b16 %v1254
    %v3648 = vunpack.c.h.b16 %v1254
    %v3649 = vunpack.c.l.b16 %v1255
    %v3650 = vunpack.c.h.b16 %v1255
    %v3651 = vunpack.c.l.b16 %v1256
    %v3652 = vunpack.c.h.b16 %v1256
    %v3653 = vunpack.c.l.b16 %v1257
    %v3654 = vunpack.c.h.b16 %v1257
    %v3655 = vunpack.c.l.b16 %v1258
    %v3656 = vunpack.c.h.b16 %v1258
    %v3657 = vunpack.c.l.b16 %v1259
    %v3658 = vunpack.c.h.b16 %v1259
    %v3659 = vunpack.c.l.b16 %v1260
    %v3660 = vunpack.c.h.b16 %v1260
    %v3661 = vunpack.c.l.b16 %v1261
    %v3662 = vunpack.c.h.b16 %v1261
    %v3663 = vunpack.c.l.b16 %v1262
    %v3664 = vunpack.c.h.b16 %v1262
    %v3665 = vunpack.c.l.b16 %v1263
    %v3666 = vunpack.c.h.b16 %v1263
    %v3667 = vunpack.c.l.b16 %v1264
    %v3668 = vunpack.c.h.b16 %v1264
    %v3669 = vunpack.c.l.b16 %v1265
    %v3670 = vunpack.c.h.b16 %v1265
    %v3671 = vunpack.c.l.b16 %v1266
    %v3672 = vunpack.c.h.b16 %v1266
    %v3673 = vunpack.c.l.b16 %v1267
    %v3674 = vunpack.c.h.b16 %v1267
    %v3675 = vunpack.c.l.b16 %v1268
    %v3676 = vunpack.c.h.b16 %v1268
    %v3677 = vunpack.c.l.b16 %v1269
    %v3678 = vunpack.c.h.b16 %v1269
    %v3679 = vunpack.c.l.b16 %v1270
    %v3680 = vunpack.c.h.b16 %v1270
    %v3681 = vpack.c.b16 %v2149, %v2145
    %v3682 = vpack.c.b16 %v2150, %v2146
    %v3683 = vpack.c.b16 %v2151, %v2147
    %v3684 = vpack.c.b16 %v2152, %v2148
    %v3685 = vpack.c.b16 %v2157, %v2153
    %v3686 = vpack.c.b16 %v2158, %v2154
    %v3687 = vpack.c.b16 %v2159, %v2155
    %v3688 = vpack.c.b16 %v2160, %v2156
    %v3689 = vpack.c.b16 %v2165, %v2161
    %v3690 = vpack.c.b16 %v2166, %v2162
    %v3691 = vpack.c.b16 %v2167, %v2163
    %v3692 = vpack.c.b16 %v2168, %v2164
    %v3693 = vpack.c.b16 %v2173, %v2169
    %v3694 = vpack.c.b16 %v2174, %v2170
    %v3695 = vpack.c.b16 %v2175, %v2171
    %v3696 = vpack.c.b16 %v2176, %v2172
    %v3697 = vpack.c.b16 %v2181, %v2177
    %v3698 = vpack.c.b16 %v2182, %v2178
    %v3699 = vpack.c.b16 %v2183, %v2179
    %v3700 = vpack.c.b16 %v2184, %v2180
    %v3701 = vpack.c.b16 %v2189, %v2185
    %v3702 = vpack.c.b16 %v2190, %v2186
    %v3703 = vpack.c.b16 %v2191, %v2187
    %v3704 = vpack.c.b16 %v2192, %v2188
    %v3705 = vpack.c.b16 %v2197, %v2193
    %v3706 = vpack.c.b16 %v2198, %v2194
    %v3707 = vpack.c.b16 %v2199, %v2195
    %v3708 = vpack.c.b16 %v2200, %v2196
    %v3709 = vpack.c.b16 %v2205, %v2201
    %v3710 = vpack.c.b16 %v2206, %v2202
    %v3711 = vpack.c.b16 %v2207, %v2203
    %v3712 = vpack.c.b16 %v2208, %v2204
    %v3713 = vpack.c.b16 %v2213, %v2209
    %v3714 = vpack.c.b16 %v2214, %v2210
    %v3715 = vpack.c.b16 %v2215, %v2211
    %v3716 = vpack.c.b16 %v2216, %v2212
    %v3717 = vpack.c.b16 %v2221, %v2217
    %v3718 = vpack.c.b16 %v2222, %v2218
    %v3719 = vpack.c.b16 %v2223, %v2219
    %v3720 = vpack.c.b16 %v2224, %v2220
    %v3721 = vpack.c.b16 %v2229, %v2225
    %v3722 = vpack.c.b16 %v2230, %v2226
    %v3723 = vpack.c.b16 %v2231, %v2227
    %v3724 = vpack.c.b16 %v2232, %v2228
    %v3725 = vpack.c.b16 %v2237, %v2233
    %v3726 = vpack.c.b16 %v2238, %v2234
    %v3727 = vpack.c.b16 %v2239, %v2235
    %v3728 = vpack.c.b16 %v2240, %v2236
    %v3729 = vpack.c.b16 %v2245, %v2241
    %v3730 = vpack.c.b16 %v2246, %v2242
    %v3731 = vpack.c.b16 %v2247, %v2243
    %v3732 = vpack.c.b16 %v2248, %v2244
    %v3733 = vpack.c.b16 %v2253, %v2249
    %v3734 = vpack.c.b16 %v2254, %v2250
    %v3735 = vpack.c.b16 %v2255, %v2251
    %v3736 = vpack.c.b16 %v2256, %v2252
    %v3737 = vpack.c.b16 %v2261, %v2257
    %v3738 = vpack.c.b16 %v2262, %v2258
    %v3739 = vpack.c.b16 %v2263, %v2259
    %v3740 = vpack.c.b16 %v2264, %v2260
    %v3741 = vpack.c.b16 %v2269, %v2265
    %v3742 = vpack.c.b16 %v2270, %v2266
    %v3743 = vpack.c.b16 %v2271, %v2267
    %v3744 = vpack.c.b16 %v2272, %v2268
    %v3745 = vpack.c.b16 %v2277, %v2273
    %v3746 = vpack.c.b16 %v2278, %v2274
    %v3747 = vpack.c.b16 %v2279, %v2275
    %v3748 = vpack.c.b16 %v2280, %v2276
    %v3749 = vpack.c.b16 %v2285, %v2281
    %v3750 = vpack.c.b16 %v2286, %v2282
    %v3751 = vpack.c.b16 %v2287, %v2283
    %v3752 = vpack.c.b16 %v2288, %v2284
    %v3753 = vpack.c.b16 %v2293, %v2289
    %v3754 = vpack.c.b16 %v2294, %v2290
    %v3755 = vpack.c.b16 %v2295, %v2291
    %v3756 = vpack.c.b16 %v2296, %v2292
    %v3757 = vpack.c.b16 %v2301, %v2297
    %v3758 = vpack.c.b16 %v2302, %v2298
    %v3759 = vpack.c.b16 %v2303, %v2299
    %v3760 = vpack.c.b16 %v2304, %v2300
    %v3761 = vpack.c.b16 %v2309, %v2305
    %v3762 = vpack.c.b16 %v2310, %v2306
    %v3763 = vpack.c.b16 %v2311, %v2307
    %v3764 = vpack.c.b16 %v2312, %v2308
    %v3765 = vpack.c.b16 %v2317, %v2313
    %v3766 = vpack.c.b16 %v2318, %v2314
    %v3767 = vpack.c.b16 %v2319, %v2315
    %v3768 = vpack.c.b16 %v2320, %v2316
    %v3769 = vpack.c.b16 %v2325, %v2321
    %v3770 = vpack.c.b16 %v2326, %v2322
    %v3771 = vpack.c.b16 %v2327, %v2323
    %v3772 = vpack.c.b16 %v2328, %v2324
    %v3773 = vpack.c.b16 %v2333, %v2329
    %v3774 = vpack.c.b16 %v2334, %v2330
    %v3775 = vpack.c.b16 %v2335, %v2331
    %v3776 = vpack.c.b16 %v2336, %v2332
    %v3777 = vpack.c.b16 %v2341, %v2337
    %v3778 = vpack.c.b16 %v2342, %v2338
    %v3779 = vpack.c.b16 %v2343, %v2339
    %v3780 = vpack.c.b16 %v2344, %v2340
    %v3781 = vpack.c.b16 %v2349, %v2345
    %v3782 = vpack.c.b16 %v2350, %v2346
    %v3783 = vpack.c.b16 %v2351, %v2347
    %v3784 = vpack.c.b16 %v2352, %v2348
    %v3785 = vpack.c.b16 %v2357, %v2353
    %v3786 = vpack.c.b16 %v2358, %v2354
    %v3787 = vpack.c.b16 %v2359, %v2355
    %v3788 = vpack.c.b16 %v2360, %v2356
    %v3789 = vpack.c.b16 %v2365, %v2361
    %v3790 = vpack.c.b16 %v2366, %v2362
    %v3791 = vpack.c.b16 %v2367, %v2363
    %v3792 = vpack.c.b16 %v2368, %v2364
    %v3793 = vpack.c.b16 %v2373, %v2369
    %v3794 = vpack.c.b16 %v2374, %v2370
    %v3795 = vpack.c.b16 %v2375, %v2371
    %v3796 = vpack.c.b16 %v2376, %v2372
    %v3797 = vpack.c.b16 %v2381, %v2377
    %v3798 = vpack.c.b16 %v2382, %v2378
    %v3799 = vpack.c.b16 %v2383, %v2379
    %v3800 = vpack.c.b16 %v2384, %v2380
    %v3801 = vpack.c.b16 %v2389, %v2385
    %v3802 = vpack.c.b16 %v2390, %v2386
    %v3803 = vpack.c.b16 %v2391, %v2387
    %v3804 = vpack.c.b16 %v2392, %v2388
    %v3805 = vpack.c.b16 %v2397, %v2393
    %v3806 = vpack.c.b16 %v2398, %v2394
    %v3807 = vpack.c.b16 %v2399, %v2395
    %v3808 = vpack.c.b16 %v2400, %v2396
    %v3809 = vpack.c.b16 %v2405, %v2401
    %v3810 = vpack.c.b16 %v2406, %v2402
    %v3811 = vpack.c.b16 %v2407, %v2403
    %v3812 = vpack.c.b16 %v2408, %v2404
    %v3813 = vpack.c.b16 %v2413, %v2409
    %v3814 = vpack.c.b16 %v2414, %v2410
    %v3815 = vpack.c.b16 %v2415, %v2411
    %v3816 = vpack.c.b16 %v2416, %v2412
    %v3817 = vpack.c.b16 %v2421, %v2417
    %v3818 = vpack.c.b16 %v2422, %v2418
    %v3819 = vpack.c.b16 %v2423, %v2419
    %v3820 = vpack.c.b16 %v2424, %v2420
    %v3821 = vpack.c.b16 %v2429, %v2425
    %v3822 = vpack.c.b16 %v2430, %v2426
    %v3823 = vpack.c.b16 %v2431, %v2427
    %v3824 = vpack.c.b16 %v2432, %v2428
    %v3825 = vpack.c.b16 %v2437, %v2433
    %v3826 = vpack.c.b16 %v2438, %v2434
    %v3827 = vpack.c.b16 %v2439, %v2435
    %v3828 = vpack.c.b16 %v2440, %v2436
    %v3829 = vpack.c.b16 %v2445, %v2441
    %v3830 = vpack.c.b16 %v2446, %v2442
    %v3831 = vpack.c.b16 %v2447, %v2443
    %v3832 = vpack.c.b16 %v2448, %v2444
    %v3833 = vpack.c.b16 %v2453, %v2449
    %v3834 = vpack.c.b16 %v2454, %v2450
    %v3835 = vpack.c.b16 %v2455, %v2451
    %v3836 = vpack.c.b16 %v2456, %v2452
    %v3837 = vpack.c.b16 %v2461, %v2457
    %v3838 = vpack.c.b16 %v2462, %v2458
    %v3839 = vpack.c.b16 %v2463, %v2459
    %v3840 = vpack.c.b16 %v2464, %v2460
    %v3841 = vpack.c.b16 %v2469, %v2465
    %v3842 = vpack.c.b16 %v2470, %v2466
    %v3843 = vpack.c.b16 %v2471, %v2467
    %v3844 = vpack.c.b16 %v2472, %v2468
    %v3845 = vpack.c.b16 %v2477, %v2473
    %v3846 = vpack.c.b16 %v2478, %v2474
    %v3847 = vpack.c.b16 %v2479, %v2475
    %v3848 = vpack.c.b16 %v2480, %v2476
    %v3849 = vpack.c.b16 %v2485, %v2481
    %v3850 = vpack.c.b16 %v2486, %v2482
    %v3851 = vpack.c.b16 %v2487, %v2483
    %v3852 = vpack.c.b16 %v2488, %v2484
    %v3853 = vpack.c.b16 %v2493, %v2489
    %v3854 = vpack.c.b16 %v2494, %v2490
    %v3855 = vpack.c.b16 %v2495, %v2491
    %v3856 = vpack.c.b16 %v2496, %v2492
    %v3857 = vpack.c.b16 %v2501, %v2497
    %v3858 = vpack.c.b16 %v2502, %v2498
    %v3859 = vpack.c.b16 %v2503, %v2499
    %v3860 = vpack.c.b16 %v2504, %v2500
    %v3861 = vpack.c.b16 %v2509, %v2505
    %v3862 = vpack.c.b16 %v2510, %v2506
    %v3863 = vpack.c.b16 %v2511, %v2507
    %v3864 = vpack.c.b16 %v2512, %v2508
    %v3865 = vpack.c.b16 %v2517, %v2513
    %v3866 = vpack.c.b16 %v2518, %v2514
    %v3867 = vpack.c.b16 %v2519, %v2515
    %v3868 = vpack.c.b16 %v2520, %v2516
    %v3869 = vpack.c.b16 %v2525, %v2521
    %v3870 = vpack.c.b16 %v2526, %v2522
    %v3871 = vpack.c.b16 %v2527, %v2523
    %v3872 = vpack.c.b16 %v2528, %v2524
    %v3873 = vpack.c.b16 %v2533, %v2529
    %v3874 = vpack.c.b16 %v2534, %v2530
    %v3875 = vpack.c.b16 %v2535, %v2531
    %v3876 = vpack.c.b16 %v2536, %v2532
    %v3877 = vpack.c.b16 %v2541, %v2537
    %v3878 = vpack.c.b16 %v2542, %v2538
    %v3879 = vpack.c.b16 %v2543, %v2539
    %v3880 = vpack.c.b16 %v2544, %v2540
    %v3881 = vpack.c.b16 %v2549, %v2545
    %v3882 = vpack.c.b16 %v2550, %v2546
    %v3883 = vpack.c.b16 %v2551, %v2547
    %v3884 = vpack.c.b16 %v2552, %v2548
    %v3885 = vpack.c.b16 %v2557, %v2553
    %v3886 = vpack.c.b16 %v2558, %v2554
    %v3887 = vpack.c.b16 %v2559, %v2555
    %v3888 = vpack.c.b16 %v2560, %v2556
    %v3889 = vpack.c.b16 %v2565, %v2561
    %v3890 = vpack.c.b16 %v2566, %v2562
    %v3891 = vpack.c.b16 %v2567, %v2563
    %v3892 = vpack.c.b16 %v2568, %v2564
    %v3893 = vpack.c.b16 %v2573, %v2569
    %v3894 = vpack.c.b16 %v2574, %v2570
    %v3895 = vpack.c.b16 %v2575, %v2571
    %v3896 = vpack.c.b16 %v2576, %v2572
    %v3897 = vpack.c.b16 %v2581, %v2577
    %v3898 = vpack.c.b16 %v2582, %v2578
    %v3899 = vpack.c.b16 %v2583, %v2579
    %v3900 = vpack.c.b16 %v2584, %v2580
    %v3901 = vpack.c.b16 %v2589, %v2585
    %v3902 = vpack.c.b16 %v2590, %v2586
    %v3903 = vpack.c.b16 %v2591, %v2587
    %v3904 = vpack.c.b16 %v2592, %v2588
    %v3905 = vpack.c.b16 %v2597, %v2593
    %v3906 = vpack.c.b16 %v2598, %v2594
    %v3907 = vpack.c.b16 %v2599, %v2595
    %v3908 = vpack.c.b16 %v2600, %v2596
    %v3909 = vpack.c.b16 %v2605, %v2601
    %v3910 = vpack.c.b16 %v2606, %v2602
    %v3911 = vpack.c.b16 %v2607, %v2603
    %v3912 = vpack.c.b16 %v2608, %v2604
    %v3913 = vpack.c.b16 %v2613, %v2609
    %v3914 = vpack.c.b16 %v2614, %v2610
    %v3915 = vpack.c.b16 %v2615, %v2611
    %v3916 = vpack.c.b16 %v2616, %v2612
    %v3917 = vpack.c.b16 %v2621, %v2617
    %v3918 = vpack.c.b16 %v2622, %v2618
    %v3919 = vpack.c.b16 %v2623, %v2619
    %v3920 = vpack.c.b16 %v2624, %v2620
    %v3921 = vpack.c.b16 %v2629, %v2625
    %v3922 = vpack.c.b16 %v2630, %v2626
    %v3923 = vpack.c.b16 %v2631, %v2627
    %v3924 = vpack.c.b16 %v2632, %v2628
    %v3925 = vpack.c.b16 %v2637, %v2633
    %v3926 = vpack.c.b16 %v2638, %v2634
    %v3927 = vpack.c.b16 %v2639, %v2635
    %v3928 = vpack.c.b16 %v2640, %v2636
    %v3929 = vpack.c.b16 %v2645, %v2641
    %v3930 = vpack.c.b16 %v2646, %v2642
    %v3931 = vpack.c.b16 %v2647, %v2643
    %v3932 = vpack.c.b16 %v2648, %v2644
    %v3933 = vpack.c.b16 %v2653, %v2649
    %v3934 = vpack.c.b16 %v2654, %v2650
    %v3935 = vpack.c.b16 %v2655, %v2651
    %v3936 = vpack.c.b16 %v2656, %v2652
    %v3937 = vpack.c.b16 %v2661, %v2657
    %v3938 = vpack.c.b16 %v2662, %v2658
    %v3939 = vpack.c.b16 %v2663, %v2659
    %v3940 = vpack.c.b16 %v2664, %v2660
    %v3941 = vpack.c.b16 %v2669, %v2665
    %v3942 = vpack.c.b16 %v2670, %v2666
    %v3943 = vpack.c.b16 %v2671, %v2667
    %v3944 = vpack.c.b16 %v2672, %v2668
    %v3945 = vpack.c.b16 %v2677, %v2673
    %v3946 = vpack.c.b16 %v2678, %v2674
    %v3947 = vpack.c.b16 %v2679, %v2675
    %v3948 = vpack.c.b16 %v2680, %v2676
    %v3949 = vpack.c.b16 %v2685, %v2681
    %v3950 = vpack.c.b16 %v2686, %v2682
    %v3951 = vpack.c.b16 %v2687, %v2683
    %v3952 = vpack.c.b16 %v2688, %v2684
    %v3953 = vpack.c.b16 %v2693, %v2689
    %v3954 = vpack.c.b16 %v2694, %v2690
    %v3955 = vpack.c.b16 %v2695, %v2691
    %v3956 = vpack.c.b16 %v2696, %v2692
    %v3957 = vpack.c.b16 %v2701, %v2697
    %v3958 = vpack.c.b16 %v2702, %v2698
    %v3959 = vpack.c.b16 %v2703, %v2699
    %v3960 = vpack.c.b16 %v2704, %v2700
    %v3961 = vpack.c.b16 %v2709, %v2705
    %v3962 = vpack.c.b16 %v2710, %v2706
    %v3963 = vpack.c.b16 %v2711, %v2707
    %v3964 = vpack.c.b16 %v2712, %v2708
    %v3965 = vpack.c.b16 %v2717, %v2713
    %v3966 = vpack.c.b16 %v2718, %v2714
    %v3967 = vpack.c.b16 %v2719, %v2715
    %v3968 = vpack.c.b16 %v2720, %v2716
    %v3969 = vpack.c.b16 %v2725, %v2721
    %v3970 = vpack.c.b16 %v2726, %v2722
    %v3971 = vpack.c.b16 %v2727, %v2723
    %v3972 = vpack.c.b16 %v2728, %v2724
    %v3973 = vpack.c.b16 %v2733, %v2729
    %v3974 = vpack.c.b16 %v2734, %v2730
    %v3975 = vpack.c.b16 %v2735, %v2731
    %v3976 = vpack.c.b16 %v2736, %v2732
    %v3977 = vpack.c.b16 %v2741, %v2737
    %v3978 = vpack.c.b16 %v2742, %v2738
    %v3979 = vpack.c.b16 %v2743, %v2739
    %v3980 = vpack.c.b16 %v2744, %v2740
    %v3981 = vpack.c.b16 %v2749, %v2745
    %v3982 = vpack.c.b16 %v2750, %v2746
    %v3983 = vpack.c.b16 %v2751, %v2747
    %v3984 = vpack.c.b16 %v2752, %v2748
    %v3985 = vpack.c.b16 %v2757, %v2753
    %v3986 = vpack.c.b16 %v2758, %v2754
    %v3987 = vpack.c.b16 %v2759, %v2755
    %v3988 = vpack.c.b16 %v2760, %v2756
    %v3989 = vpack.c.b16 %v2765, %v2761
    %v3990 = vpack.c.b16 %v2766, %v2762
    %v3991 = vpack.c.b16 %v2767, %v2763
    %v3992 = vpack.c.b16 %v2768, %v2764
    %v3993 = vpack.c.b16 %v2773, %v2769
    %v3994 = vpack.c.b16 %v2774, %v2770
    %v3995 = vpack.c.b16 %v2775, %v2771
    %v3996 = vpack.c.b16 %v2776, %v2772
    %v3997 = vpack.c.b16 %v2781, %v2777
    %v3998 = vpack.c.b16 %v2782, %v2778
    %v3999 = vpack.c.b16 %v2783, %v2779
    %v4000 = vpack.c.b16 %v2784, %v2780
    %v4001 = vpack.c.b16 %v2789, %v2785
    %v4002 = vpack.c.b16 %v2790, %v2786
    %v4003 = vpack.c.b16 %v2791, %v2787
    %v4004 = vpack.c.b16 %v2792, %v2788
    %v4005 = vpack.c.b16 %v2797, %v2793
    %v4006 = vpack.c.b16 %v2798, %v2794
    %v4007 = vpack.c.b16 %v2799, %v2795
    %v4008 = vpack.c.b16 %v2800, %v2796
    %v4009 = vpack.c.b16 %v2805, %v2801
    %v4010 = vpack.c.b16 %v2806, %v2802
    %v4011 = vpack.c.b16 %v2807, %v2803
    %v4012 = vpack.c.b16 %v2808, %v2804
    %v4013 = vpack.c.b16 %v2813, %v2809
    %v4014 = vpack.c.b16 %v2814, %v2810
    %v4015 = vpack.c.b16 %v2815, %v2811
    %v4016 = vpack.c.b16 %v2816, %v2812
    %v4017 = vpack.c.b16 %v2821, %v2817
    %v4018 = vpack.c.b16 %v2822, %v2818
    %v4019 = vpack.c.b16 %v2823, %v2819
    %v4020 = vpack.c.b16 %v2824, %v2820
    %v4021 = vpack.c.b16 %v2829, %v2825
    %v4022 = vpack.c.b16 %v2830, %v2826
    %v4023 = vpack.c.b16 %v2831, %v2827
    %v4024 = vpack.c.b16 %v2832, %v2828
    %v4025 = vpack.c.b16 %v2837, %v2833
    %v4026 = vpack.c.b16 %v2838, %v2834
    %v4027 = vpack.c.b16 %v2839, %v2835
    %v4028 = vpack.c.b16 %v2840, %v2836
    %v4029 = vpack.c.b16 %v2845, %v2841
    %v4030 = vpack.c.b16 %v2846, %v2842
    %v4031 = vpack.c.b16 %v2847, %v2843
    %v4032 = vpack.c.b16 %v2848, %v2844
    %v4033 = vpack.c.b16 %v2853, %v2849
    %v4034 = vpack.c.b16 %v2854, %v2850
    %v4035 = vpack.c.b16 %v2855, %v2851
    %v4036 = vpack.c.b16 %v2856, %v2852
    %v4037 = vpack.c.b16 %v2861, %v2857
    %v4038 = vpack.c.b16 %v2862, %v2858
    %v4039 = vpack.c.b16 %v2863, %v2859
    %v4040 = vpack.c.b16 %v2864, %v2860
    %v4041 = vpack.c.b16 %v2869, %v2865
    %v4042 = vpack.c.b16 %v2870, %v2866
    %v4043 = vpack.c.b16 %v2871, %v2867
    %v4044 = vpack.c.b16 %v2872, %v2868
    %v4045 = vpack.c.b16 %v2877, %v2873
    %v4046 = vpack.c.b16 %v2878, %v2874
    %v4047 = vpack.c.b16 %v2879, %v2875
    %v4048 = vpack.c.b16 %v2880, %v2876
    %v4049 = vpack.c.b16 %v2885, %v2881
    %v4050 = vpack.c.b16 %v2886, %v2882
    %v4051 = vpack.c.b16 %v2887, %v2883
    %v4052 = vpack.c.b16 %v2888, %v2884
    %v4053 = vpack.c.b16 %v2893, %v2889
    %v4054 = vpack.c.b16 %v2894, %v2890
    %v4055 = vpack.c.b16 %v2895, %v2891
    %v4056 = vpack.c.b16 %v2896, %v2892
    %v4057 = vpack.c.b16 %v2901, %v2897
    %v4058 = vpack.c.b16 %v2902, %v2898
    %v4059 = vpack.c.b16 %v2903, %v2899
    %v4060 = vpack.c.b16 %v2904, %v2900
    %v4061 = vpack.c.b16 %v2909, %v2905
    %v4062 = vpack.c.b16 %v2910, %v2906
    %v4063 = vpack.c.b16 %v2911, %v2907
    %v4064 = vpack.c.b16 %v2912, %v2908
    %v4065 = vpack.c.b16 %v2917, %v2913
    %v4066 = vpack.c.b16 %v2918, %v2914
    %v4067 = vpack.c.b16 %v2919, %v2915
    %v4068 = vpack.c.b16 %v2920, %v2916
    %v4069 = vpack.c.b16 %v2925, %v2921
    %v4070 = vpack.c.b16 %v2926, %v2922
    %v4071 = vpack.c.b16 %v2927, %v2923
    %v4072 = vpack.c.b16 %v2928, %v2924
    %v4073 = vpack.c.b16 %v2933, %v2929
    %v4074 = vpack.c.b16 %v2934, %v2930
    %v4075 = vpack.c.b16 %v2935, %v2931
    %v4076 = vpack.c.b16 %v2936, %v2932
    %v4077 = vpack.c.b16 %v2941, %v2937
    %v4078 = vpack.c.b16 %v2942, %v2938
    %v4079 = vpack.c.b16 %v2943, %v2939
    %v4080 = vpack.c.b16 %v2944, %v2940
    %v4081 = vpack.c.b16 %v2949, %v2945
    %v4082 = vpack.c.b16 %v2950, %v2946
    %v4083 = vpack.c.b16 %v2951, %v2947
    %v4084 = vpack.c.b16 %v2952, %v2948
    %v4085 = vpack.c.b16 %v2957, %v2953
    %v4086 = vpack.c.b16 %v2958, %v2954
    %v4087 = vpack.c.b16 %v2959, %v2955
    %v4088 = vpack.c.b16 %v2960, %v2956
    %v4089 = vpack.c.b16 %v2965, %v2961
    %v4090 = vpack.c.b16 %v2966, %v2962
    %v4091 = vpack.c.b16 %v2967, %v2963
    %v4092 = vpack.c.b16 %v2968, %v2964
    %v4093 = vpack.c.b16 %v2973, %v2969
    %v4094 = vpack.c.b16 %v2974, %v2970
    %v4095 = vpack.c.b16 %v2975, %v2971
    %v4096 = vpack.c.b16 %v2976, %v2972
    %v4097 = vpack.c.b16 %v2981, %v2977
    %v4098 = vpack.c.b16 %v2982, %v2978
    %v4099 = vpack.c.b16 %v2983, %v2979
    %v4100 = vpack.c.b16 %v2984, %v2980
    %v4101 = vpack.c.b16 %v2989, %v2985
    %v4102 = vpack.c.b16 %v2990, %v2986
    %v4103 = vpack.c.b16 %v2991, %v2987
    %v4104 = vpack.c.b16 %v2992, %v2988
    %v4105 = vpack.c.b16 %v2997, %v2993
    %v4106 = vpack.c.b16 %v2998, %v2994
    %v4107 = vpack.c.b16 %v2999, %v2995
    %v4108 = vpack.c.b16 %v3000, %v2996
    %v4109 = vpack.c.b16 %v3005, %v3001
    %v4110 = vpack.c.b16 %v3006, %v3002
    %v4111 = vpack.c.b16 %v3007, %v3003
    %v4112 = vpack.c.b16 %v3008, %v3004
    %v4113 = vpack.c.b16 %v3013, %v3009
    %v4114 = vpack.c.b16 %v3014, %v3010
    %v4115 = vpack.c.b16 %v3015, %v3011
    %v4116 = vpack.c.b16 %v3016, %v3012
    %v4117 = vpack.c.b16 %v3021, %v3017
    %v4118 = vpack.c.b16 %v3022, %v3018
    %v4119 = vpack.c.b16 %v3023, %v3019
    %v4120 = vpack.c.b16 %v3024, %v3020
    %v4121 = vpack.c.b16 %v3029, %v3025
    %v4122 = vpack.c.b16 %v3030, %v3026
    %v4123 = vpack.c.b16 %v3031, %v3027
    %v4124 = vpack.c.b16 %v3032, %v3028
    %v4125 = vpack.c.b16 %v3037, %v3033
    %v4126 = vpack.c.b16 %v3038, %v3034
    %v4127 = vpack.c.b16 %v3039, %v3035
    %v4128 = vpack.c.b16 %v3040, %v3036
    %v4129 = vpack.c.b16 %v3045, %v3041
    %v4130 = vpack.c.b16 %v3046, %v3042
    %v4131 = vpack.c.b16 %v3047, %v3043
    %v4132 = vpack.c.b16 %v3048, %v3044
    %v4133 = vpack.c.b16 %v3053, %v3049
    %v4134 = vpack.c.b16 %v3054, %v3050
    %v4135 = vpack.c.b16 %v3055, %v3051
    %v4136 = vpack.c.b16 %v3056, %v3052
    %v4137 = vpack.c.b16 %v3061, %v3057
    %v4138 = vpack.c.b16 %v3062, %v3058
    %v4139 = vpack.c.b16 %v3063, %v3059
    %v4140 = vpack.c.b16 %v3064, %v3060
    %v4141 = vpack.c.b16 %v3069, %v3065
    %v4142 = vpack.c.b16 %v3070, %v3066
    %v4143 = vpack.c.b16 %v3071, %v3067
    %v4144 = vpack.c.b16 %v3072, %v3068
    %v4145 = vpack.c.b16 %v3077, %v3073
    %v4146 = vpack.c.b16 %v3078, %v3074
    %v4147 = vpack.c.b16 %v3079, %v3075
    %v4148 = vpack.c.b16 %v3080, %v3076
    %v4149 = vpack.c.b16 %v3085, %v3081
    %v4150 = vpack.c.b16 %v3086, %v3082
    %v4151 = vpack.c.b16 %v3087, %v3083
    %v4152 = vpack.c.b16 %v3088, %v3084
    %v4153 = vpack.c.b16 %v3093, %v3089
    %v4154 = vpack.c.b16 %v3094, %v3090
    %v4155 = vpack.c.b16 %v3095, %v3091
    %v4156 = vpack.c.b16 %v3096, %v3092
    %v4157 = vpack.c.b16 %v3101, %v3097
    %v4158 = vpack.c.b16 %v3102, %v3098
    %v4159 = vpack.c.b16 %v3103, %v3099
    %v4160 = vpack.c.b16 %v3104, %v3100
    %v4161 = vpack.c.b16 %v3109, %v3105
    %v4162 = vpack.c.b16 %v3110, %v3106
    %v4163 = vpack.c.b16 %v3111, %v3107
    %v4164 = vpack.c.b16 %v3112, %v3108
    %v4165 = vpack.c.b16 %v3117, %v3113
    %v4166 = vpack.c.b16 %v3118, %v3114
    %v4167 = vpack.c.b16 %v3119, %v3115
    %v4168 = vpack.c.b16 %v3120, %v3116
    %v4169 = vpack.c.b16 %v3125, %v3121
    %v4170 = vpack.c.b16 %v3126, %v3122
    %v4171 = vpack.c.b16 %v3127, %v3123
    %v4172 = vpack.c.b16 %v3128, %v3124
    %v4173 = vpack.c.b16 %v3133, %v3129
    %v4174 = vpack.c.b16 %v3134, %v3130
    %v4175 = vpack.c.b16 %v3135, %v3131
    %v4176 = vpack.c.b16 %v3136, %v3132
    %v4177 = vpack.c.b16 %v3141, %v3137
    %v4178 = vpack.c.b16 %v3142, %v3138
    %v4179 = vpack.c.b16 %v3143, %v3139
    %v4180 = vpack.c.b16 %v3144, %v3140
    %v4181 = vpack.c.b16 %v3149, %v3145
    %v4182 = vpack.c.b16 %v3150, %v3146
    %v4183 = vpack.c.b16 %v3151, %v3147
    %v4184 = vpack.c.b16 %v3152, %v3148
    %v4185 = vpack.c.b16 %v3157, %v3153
    %v4186 = vpack.c.b16 %v3158, %v3154
    %v4187 = vpack.c.b16 %v3159, %v3155
    %v4188 = vpack.c.b16 %v3160, %v3156
    %v4189 = vpack.c.b16 %v3165, %v3161
    %v4190 = vpack.c.b16 %v3166, %v3162
    %v4191 = vpack.c.b16 %v3167, %v3163
    %v4192 = vpack.c.b16 %v3168, %v3164
    %v4193 = vpack.c.b16 %v3173, %v3169
    %v4194 = vpack.c.b16 %v3174, %v3170
    %v4195 = vpack.c.b16 %v3175, %v3171
    %v4196 = vpack.c.b16 %v3176, %v3172
    %v4197 = vpack.c.b16 %v3181, %v3177
    %v4198 = vpack.c.b16 %v3182, %v3178
    %v4199 = vpack.c.b16 %v3183, %v3179
    %v4200 = vpack.c.b16 %v3184, %v3180
    %v4201 = vpack.c.b16 %v3189, %v3185
    %v4202 = vpack.c.b16 %v3190, %v3186
    %v4203 = vpack.c.b16 %v3191, %v3187
    %v4204 = vpack.c.b16 %v3192, %v3188
    %v4205 = vpack.c.b16 %v3197, %v3193
    %v4206 = vpack.c.b16 %v3198, %v3194
    %v4207 = vpack.c.b16 %v3199, %v3195
    %v4208 = vpack.c.b16 %v3200, %v3196
    %v4209 = vpack.c.b16 %v3205, %v3201
    %v4210 = vpack.c.b16 %v3206, %v3202
    %v4211 = vpack.c.b16 %v3207, %v3203
    %v4212 = vpack.c.b16 %v3208, %v3204
    %v4213 = vpack.c.b16 %v3213, %v3209
    %v4214 = vpack.c.b16 %v3214, %v3210
    %v4215 = vpack.c.b16 %v3215, %v3211
    %v4216 = vpack.c.b16 %v3216, %v3212
    %v4217 = vpack.c.b16 %v3221, %v3217
    %v4218 = vpack.c.b16 %v3222, %v3218
    %v4219 = vpack.c.b16 %v3223, %v3219
    %v4220 = vpack.c.b16 %v3224, %v3220
    %v4221 = vpack.c.b16 %v3229, %v3225
    %v4222 = vpack.c.b16 %v3230, %v3226
    %v4223 = vpack.c.b16 %v3231, %v3227
    %v4224 = vpack.c.b16 %v3232, %v3228
    %v4225 = vpack.c.b16 %v3237, %v3233
    %v4226 = vpack.c.b16 %v3238, %v3234
    %v4227 = vpack.c.b16 %v3239, %v3235
    %v4228 = vpack.c.b16 %v3240, %v3236
    %v4229 = vpack.c.b16 %v3245, %v3241
    %v4230 = vpack.c.b16 %v3246, %v3242
    %v4231 = vpack.c.b16 %v3247, %v3243
    %v4232 = vpack.c.b16 %v3248, %v3244
    %v4233 = vpack.c.b16 %v3253, %v3249
    %v4234 = vpack.c.b16 %v3254, %v3250
    %v4235 = vpack.c.b16 %v3255, %v3251
    %v4236 = vpack.c.b16 %v3256, %v3252
    %v4237 = vpack.c.b16 %v3261, %v3257
    %v4238 = vpack.c.b16 %v3262, %v3258
    %v4239 = vpack.c.b16 %v3263, %v3259
    %v4240 = vpack.c.b16 %v3264, %v3260
    %v4241 = vpack.c.b16 %v3269, %v3265
    %v4242 = vpack.c.b16 %v3270, %v3266
    %v4243 = vpack.c.b16 %v3271, %v3267
    %v4244 = vpack.c.b16 %v3272, %v3268
    %v4245 = vpack.c.b16 %v3277, %v3273
    %v4246 = vpack.c.b16 %v3278, %v3274
    %v4247 = vpack.c.b16 %v3279, %v3275
    %v4248 = vpack.c.b16 %v3280, %v3276
    %v4249 = vpack.c.b16 %v3285, %v3281
    %v4250 = vpack.c.b16 %v3286, %v3282
    %v4251 = vpack.c.b16 %v3287, %v3283
    %v4252 = vpack.c.b16 %v3288, %v3284
    %v4253 = vpack.c.b16 %v3293, %v3289
    %v4254 = vpack.c.b16 %v3294, %v3290
    %v4255 = vpack.c.b16 %v3295, %v3291
    %v4256 = vpack.c.b16 %v3296, %v3292
    %v4257 = vpack.c.b16 %v3301, %v3297
    %v4258 = vpack.c.b16 %v3302, %v3298
    %v4259 = vpack.c.b16 %v3303, %v3299
    %v4260 = vpack.c.b16 %v3304, %v3300
    %v4261 = vpack.c.b16 %v3309, %v3305
    %v4262 = vpack.c.b16 %v3310, %v3306
    %v4263 = vpack.c.b16 %v3311, %v3307
    %v4264 = vpack.c.b16 %v3312, %v3308
    %v4265 = vpack.c.b16 %v3317, %v3313
    %v4266 = vpack.c.b16 %v3318, %v3314
    %v4267 = vpack.c.b16 %v3319, %v3315
    %v4268 = vpack.c.b16 %v3320, %v3316
    %v4269 = vpack.c.b16 %v3325, %v3321
    %v4270 = vpack.c.b16 %v3326, %v3322
    %v4271 = vpack.c.b16 %v3327, %v3323
    %v4272 = vpack.c.b16 %v3328, %v3324
    %v4273 = vpack.c.b16 %v3333, %v3329
    %v4274 = vpack.c.b16 %v3334, %v3330
    %v4275 = vpack.c.b16 %v3335, %v3331
    %v4276 = vpack.c.b16 %v3336, %v3332
    %v4277 = vpack.c.b16 %v3341, %v3337
    %v4278 = vpack.c.b16 %v3342, %v3338
    %v4279 = vpack.c.b16 %v3343, %v3339
    %v4280 = vpack.c.b16 %v3344, %v3340
    %v4281 = vpack.c.b16 %v3349, %v3345
    %v4282 = vpack.c.b16 %v3350, %v3346
    %v4283 = vpack.c.b16 %v3351, %v3347
    %v4284 = vpack.c.b16 %v3352, %v3348
    %v4285 = vpack.c.b16 %v3357, %v3353
    %v4286 = vpack.c.b16 %v3358, %v3354
    %v4287 = vpack.c.b16 %v3359, %v3355
    %v4288 = vpack.c.b16 %v3360, %v3356
    %v4289 = vpack.c.b16 %v3365, %v3361
    %v4290 = vpack.c.b16 %v3366, %v3362
    %v4291 = vpack.c.b16 %v3367, %v3363
    %v4292 = vpack.c.b16 %v3368, %v3364
    %v4293 = vpack.c.b16 %v3373, %v3369
    %v4294 = vpack.c.b16 %v3374, %v3370
    %v4295 = vpack.c.b16 %v3375, %v3371
    %v4296 = vpack.c.b16 %v3376, %v3372
    %v4297 = vpack.c.b16 %v3381, %v3377
    %v4298 = vpack.c.b16 %v3382, %v3378
    %v4299 = vpack.c.b16 %v3383, %v3379
    %v4300 = vpack.c.b16 %v3384, %v3380
    %v4301 = vpack.c.b16 %v3389, %v3385
    %v4302 = vpack.c.b16 %v3390, %v3386
    %v4303 = vpack.c.b16 %v3391, %v3387
    %v4304 = vpack.c.b16 %v3392, %v3388
    %v4305 = vpack.c.b16 %v3397, %v3393
    %v4306 = vpack.c.b16 %v3398, %v3394
    %v4307 = vpack.c.b16 %v3399, %v3395
    %v4308 = vpack.c.b16 %v3400, %v3396
    %v4309 = vpack.c.b16 %v3405, %v3401
    %v4310 = vpack.c.b16 %v3406, %v3402
    %v4311 = vpack.c.b16 %v3407, %v3403
    %v4312 = vpack.c.b16 %v3408, %v3404
    %v4313 = vpack.c.b16 %v3413, %v3409
    %v4314 = vpack.c.b16 %v3414, %v3410
    %v4315 = vpack.c.b16 %v3415, %v3411
    %v4316 = vpack.c.b16 %v3416, %v3412
    %v4317 = vpack.c.b16 %v3421, %v3417
    %v4318 = vpack.c.b16 %v3422, %v3418
    %v4319 = vpack.c.b16 %v3423, %v3419
    %v4320 = vpack.c.b16 %v3424, %v3420
    %v4321 = vpack.c.b16 %v3429, %v3425
    %v4322 = vpack.c.b16 %v3430, %v3426
    %v4323 = vpack.c.b16 %v3431, %v3427
    %v4324 = vpack.c.b16 %v3432, %v3428
    %v4325 = vpack.c.b16 %v3437, %v3433
    %v4326 = vpack.c.b16 %v3438, %v3434
    %v4327 = vpack.c.b16 %v3439, %v3435
    %v4328 = vpack.c.b16 %v3440, %v3436
    %v4329 = vpack.c.b16 %v3445, %v3441
    %v4330 = vpack.c.b16 %v3446, %v3442
    %v4331 = vpack.c.b16 %v3447, %v3443
    %v4332 = vpack.c.b16 %v3448, %v3444
    %v4333 = vpack.c.b16 %v3453, %v3449
    %v4334 = vpack.c.b16 %v3454, %v3450
    %v4335 = vpack.c.b16 %v3455, %v3451
    %v4336 = vpack.c.b16 %v3456, %v3452
    %v4337 = vpack.c.b16 %v3461, %v3457
    %v4338 = vpack.c.b16 %v3462, %v3458
    %v4339 = vpack.c.b16 %v3463, %v3459
    %v4340 = vpack.c.b16 %v3464, %v3460
    %v4341 = vpack.c.b16 %v3469, %v3465
    %v4342 = vpack.c.b16 %v3470, %v3466
    %v4343 = vpack.c.b16 %v3471, %v3467
    %v4344 = vpack.c.b16 %v3472, %v3468
    %v4345 = vpack.c.b16 %v3477, %v3473
    %v4346 = vpack.c.b16 %v3478, %v3474
    %v4347 = vpack.c.b16 %v3479, %v3475
    %v4348 = vpack.c.b16 %v3480, %v3476
    %v4349 = vpack.c.b16 %v3485, %v3481
    %v4350 = vpack.c.b16 %v3486, %v3482
    %v4351 = vpack.c.b16 %v3487, %v3483
    %v4352 = vpack.c.b16 %v3488, %v3484
    %v4353 = vpack.c.b16 %v3493, %v3489
    %v4354 = vpack.c.b16 %v3494, %v3490
    %v4355 = vpack.c.b16 %v3495, %v3491
    %v4356 = vpack.c.b16 %v3496, %v3492
    %v4357 = vpack.c.b16 %v3501, %v3497
    %v4358 = vpack.c.b16 %v3502, %v3498
    %v4359 = vpack.c.b16 %v3503, %v3499
    %v4360 = vpack.c.b16 %v3504, %v3500
    %v4361 = vpack.c.b16 %v3509, %v3505
    %v4362 = vpack.c.b16 %v3510, %v3506
    %v4363 = vpack.c.b16 %v3511, %v3507
    %v4364 = vpack.c.b16 %v3512, %v3508
    %v4365 = vpack.c.b16 %v3517, %v3513
    %v4366 = vpack.c.b16 %v3518, %v3514
    %v4367 = vpack.c.b16 %v3519, %v3515
    %v4368 = vpack.c.b16 %v3520, %v3516
    %v4369 = vpack.c.b16 %v3525, %v3521
    %v4370 = vpack.c.b16 %v3526, %v3522
    %v4371 = vpack.c.b16 %v3527, %v3523
    %v4372 = vpack.c.b16 %v3528, %v3524
    %v4373 = vpack.c.b16 %v3533, %v3529
    %v4374 = vpack.c.b16 %v3534, %v3530
    %v4375 = vpack.c.b16 %v3535, %v3531
    %v4376 = vpack.c.b16 %v3536, %v3532
    %v4377 = vpack.c.b16 %v3541, %v3537
    %v4378 = vpack.c.b16 %v3542, %v3538
    %v4379 = vpack.c.b16 %v3543, %v3539
    %v4380 = vpack.c.b16 %v3544, %v3540
    %v4381 = vpack.c.b16 %v3549, %v3545
    %v4382 = vpack.c.b16 %v3550, %v3546
    %v4383 = vpack.c.b16 %v3551, %v3547
    %v4384 = vpack.c.b16 %v3552, %v3548
    %v4385 = vpack.c.b16 %v3557, %v3553
    %v4386 = vpack.c.b16 %v3558, %v3554
    %v4387 = vpack.c.b16 %v3559, %v3555
    %v4388 = vpack.c.b16 %v3560, %v3556
    %v4389 = vpack.c.b16 %v3565, %v3561
    %v4390 = vpack.c.b16 %v3566, %v3562
    %v4391 = vpack.c.b16 %v3567, %v3563
    %v4392 = vpack.c.b16 %v3568, %v3564
    %v4393 = vpack.c.b16 %v3573, %v3569
    %v4394 = vpack.c.b16 %v3574, %v3570
    %v4395 = vpack.c.b16 %v3575, %v3571
    %v4396 = vpack.c.b16 %v3576, %v3572
    %v4397 = vpack.c.b16 %v3581, %v3577
    %v4398 = vpack.c.b16 %v3582, %v3578
    %v4399 = vpack.c.b16 %v3583, %v3579
    %v4400 = vpack.c.b16 %v3584, %v3580
    %v4401 = vpack.c.b16 %v3589, %v3585
    %v4402 = vpack.c.b16 %v3590, %v3586
    %v4403 = vpack.c.b16 %v3591, %v3587
    %v4404 = vpack.c.b16 %v3592, %v3588
    %v4405 = vpack.c.b16 %v3597, %v3593
    %v4406 = vpack.c.b16 %v3598, %v3594
    %v4407 = vpack.c.b16 %v3599, %v3595
    %v4408 = vpack.c.b16 %v3600, %v3596
    %v4409 = vpack.c.b16 %v3605, %v3601
    %v4410 = vpack.c.b16 %v3606, %v3602
    %v4411 = vpack.c.b16 %v3607, %v3603
    %v4412 = vpack.c.b16 %v3608, %v3604
    %v4413 = vpack.c.b16 %v3613, %v3609
    %v4414 = vpack.c.b16 %v3614, %v3610
    %v4415 = vpack.c.b16 %v3615, %v3611
    %v4416 = vpack.c.b16 %v3616, %v3612
    %v4417 = vpack.c.b16 %v3621, %v3617
    %v4418 = vpack.c.b16 %v3622, %v3618
    %v4419 = vpack.c.b16 %v3623, %v3619
    %v4420 = vpack.c.b16 %v3624, %v3620
    %v4421 = vpack.c.b16 %v3629, %v3625
    %v4422 = vpack.c.b16 %v3630, %v3626
    %v4423 = vpack.c.b16 %v3631, %v3627
    %v4424 = vpack.c.b16 %v3632, %v3628
    %v4425 = vpack.c.b16 %v3637, %v3633
    %v4426 = vpack.c.b16 %v3638, %v3634
    %v4427 = vpack.c.b16 %v3639, %v3635
    %v4428 = vpack.c.b16 %v3640, %v3636
    %v4429 = vpack.c.b16 %v3645, %v3641
    %v4430 = vpack.c.b16 %v3646, %v3642
    %v4431 = vpack.c.b16 %v3647, %v3643
    %v4432 = vpack.c.b16 %v3648, %v3644
    %v4433 = vpack.c.b16 %v3653, %v3649
    %v4434 = vpack.c.b16 %v3654, %v3650
    %v4435 = vpack.c.b16 %v3655, %v3651
    %v4436 = vpack.c.b16 %v3656, %v3652
    %v4437 = vpack.c.b16 %v3661, %v3657
    %v4438 = vpack.c.b16 %v3662, %v3658
    %v4439 = vpack.c.b16 %v3663, %v3659
    %v4440 = vpack.c.b16 %v3664, %v3660
    %v4441 = vpack.c.b16 %v3669, %v3665
    %v4442 = vpack.c.b16 %v3670, %v3666
    %v4443 = vpack.c.b16 %v3671, %v3667
    %v4444 = vpack.c.b16 %v3672, %v3668
    %v4445 = vpack.c.b16 %v3677, %v3673
    %v4446 = vpack.c.b16 %v3678, %v3674
    %v4447 = vpack.c.b16 %v3679, %v3675
    %v4448 = vpack.c.b16 %v3680, %v3676
    %5217 = vmatprep.subr.bf16.mxu0 %v3682
    %5218 = vmatpush1.bf16.msra.mxu0 %v3681
    %5219 = vmatprep.subr.bf16.mxu0 %v3686
    %5220 = vmatpush1.bf16.msra.mxu0 %v3685
    %5221 = vmatprep.subr.bf16.mxu0 %v3690
    %5222 = vmatpush1.bf16.msra.mxu0 %v3689
    %5223 = vmatprep.subr.bf16.mxu0 %v3694
    %5224 = vmatpush1.bf16.msra.mxu0 %v3693
    %5225 = vmatprep.subr.bf16.mxu0 %v3698
    %5226 = vmatpush1.bf16.msra.mxu0 %v3697
    %5227 = vmatprep.subr.bf16.mxu0 %v3702
    %5228 = vmatpush1.bf16.msra.mxu0 %v3701
    %5229 = vmatprep.subr.bf16.mxu0 %v3706
    %5230 = vmatpush1.bf16.msra.mxu0 %v3705
    %5231 = vmatprep.subr.bf16.mxu0 %v3710
    %5232 = vmatpush1.bf16.msra.mxu0 %v3709
    %5233 = vmatprep.subr.bf16.mxu0 %v3714
    %5234 = vmatpush1.bf16.msra.mxu0 %v3713
    %5235 = vmatprep.subr.bf16.mxu0 %v3718
    %5236 = vmatpush1.bf16.msra.mxu0 %v3717
    %5237 = vmatprep.subr.bf16.mxu0 %v3722
    %5238 = vmatpush1.bf16.msra.mxu0 %v3721
    %5239 = vmatprep.subr.bf16.mxu0 %v3726
    %5240 = vmatpush1.bf16.msra.mxu0 %v3725
    %5241 = vmatprep.subr.bf16.mxu0 %v3730
    %5242 = vmatpush1.bf16.msra.mxu0 %v3729
    %5243 = vmatprep.subr.bf16.mxu0 %v3734
    %5244 = vmatpush1.bf16.msra.mxu0 %v3733
    %5245 = vmatprep.subr.bf16.mxu0 %v3738
    %5246 = vmatpush1.bf16.msra.mxu0 %v3737
    %5247 = vmatprep.subr.bf16.mxu0 %v3742
    %5248 = vmatpush1.bf16.msra.mxu0 %v3741
    %5249 = vmatprep.mubr.bf16.mxu0 %v1330
    %5250 = vmatmul.mubr.bf16.gmra.mrb[0].mxu0 %v1329
    %v5251 = vpop.f32.mrb[0].mxu0
    %v5252 = vadd.f32 %v1276, %v5251
    %v5253 = vpop.f32.mrb[0].mxu0
    %v5254 = vadd.f32 %v1280, %v5253
    %v5255 = vpop.f32.mrb[0].mxu0
    %v5256 = vpop.f32.mrb[0].mxu0
    %5257 = vdwg.mxu0
    %5258 = vmatprep.subr.bf16.mxu0 %v3746
    %5259 = vmatpush1.bf16.msra.mxu0 %v3745
    %5260 = vmatprep.subr.bf16.mxu0 %v3750
    %5261 = vmatpush1.bf16.msra.mxu0 %v3749
    %5262 = vmatprep.subr.bf16.mxu0 %v3754
    %5263 = vmatpush1.bf16.msra.mxu0 %v3753
    %5264 = vmatprep.subr.bf16.mxu0 %v3758
    %5265 = vmatpush1.bf16.msra.mxu0 %v3757
    %5266 = vmatprep.subr.bf16.mxu0 %v3762
    %5267 = vmatpush1.bf16.msra.mxu0 %v3761
    %5268 = vmatprep.subr.bf16.mxu0 %v3766
    %5269 = vmatpush1.bf16.msra.mxu0 %v3765
    %5270 = vmatprep.subr.bf16.mxu0 %v3770
    %5271 = vmatpush1.bf16.msra.mxu0 %v3769
    %5272 = vmatprep.subr.bf16.mxu0 %v3774
    %5273 = vmatpush1.bf16.msra.mxu0 %v3773
    %5274 = vmatprep.subr.bf16.mxu0 %v3778
    %5275 = vmatpush1.bf16.msra.mxu0 %v3777
    %5276 = vmatprep.subr.bf16.mxu0 %v3782
    %5277 = vmatpush1.bf16.msra.mxu0 %v3781
    %5278 = vmatprep.subr.bf16.mxu0 %v3786
    %5279 = vmatpush1.bf16.msra.mxu0 %v3785
    %5280 = vmatprep.subr.bf16.mxu0 %v3790
    %5281 = vmatpush1.bf16.msra.mxu0 %v3789
    %5282 = vmatprep.subr.bf16.mxu0 %v3794
    %5283 = vmatpush1.bf16.msra.mxu0 %v3793
    %5284 = vmatprep.subr.bf16.mxu0 %v3798
    %5285 = vmatpush1.bf16.msra.mxu0 %v3797
    %5286 = vmatprep.subr.bf16.mxu0 %v3802
    %5287 = vmatpush1.bf16.msra.mxu0 %v3801
    %5288 = vmatprep.subr.bf16.mxu0 %v3806
    %5289 = vmatpush1.bf16.msra.mxu0 %v3805
    %5290 = vmatprep.mubr.bf16.mxu0 %v1332
    %5291 = vmatmul.mubr.bf16.gmra.mrb[0].mxu0 %v1331
    %v5292 = vpop.f32.mrb[0].mxu0
    %v5293 = vadd.f32 %v5252, %v5292
    %v5294 = vpop.f32.mrb[0].mxu0
    %v5295 = vadd.f32 %v5254, %v5294
    %v5296 = vpop.f32.mrb[0].mxu0
    %v5297 = vpop.f32.mrb[0].mxu0
    %5298 = vdwg.mxu0
    %5299 = vmatprep.subr.bf16.mxu0 %v3810
    %5300 = vmatpush1.bf16.msra.mxu0 %v3809
    %5301 = vmatprep.subr.bf16.mxu0 %v3814
    %5302 = vmatpush1.bf16.msra.mxu0 %v3813
    %5303 = vmatprep.subr.bf16.mxu0 %v3818
    %5304 = vmatpush1.bf16.msra.mxu0 %v3817
    %5305 = vmatprep.subr.bf16.mxu0 %v3822
    %5306 = vmatpush1.bf16.msra.mxu0 %v3821
    %5307 = vmatprep.subr.bf16.mxu0 %v3826
    %5308 = vmatpush1.bf16.msra.mxu0 %v3825
    %5309 = vmatprep.subr.bf16.mxu0 %v3830
    %5310 = vmatpush1.bf16.msra.mxu0 %v3829
    %5311 = vmatprep.subr.bf16.mxu0 %v3834
    %5312 = vmatpush1.bf16.msra.mxu0 %v3833
    %5313 = vmatprep.subr.bf16.mxu0 %v3838
    %5314 = vmatpush1.bf16.msra.mxu0 %v3837
    %5315 = vmatprep.subr.bf16.mxu0 %v3842
    %5316 = vmatpush1.bf16.msra.mxu0 %v3841
    %5317 = vmatprep.subr.bf16.mxu0 %v3846
    %5318 = vmatpush1.bf16.msra.mxu0 %v3845
    %5319 = vmatprep.subr.bf16.mxu0 %v3850
    %5320 = vmatpush1.bf16.msra.mxu0 %v3849
    %5321 = vmatprep.subr.bf16.mxu0 %v3854
    %5322 = vmatpush1.bf16.msra.mxu0 %v3853
    %5323 = vmatprep.subr.bf16.mxu0 %v3858
    %5324 = vmatpush1.bf16.msra.mxu0 %v3857
    %5325 = vmatprep.subr.bf16.mxu0 %v3862
    %5326 = vmatpush1.bf16.msra.mxu0 %v3861
    %5327 = vmatprep.subr.bf16.mxu0 %v3866
    %5328 = vmatpush1.bf16.msra.mxu0 %v3865
    %5329 = vmatprep.subr.bf16.mxu0 %v3870
    %5330 = vmatpush1.bf16.msra.mxu0 %v3869
    %5331 = vmatprep.mubr.bf16.mxu0 %v1334
    %5332 = vmatmul.mubr.bf16.gmra.mrb[0].mxu0 %v1333
    %v5333 = vpop.f32.mrb[0].mxu0
    %v5334 = vadd.f32 %v5293, %v5333
    %v5335 = vpop.f32.mrb[0].mxu0
    %v5336 = vadd.f32 %v5295, %v5335
    %v5337 = vpop.f32.mrb[0].mxu0
    %v5338 = vpop.f32.mrb[0].mxu0
    %5339 = vdwg.mxu0
    %5340 = vmatprep.subr.bf16.mxu0 %v3874
    %5341 = vmatpush1.bf16.msra.mxu0 %v3873
    %5342 = vmatprep.subr.bf16.mxu0 %v3878
    %5343 = vmatpush1.bf16.msra.mxu0 %v3877
    %5344 = vmatprep.subr.bf16.mxu0 %v3882
    %5345 = vmatpush1.bf16.msra.mxu0 %v3881
    %5346 = vmatprep.subr.bf16.mxu0 %v3886
    %5347 = vmatpush1.bf16.msra.mxu0 %v3885
    %5348 = vmatprep.subr.bf16.mxu0 %v3890
    %5349 = vmatpush1.bf16.msra.mxu0 %v3889
    %5350 = vmatprep.subr.bf16.mxu0 %v3894
    %5351 = vmatpush1.bf16.msra.mxu0 %v3893
    %5352 = vmatprep.subr.bf16.mxu0 %v3898
    %5353 = vmatpush1.bf16.msra.mxu0 %v3897
    %5354 = vmatprep.subr.bf16.mxu0 %v3902
    %5355 = vmatpush1.bf16.msra.mxu0 %v3901
    %5356 = vmatprep.subr.bf16.mxu0 %v3906
    %5357 = vmatpush1.bf16.msra.mxu0 %v3905
    %5358 = vmatprep.subr.bf16.mxu0 %v3910
    %5359 = vmatpush1.bf16.msra.mxu0 %v3909
    %5360 = vmatprep.subr.bf16.mxu0 %v3914
    %5361 = vmatpush1.bf16.msra.mxu0 %v3913
    %5362 = vmatprep.subr.bf16.mxu0 %v3918
    %5363 = vmatpush1.bf16.msra.mxu0 %v3917
    %5364 = vmatprep.subr.bf16.mxu0 %v3922
    %5365 = vmatpush1.bf16.msra.mxu0 %v3921
    %5366 = vmatprep.subr.bf16.mxu0 %v3926
    %5367 = vmatpush1.bf16.msra.mxu0 %v3925
    %5368 = vmatprep.subr.bf16.mxu0 %v3930
    %5369 = vmatpush1.bf16.msra.mxu0 %v3929
    %5370 = vmatprep.subr.bf16.mxu0 %v3934
    %5371 = vmatpush1.bf16.msra.mxu0 %v3933
    %5372 = vmatprep.mubr.bf16.mxu0 %v1336
    %5373 = vmatmul.mubr.bf16.gmra.mrb[0].mxu0 %v1335
    %v5374 = vpop.f32.mrb[0].mxu0
    %v5375 = vadd.f32 %v5334, %v5374
    %v5376 = vpop.f32.mrb[0].mxu0
    %v5377 = vadd.f32 %v5336, %v5376
    %v5378 = vpop.f32.mrb[0].mxu0
    %v5379 = vpop.f32.mrb[0].mxu0
    %5380 = vdwg.mxu0
    %5381 = vmatprep.subr.bf16.mxu0 %v3938
    %5382 = vmatpush1.bf16.msra.mxu0 %v3937
    %5383 = vmatprep.subr.bf16.mxu0 %v3942
    %5384 = vmatpush1.bf16.msra.mxu0 %v3941
    %5385 = vmatprep.subr.bf16.mxu0 %v3946
    %5386 = vmatpush1.bf16.msra.mxu0 %v3945
    %5387 = vmatprep.subr.bf16.mxu0 %v3950
    %5388 = vmatpush1.bf16.msra.mxu0 %v3949
    %5389 = vmatprep.subr.bf16.mxu0 %v3954
    %5390 = vmatpush1.bf16.msra.mxu0 %v3953
    %5391 = vmatprep.subr.bf16.mxu0 %v3958
    %5392 = vmatpush1.bf16.msra.mxu0 %v3957
    %5393 = vmatprep.subr.bf16.mxu0 %v3962
    %5394 = vmatpush1.bf16.msra.mxu0 %v3961
    %5395 = vmatprep.subr.bf16.mxu0 %v3966
    %5396 = vmatpush1.bf16.msra.mxu0 %v3965
    %5397 = vmatprep.subr.bf16.mxu0 %v3970
    %5398 = vmatpush1.bf16.msra.mxu0 %v3969
    %5399 = vmatprep.subr.bf16.mxu0 %v3974
    %5400 = vmatpush1.bf16.msra.mxu0 %v3973
    %5401 = vmatprep.subr.bf16.mxu0 %v3978
    %5402 = vmatpush1.bf16.msra.mxu0 %v3977
    %5403 = vmatprep.subr.bf16.mxu0 %v3982
    %5404 = vmatpush1.bf16.msra.mxu0 %v3981
    %5405 = vmatprep.subr.bf16.mxu0 %v3986
    %5406 = vmatpush1.bf16.msra.mxu0 %v3985
    %5407 = vmatprep.subr.bf16.mxu0 %v3990
    %5408 = vmatpush1.bf16.msra.mxu0 %v3989
    %5409 = vmatprep.subr.bf16.mxu0 %v3994
    %5410 = vmatpush1.bf16.msra.mxu0 %v3993
    %5411 = vmatprep.subr.bf16.mxu0 %v3998
    %5412 = vmatpush1.bf16.msra.mxu0 %v3997
    %5413 = vmatprep.mubr.bf16.mxu0 %v1338
    %5414 = vmatmul.mubr.bf16.gmra.mrb[0].mxu0 %v1337
    %v5415 = vpop.f32.mrb[0].mxu0
    %v5416 = vadd.f32 %v5375, %v5415
    %v5417 = vpop.f32.mrb[0].mxu0
    %v5418 = vadd.f32 %v5377, %v5417
    %v5419 = vpop.f32.mrb[0].mxu0
    %v5420 = vpop.f32.mrb[0].mxu0
    %5421 = vdwg.mxu0
    %5422 = vmatprep.subr.bf16.mxu0 %v4002
    %5423 = vmatpush1.bf16.msra.mxu0 %v4001
    %5424 = vmatprep.subr.bf16.mxu0 %v4006
    %5425 = vmatpush1.bf16.msra.mxu0 %v4005
    %5426 = vmatprep.subr.bf16.mxu0 %v4010
    %5427 = vmatpush1.bf16.msra.mxu0 %v4009
    %5428 = vmatprep.subr.bf16.mxu0 %v4014
    %5429 = vmatpush1.bf16.msra.mxu0 %v4013
    %5430 = vmatprep.subr.bf16.mxu0 %v4018
    %5431 = vmatpush1.bf16.msra.mxu0 %v4017
    %5432 = vmatprep.subr.bf16.mxu0 %v4022
    %5433 = vmatpush1.bf16.msra.mxu0 %v4021
    %5434 = vmatprep.subr.bf16.mxu0 %v4026
    %5435 = vmatpush1.bf16.msra.mxu0 %v4025
    %5436 = vmatprep.subr.bf16.mxu0 %v4030
    %5437 = vmatpush1.bf16.msra.mxu0 %v4029
    %5438 = vmatprep.subr.bf16.mxu0 %v4034
    %5439 = vmatpush1.bf16.msra.mxu0 %v4033
    %5440 = vmatprep.subr.bf16.mxu0 %v4038
    %5441 = vmatpush1.bf16.msra.mxu0 %v4037
    %5442 = vmatprep.subr.bf16.mxu0 %v4042
    %5443 = vmatpush1.bf16.msra.mxu0 %v4041
    %5444 = vmatprep.subr.bf16.mxu0 %v4046
    %5445 = vmatpush1.bf16.msra.mxu0 %v4045
    %5446 = vmatprep.subr.bf16.mxu0 %v4050
    %5447 = vmatpush1.bf16.msra.mxu0 %v4049
    %5448 = vmatprep.subr.bf16.mxu0 %v4054
    %5449 = vmatpush1.bf16.msra.mxu0 %v4053
    %5450 = vmatprep.subr.bf16.mxu0 %v4058
    %5451 = vmatpush1.bf16.msra.mxu0 %v4057
    %5452 = vmatprep.subr.bf16.mxu0 %v4062
    %5453 = vmatpush1.bf16.msra.mxu0 %v4061
    %5454 = vmatprep.mubr.bf16.mxu0 %v1340
    %5455 = vmatmul.mubr.bf16.gmra.mrb[0].mxu0 %v1339
    %v5456 = vpop.f32.mrb[0].mxu0
    %v5457 = vadd.f32 %v5416, %v5456
    %v5458 = vpop.f32.mrb[0].mxu0
    %v5459 = vadd.f32 %v5418, %v5458
    %v5460 = vpop.f32.mrb[0].mxu0
    %v5461 = vpop.f32.mrb[0].mxu0
    %5462 = vdwg.mxu0
    %5463 = vmatprep.subr.bf16.mxu0 %v4066
    %5464 = vmatpush1.bf16.msra.mxu0 %v4065
    %5465 = vmatprep.subr.bf16.mxu0 %v4070
    %5466 = vmatpush1.bf16.msra.mxu0 %v4069
    %5467 = vmatprep.subr.bf16.mxu0 %v4074
    %5468 = vmatpush1.bf16.msra.mxu0 %v4073
    %5469 = vmatprep.subr.bf16.mxu0 %v4078
    %5470 = vmatpush1.bf16.msra.mxu0 %v4077
    %5471 = vmatprep.subr.bf16.mxu0 %v4082
    %5472 = vmatpush1.bf16.msra.mxu0 %v4081
    %5473 = vmatprep.subr.bf16.mxu0 %v4086
    %5474 = vmatpush1.bf16.msra.mxu0 %v4085
    %5475 = vmatprep.subr.bf16.mxu0 %v4090
    %5476 = vmatpush1.bf16.msra.mxu0 %v4089
    %5477 = vmatprep.subr.bf16.mxu0 %v4094
    %5478 = vmatpush1.bf16.msra.mxu0 %v4093
    %5479 = vmatprep.subr.bf16.mxu0 %v4098
    %5480 = vmatpush1.bf16.msra.mxu0 %v4097
    %5481 = vmatprep.subr.bf16.mxu0 %v4102
    %5482 = vmatpush1.bf16.msra.mxu0 %v4101
    %5483 = vmatprep.subr.bf16.mxu0 %v4106
    %5484 = vmatpush1.bf16.msra.mxu0 %v4105
    %5485 = vmatprep.subr.bf16.mxu0 %v4110
    %5486 = vmatpush1.bf16.msra.mxu0 %v4109
    %5487 = vmatprep.subr.bf16.mxu0 %v4114
    %5488 = vmatpush1.bf16.msra.mxu0 %v4113
    %5489 = vmatprep.subr.bf16.mxu0 %v4118
    %5490 = vmatpush1.bf16.msra.mxu0 %v4117
    %5491 = vmatprep.subr.bf16.mxu0 %v4122
    %5492 = vmatpush1.bf16.msra.mxu0 %v4121
    %5493 = vmatprep.subr.bf16.mxu0 %v4126
    %5494 = vmatpush1.bf16.msra.mxu0 %v4125
    %5495 = vmatprep.mubr.bf16.mxu0 %v1342
    %5496 = vmatmul.mubr.bf16.gmra.mrb[0].mxu0 %v1341
    %v5497 = vpop.f32.mrb[0].mxu0
    %v5498 = vadd.f32 %v5457, %v5497
    %v5499 = vpop.f32.mrb[0].mxu0
    %v5500 = vadd.f32 %v5459, %v5499
    %v5501 = vpop.f32.mrb[0].mxu0
    %v5502 = vpop.f32.mrb[0].mxu0
    %5503 = vdwg.mxu0
    %5504 = vmatprep.subr.bf16.mxu0 %v4130
    %5505 = vmatpush1.bf16.msra.mxu0 %v4129
    %5506 = vmatprep.subr.bf16.mxu0 %v4134
    %5507 = vmatpush1.bf16.msra.mxu0 %v4133
    %5508 = vmatprep.subr.bf16.mxu0 %v4138
    %5509 = vmatpush1.bf16.msra.mxu0 %v4137
    %5510 = vmatprep.subr.bf16.mxu0 %v4142
    %5511 = vmatpush1.bf16.msra.mxu0 %v4141
    %5512 = vmatprep.subr.bf16.mxu0 %v4146
    %5513 = vmatpush1.bf16.msra.mxu0 %v4145
    %5514 = vmatprep.subr.bf16.mxu0 %v4150
    %5515 = vmatpush1.bf16.msra.mxu0 %v4149
    %5516 = vmatprep.subr.bf16.mxu0 %v4154
    %5517 = vmatpush1.bf16.msra.mxu0 %v4153
    %5518 = vmatprep.subr.bf16.mxu0 %v4158
    %5519 = vmatpush1.bf16.msra.mxu0 %v4157
    %5520 = vmatprep.subr.bf16.mxu0 %v4162
    %5521 = vmatpush1.bf16.msra.mxu0 %v4161
    %5522 = vmatprep.subr.bf16.mxu0 %v4166
    %5523 = vmatpush1.bf16.msra.mxu0 %v4165
    %5524 = vmatprep.subr.bf16.mxu0 %v4170
    %5525 = vmatpush1.bf16.msra.mxu0 %v4169
    %5526 = vmatprep.subr.bf16.mxu0 %v4174
    %5527 = vmatpush1.bf16.msra.mxu0 %v4173
    %5528 = vmatprep.subr.bf16.mxu0 %v4178
    %5529 = vmatpush1.bf16.msra.mxu0 %v4177
    %5530 = vmatprep.subr.bf16.mxu0 %v4182
    %5531 = vmatpush1.bf16.msra.mxu0 %v4181
    %5532 = vmatprep.subr.bf16.mxu0 %v4186
    %5533 = vmatpush1.bf16.msra.mxu0 %v4185
    %5534 = vmatprep.subr.bf16.mxu0 %v4190
    %5535 = vmatpush1.bf16.msra.mxu0 %v4189
    %5536 = vmatprep.mubr.bf16.mxu0 %v1344
    %5537 = vmatmul.mubr.bf16.gmra.mrb[0].mxu0 %v1343
    %v5538 = vpop.f32.mrb[0].mxu0
    %v5539 = vadd.f32 %v5498, %v5538
    %v5540 = vpop.f32.mrb[0].mxu0
    %v5541 = vadd.f32 %v5500, %v5540
    %v5542 = vpop.f32.mrb[0].mxu0
    %v5543 = vpop.f32.mrb[0].mxu0
    %5544 = vdwg.mxu0
    %5545 = vmatprep.subr.bf16.mxu0 %v4194
    %5546 = vmatpush1.bf16.msra.mxu0 %v4193
    %5547 = vmatprep.subr.bf16.mxu0 %v4198
    %5548 = vmatpush1.bf16.msra.mxu0 %v4197
    %5549 = vmatprep.subr.bf16.mxu0 %v4202
    %5550 = vmatpush1.bf16.msra.mxu0 %v4201
    %5551 = vmatprep.subr.bf16.mxu0 %v4206
    %5552 = vmatpush1.bf16.msra.mxu0 %v4205
    %5553 = vmatprep.subr.bf16.mxu0 %v4210
    %5554 = vmatpush1.bf16.msra.mxu0 %v4209
    %5555 = vmatprep.subr.bf16.mxu0 %v4214
    %5556 = vmatpush1.bf16.msra.mxu0 %v4213
    %5557 = vmatprep.subr.bf16.mxu0 %v4218
    %5558 = vmatpush1.bf16.msra.mxu0 %v4217
    %5559 = vmatprep.subr.bf16.mxu0 %v4222
    %5560 = vmatpush1.bf16.msra.mxu0 %v4221
    %5561 = vmatprep.subr.bf16.mxu0 %v4226
    %5562 = vmatpush1.bf16.msra.mxu0 %v4225
    %5563 = vmatprep.subr.bf16.mxu0 %v4230
    %5564 = vmatpush1.bf16.msra.mxu0 %v4229
    %5565 = vmatprep.subr.bf16.mxu0 %v4234
    %5566 = vmatpush1.bf16.msra.mxu0 %v4233
    %5567 = vmatprep.subr.bf16.mxu0 %v4238
    %5568 = vmatpush1.bf16.msra.mxu0 %v4237
    %5569 = vmatprep.subr.bf16.mxu0 %v4242
    %5570 = vmatpush1.bf16.msra.mxu0 %v4241
    %5571 = vmatprep.subr.bf16.mxu0 %v4246
    %5572 = vmatpush1.bf16.msra.mxu0 %v4245
    %5573 = vmatprep.subr.bf16.mxu0 %v4250
    %5574 = vmatpush1.bf16.msra.mxu0 %v4249
    %5575 = vmatprep.subr.bf16.mxu0 %v4254
    %5576 = vmatpush1.bf16.msra.mxu0 %v4253
    %5577 = vmatprep.mubr.bf16.mxu0 %v1346
    %5578 = vmatmul.mubr.bf16.gmra.mrb[0].mxu0 %v1345
    %v5579 = vpop.f32.mrb[0].mxu0
    %v5580 = vadd.f32 %v5539, %v5579
    %v5581 = vpop.f32.mrb[0].mxu0
    %v5582 = vadd.f32 %v5541, %v5581
    %v5583 = vpop.f32.mrb[0].mxu0
    %v5584 = vpop.f32.mrb[0].mxu0
    %5585 = vdwg.mxu0
    %5586 = vmatprep.subr.bf16.mxu0 %v4258
    %5587 = vmatpush1.bf16.msra.mxu0 %v4257
    %5588 = vmatprep.subr.bf16.mxu0 %v4262
    %5589 = vmatpush1.bf16.msra.mxu0 %v4261
    %5590 = vmatprep.subr.bf16.mxu0 %v4266
    %5591 = vmatpush1.bf16.msra.mxu0 %v4265
    %5592 = vmatprep.subr.bf16.mxu0 %v4270
    %5593 = vmatpush1.bf16.msra.mxu0 %v4269
    %5594 = vmatprep.subr.bf16.mxu0 %v4274
    %5595 = vmatpush1.bf16.msra.mxu0 %v4273
    %5596 = vmatprep.subr.bf16.mxu0 %v4278
    %5597 = vmatpush1.bf16.msra.mxu0 %v4277
    %5598 = vmatprep.subr.bf16.mxu0 %v4282
    %5599 = vmatpush1.bf16.msra.mxu0 %v4281
    %5600 = vmatprep.subr.bf16.mxu0 %v4286
    %5601 = vmatpush1.bf16.msra.mxu0 %v4285
    %5602 = vmatprep.subr.bf16.mxu0 %v4290
    %5603 = vmatpush1.bf16.msra.mxu0 %v4289
    %5604 = vmatprep.subr.bf16.mxu0 %v4294
    %5605 = vmatpush1.bf16.msra.mxu0 %v4293
    %5606 = vmatprep.subr.bf16.mxu0 %v4298
    %5607 = vmatpush1.bf16.msra.mxu0 %v4297
    %5608 = vmatprep.subr.bf16.mxu0 %v4302
    %5609 = vmatpush1.bf16.msra.mxu0 %v4301
    %5610 = vmatprep.subr.bf16.mxu0 %v4306
    %5611 = vmatpush1.bf16.msra.mxu0 %v4305
    %5612 = vmatprep.subr.bf16.mxu0 %v4310
    %5613 = vmatpush1.bf16.msra.mxu0 %v4309
    %5614 = vmatprep.subr.bf16.mxu0 %v4314
    %5615 = vmatpush1.bf16.msra.mxu0 %v4313
    %5616 = vmatprep.subr.bf16.mxu0 %v4318
    %5617 = vmatpush1.bf16.msra.mxu0 %v4317
    %5618 = vmatprep.mubr.bf16.mxu0 %v1348
    %5619 = vmatmul.mubr.bf16.gmra.mrb[0].mxu0 %v1347
    %v5620 = vpop.f32.mrb[0].mxu0
    %v5621 = vadd.f32 %v5580, %v5620
    %v5622 = vpop.f32.mrb[0].mxu0
    %v5623 = vadd.f32 %v5582, %v5622
    %v5624 = vpop.f32.mrb[0].mxu0
    %v5625 = vpop.f32.mrb[0].mxu0
    %5626 = vdwg.mxu0
    %5627 = vmatprep.subr.bf16.mxu0 %v4322
    %5628 = vmatpush1.bf16.msra.mxu0 %v4321
    %5629 = vmatprep.subr.bf16.mxu0 %v4326
    %5630 = vmatpush1.bf16.msra.mxu0 %v4325
    %5631 = vmatprep.subr.bf16.mxu0 %v4330
    %5632 = vmatpush1.bf16.msra.mxu0 %v4329
    %5633 = vmatprep.subr.bf16.mxu0 %v4334
    %5634 = vmatpush1.bf16.msra.mxu0 %v4333
    %5635 = vmatprep.subr.bf16.mxu0 %v4338
    %5636 = vmatpush1.bf16.msra.mxu0 %v4337
    %5637 = vmatprep.subr.bf16.mxu0 %v4342
    %5638 = vmatpush1.bf16.msra.mxu0 %v4341
    %5639 = vmatprep.subr.bf16.mxu0 %v4346
    %5640 = vmatpush1.bf16.msra.mxu0 %v4345
    %5641 = vmatprep.subr.bf16.mxu0 %v4350
    %5642 = vmatpush1.bf16.msra.mxu0 %v4349
    %5643 = vmatprep.subr.bf16.mxu0 %v4354
    %5644 = vmatpush1.bf16.msra.mxu0 %v4353
    %5645 = vmatprep.subr.bf16.mxu0 %v4358
    %5646 = vmatpush1.bf16.msra.mxu0 %v4357
    %5647 = vmatprep.subr.bf16.mxu0 %v4362
    %5648 = vmatpush1.bf16.msra.mxu0 %v4361
    %5649 = vmatprep.subr.bf16.mxu0 %v4366
    %5650 = vmatpush1.bf16.msra.mxu0 %v4365
    %5651 = vmatprep.subr.bf16.mxu0 %v4370
    %5652 = vmatpush1.bf16.msra.mxu0 %v4369
    %5653 = vmatprep.subr.bf16.mxu0 %v4374
    %5654 = vmatpush1.bf16.msra.mxu0 %v4373
    %5655 = vmatprep.subr.bf16.mxu0 %v4378
    %5656 = vmatpush1.bf16.msra.mxu0 %v4377
    %5657 = vmatprep.subr.bf16.mxu0 %v4382
    %5658 = vmatpush1.bf16.msra.mxu0 %v4381
    %5659 = vmatprep.mubr.bf16.mxu0 %v1350
    %5660 = vmatmul.mubr.bf16.gmra.mrb[0].mxu0 %v1349
    %v5661 = vpop.f32.mrb[0].mxu0
    %v5662 = vadd.f32 %v5621, %v5661
    %v5663 = vpop.f32.mrb[0].mxu0
    %v5664 = vadd.f32 %v5623, %v5663
    %v5665 = vpop.f32.mrb[0].mxu0
    %v5666 = vpop.f32.mrb[0].mxu0
    %5667 = vdwg.mxu0
    %5668 = vmatprep.subr.bf16.mxu0 %v4386
    %5669 = vmatpush1.bf16.msra.mxu0 %v4385
    %5670 = vmatprep.subr.bf16.mxu0 %v4390
    %5671 = vmatpush1.bf16.msra.mxu0 %v4389
    %5672 = vmatprep.subr.bf16.mxu0 %v4394
    %5673 = vmatpush1.bf16.msra.mxu0 %v4393
    %5674 = vmatprep.subr.bf16.mxu0 %v4398
    %5675 = vmatpush1.bf16.msra.mxu0 %v4397
    %5676 = vmatprep.subr.bf16.mxu0 %v4402
    %5677 = vmatpush1.bf16.msra.mxu0 %v4401
    %5678 = vmatprep.subr.bf16.mxu0 %v4406
    %5679 = vmatpush1.bf16.msra.mxu0 %v4405
    %5680 = vmatprep.subr.bf16.mxu0 %v4410
    %5681 = vmatpush1.bf16.msra.mxu0 %v4409
    %5682 = vmatprep.subr.bf16.mxu0 %v4414
    %5683 = vmatpush1.bf16.msra.mxu0 %v4413
    %5684 = vmatprep.subr.bf16.mxu0 %v4418
    %5685 = vmatpush1.bf16.msra.mxu0 %v4417
    %5686 = vmatprep.subr.bf16.mxu0 %v4422
    %5687 = vmatpush1.bf16.msra.mxu0 %v4421
    %5688 = vmatprep.subr.bf16.mxu0 %v4426
    %5689 = vmatpush1.bf16.msra.mxu0 %v4425
    %5690 = vmatprep.subr.bf16.mxu0 %v4430
    %5691 = vmatpush1.bf16.msra.mxu0 %v4429
    %5692 = vmatprep.subr.bf16.mxu0 %v4434
    %5693 = vmatpush1.bf16.msra.mxu0 %v4433
    %5694 = vmatprep.subr.bf16.mxu0 %v4438
    %5695 = vmatpush1.bf16.msra.mxu0 %v4437
    %5696 = vmatprep.subr.bf16.mxu0 %v4442
    %5697 = vmatpush1.bf16.msra.mxu0 %v4441
    %5698 = vmatprep.subr.bf16.mxu0 %v4446
    %5699 = vmatpush1.bf16.msra.mxu0 %v4445
    %5700 = vmatprep.mubr.bf16.mxu0 %v1352
    %5701 = vmatmul.mubr.bf16.gmra.mrb[0].mxu0 %v1351
    %v5702 = vpop.f32.mrb[0].mxu0
    %v5703 = vadd.f32 %v5662, %v5702
    %v5704 = vpop.f32.mrb[0].mxu0
    %v5705 = vadd.f32 %v5664, %v5704
    %v5706 = vpop.f32.mrb[0].mxu0
    %v5707 = vpop.f32.mrb[0].mxu0
    %5708 = vdwg.mxu0
    %5709 = vmatprep.subr.bf16.mxu0 %v3684
    %5710 = vmatpush1.bf16.msra.mxu0 %v3683
    %5711 = vmatprep.subr.bf16.mxu0 %v3688
    %5712 = vmatpush1.bf16.msra.mxu0 %v3687
    %5713 = vmatprep.subr.bf16.mxu0 %v3692
    %5714 = vmatpush1.bf16.msra.mxu0 %v3691
    %5715 = vmatprep.subr.bf16.mxu0 %v3696
    %5716 = vmatpush1.bf16.msra.mxu0 %v3695
    %5717 = vmatprep.subr.bf16.mxu0 %v3700
    %5718 = vmatpush1.bf16.msra.mxu0 %v3699
    %5719 = vmatprep.subr.bf16.mxu0 %v3704
    %5720 = vmatpush1.bf16.msra.mxu0 %v3703
    %5721 = vmatprep.subr.bf16.mxu0 %v3708
    %5722 = vmatpush1.bf16.msra.mxu0 %v3707
    %5723 = vmatprep.subr.bf16.mxu0 %v3712
    %5724 = vmatpush1.bf16.msra.mxu0 %v3711
    %5725 = vmatprep.subr.bf16.mxu0 %v3716
    %5726 = vmatpush1.bf16.msra.mxu0 %v3715
    %5727 = vmatprep.subr.bf16.mxu0 %v3720
    %5728 = vmatpush1.bf16.msra.mxu0 %v3719
    %5729 = vmatprep.subr.bf16.mxu0 %v3724
    %5730 = vmatpush1.bf16.msra.mxu0 %v3723
    %5731 = vmatprep.subr.bf16.mxu0 %v3728
    %5732 = vmatpush1.bf16.msra.mxu0 %v3727
    %5733 = vmatprep.subr.bf16.mxu0 %v3732
    %5734 = vmatpush1.bf16.msra.mxu0 %v3731
    %5735 = vmatprep.subr.bf16.mxu0 %v3736
    %5736 = vmatpush1.bf16.msra.mxu0 %v3735
    %5737 = vmatprep.subr.bf16.mxu0 %v3740
    %5738 = vmatpush1.bf16.msra.mxu0 %v3739
    %5739 = vmatprep.subr.bf16.mxu0 %v3744
    %5740 = vmatpush1.bf16.msra.mxu0 %v3743
    %5741 = vmatprep.mubr.bf16.mxu0 %v1330
    %5742 = vmatmul.mubr.bf16.gmra.mrb[0].mxu0 %v1329
    %v5743 = vpop.f32.mrb[0].mxu0
    %v5744 = vadd.f32 %v1284, %v5743
    %v5745 = vpop.f32.mrb[0].mxu0
    %v5746 = vadd.f32 %v1288, %v5745
    %v5747 = vpop.f32.mrb[0].mxu0
    %v5748 = vpop.f32.mrb[0].mxu0
    %5749 = vdwg.mxu0
    %5750 = vmatprep.subr.bf16.mxu0 %v3748
    %5751 = vmatpush1.bf16.msra.mxu0 %v3747
    %5752 = vmatprep.subr.bf16.mxu0 %v3752
    %5753 = vmatpush1.bf16.msra.mxu0 %v3751
    %5754 = vmatprep.subr.bf16.mxu0 %v3756
    %5755 = vmatpush1.bf16.msra.mxu0 %v3755
    %5756 = vmatprep.subr.bf16.mxu0 %v3760
    %5757 = vmatpush1.bf16.msra.mxu0 %v3759
    %5758 = vmatprep.subr.bf16.mxu0 %v3764
    %5759 = vmatpush1.bf16.msra.mxu0 %v3763
    %5760 = vmatprep.subr.bf16.mxu0 %v3768
    %5761 = vmatpush1.bf16.msra.mxu0 %v3767
    %5762 = vmatprep.subr.bf16.mxu0 %v3772
    %5763 = vmatpush1.bf16.msra.mxu0 %v3771
    %5764 = vmatprep.subr.bf16.mxu0 %v3776
    %5765 = vmatpush1.bf16.msra.mxu0 %v3775
    %5766 = vmatprep.subr.bf16.mxu0 %v3780
    %5767 = vmatpush1.bf16.msra.mxu0 %v3779
    %5768 = vmatprep.subr.bf16.mxu0 %v3784
    %5769 = vmatpush1.bf16.msra.mxu0 %v3783
    %5770 = vmatprep.subr.bf16.mxu0 %v3788
    %5771 = vmatpush1.bf16.msra.mxu0 %v3787
    %5772 = vmatprep.subr.bf16.mxu0 %v3792
    %5773 = vmatpush1.bf16.msra.mxu0 %v3791
    %5774 = vmatprep.subr.bf16.mxu0 %v3796
    %5775 = vmatpush1.bf16.msra.mxu0 %v3795
    %5776 = vmatprep.subr.bf16.mxu0 %v3800
    %5777 = vmatpush1.bf16.msra.mxu0 %v3799
    %5778 = vmatprep.subr.bf16.mxu0 %v3804
    %5779 = vmatpush1.bf16.msra.mxu0 %v3803
    %5780 = vmatprep.subr.bf16.mxu0 %v3808
    %5781 = vmatpush1.bf16.msra.mxu0 %v3807
    %5782 = vmatprep.mubr.bf16.mxu0 %v1332
    %5783 = vmatmul.mubr.bf16.gmra.mrb[0].mxu0 %v1331
    %v5784 = vpop.f32.mrb[0].mxu0
    %v5785 = vadd.f32 %v5744, %v5784
    %v5786 = vpop.f32.mrb[0].mxu0
    %v5787 = vadd.f32 %v5746, %v5786
    %v5788 = vpop.f32.mrb[0].mxu0
    %v5789 = vpop.f32.mrb[0].mxu0
    %5790 = vdwg.mxu0
    %5791 = vmatprep.subr.bf16.mxu0 %v3812
    %5792 = vmatpush1.bf16.msra.mxu0 %v3811
    %5793 = vmatprep.subr.bf16.mxu0 %v3816
    %5794 = vmatpush1.bf16.msra.mxu0 %v3815
    %5795 = vmatprep.subr.bf16.mxu0 %v3820
    %5796 = vmatpush1.bf16.msra.mxu0 %v3819
    %5797 = vmatprep.subr.bf16.mxu0 %v3824
    %5798 = vmatpush1.bf16.msra.mxu0 %v3823
    %5799 = vmatprep.subr.bf16.mxu0 %v3828
    %5800 = vmatpush1.bf16.msra.mxu0 %v3827
    %5801 = vmatprep.subr.bf16.mxu0 %v3832
    %5802 = vmatpush1.bf16.msra.mxu0 %v3831
    %5803 = vmatprep.subr.bf16.mxu0 %v3836
    %5804 = vmatpush1.bf16.msra.mxu0 %v3835
    %5805 = vmatprep.subr.bf16.mxu0 %v3840
    %5806 = vmatpush1.bf16.msra.mxu0 %v3839
    %5807 = vmatprep.subr.bf16.mxu0 %v3844
    %5808 = vmatpush1.bf16.msra.mxu0 %v3843
    %5809 = vmatprep.subr.bf16.mxu0 %v3848
    %5810 = vmatpush1.bf16.msra.mxu0 %v3847
    %5811 = vmatprep.subr.bf16.mxu0 %v3852
    %5812 = vmatpush1.bf16.msra.mxu0 %v3851
    %5813 = vmatprep.subr.bf16.mxu0 %v3856
    %5814 = vmatpush1.bf16.msra.mxu0 %v3855
    %5815 = vmatprep.subr.bf16.mxu0 %v3860
    %5816 = vmatpush1.bf16.msra.mxu0 %v3859
    %5817 = vmatprep.subr.bf16.mxu0 %v3864
    %5818 = vmatpush1.bf16.msra.mxu0 %v3863
    %5819 = vmatprep.subr.bf16.mxu0 %v3868
    %5820 = vmatpush1.bf16.msra.mxu0 %v3867
    %5821 = vmatprep.subr.bf16.mxu0 %v3872
    %5822 = vmatpush1.bf16.msra.mxu0 %v3871
    %5823 = vmatprep.mubr.bf16.mxu0 %v1334
    %5824 = vmatmul.mubr.bf16.gmra.mrb[0].mxu0 %v1333
    %v5825 = vpop.f32.mrb[0].mxu0
    %v5826 = vadd.f32 %v5785, %v5825
    %v5827 = vpop.f32.mrb[0].mxu0
    %v5828 = vadd.f32 %v5787, %v5827
    %v5829 = vpop.f32.mrb[0].mxu0
    %v5830 = vpop.f32.mrb[0].mxu0
    %5831 = vdwg.mxu0
    %5832 = vmatprep.subr.bf16.mxu0 %v3876
    %5833 = vmatpush1.bf16.msra.mxu0 %v3875
    %5834 = vmatprep.subr.bf16.mxu0 %v3880
    %5835 = vmatpush1.bf16.msra.mxu0 %v3879
    %5836 = vmatprep.subr.bf16.mxu0 %v3884
    %5837 = vmatpush1.bf16.msra.mxu0 %v3883
    %5838 = vmatprep.subr.bf16.mxu0 %v3888
    %5839 = vmatpush1.bf16.msra.mxu0 %v3887
    %5840 = vmatprep.subr.bf16.mxu0 %v3892
    %5841 = vmatpush1.bf16.msra.mxu0 %v3891
    %5842 = vmatprep.subr.bf16.mxu0 %v3896
    %5843 = vmatpush1.bf16.msra.mxu0 %v3895
    %5844 = vmatprep.subr.bf16.mxu0 %v3900
    %5845 = vmatpush1.bf16.msra.mxu0 %v3899
    %5846 = vmatprep.subr.bf16.mxu0 %v3904
    %5847 = vmatpush1.bf16.msra.mxu0 %v3903
    %5848 = vmatprep.subr.bf16.mxu0 %v3908
    %5849 = vmatpush1.bf16.msra.mxu0 %v3907
    %5850 = vmatprep.subr.bf16.mxu0 %v3912
    %5851 = vmatpush1.bf16.msra.mxu0 %v3911
    %5852 = vmatprep.subr.bf16.mxu0 %v3916
    %5853 = vmatpush1.bf16.msra.mxu0 %v3915
    %5854 = vmatprep.subr.bf16.mxu0 %v3920
    %5855 = vmatpush1.bf16.msra.mxu0 %v3919
    %5856 = vmatprep.subr.bf16.mxu0 %v3924
    %5857 = vmatpush1.bf16.msra.mxu0 %v3923
    %5858 = vmatprep.subr.bf16.mxu0 %v3928
    %5859 = vmatpush1.bf16.msra.mxu0 %v3927
    %5860 = vmatprep.subr.bf16.mxu0 %v3932
    %5861 = vmatpush1.bf16.msra.mxu0 %v3931
    %5862 = vmatprep.subr.bf16.mxu0 %v3936
    %5863 = vmatpush1.bf16.msra.mxu0 %v3935
    %5864 = vmatprep.mubr.bf16.mxu0 %v1336
    %5865 = vmatmul.mubr.bf16.gmra.mrb[0].mxu0 %v1335
    %v5866 = vpop.f32.mrb[0].mxu0
    %v5867 = vadd.f32 %v5826, %v5866
    %v5868 = vpop.f32.mrb[0].mxu0
    %v5869 = vadd.f32 %v5828, %v5868
    %v5870 = vpop.f32.mrb[0].mxu0
    %v5871 = vpop.f32.mrb[0].mxu0
    %5872 = vdwg.mxu0
    %5873 = vmatprep.subr.bf16.mxu0 %v3940
    %5874 = vmatpush1.bf16.msra.mxu0 %v3939
    %5875 = vmatprep.subr.bf16.mxu0 %v3944
    %5876 = vmatpush1.bf16.msra.mxu0 %v3943
    %5877 = vmatprep.subr.bf16.mxu0 %v3948
    %5878 = vmatpush1.bf16.msra.mxu0 %v3947
    %5879 = vmatprep.subr.bf16.mxu0 %v3952
    %5880 = vmatpush1.bf16.msra.mxu0 %v3951
    %5881 = vmatprep.subr.bf16.mxu0 %v3956
    %5882 = vmatpush1.bf16.msra.mxu0 %v3955
    %5883 = vmatprep.subr.bf16.mxu0 %v3960
    %5884 = vmatpush1.bf16.msra.mxu0 %v3959
    %5885 = vmatprep.subr.bf16.mxu0 %v3964
    %5886 = vmatpush1.bf16.msra.mxu0 %v3963
    %5887 = vmatprep.subr.bf16.mxu0 %v3968
    %5888 = vmatpush1.bf16.msra.mxu0 %v3967
    %5889 = vmatprep.subr.bf16.mxu0 %v3972
    %5890 = vmatpush1.bf16.msra.mxu0 %v3971
    %5891 = vmatprep.subr.bf16.mxu0 %v3976
    %5892 = vmatpush1.bf16.msra.mxu0 %v3975
    %5893 = vmatprep.subr.bf16.mxu0 %v3980
    %5894 = vmatpush1.bf16.msra.mxu0 %v3979
    %5895 = vmatprep.subr.bf16.mxu0 %v3984
    %5896 = vmatpush1.bf16.msra.mxu0 %v3983
    %5897 = vmatprep.subr.bf16.mxu0 %v3988
    %5898 = vmatpush1.bf16.msra.mxu0 %v3987
    %5899 = vmatprep.subr.bf16.mxu0 %v3992
    %5900 = vmatpush1.bf16.msra.mxu0 %v3991
    %5901 = vmatprep.subr.bf16.mxu0 %v3996
    %5902 = vmatpush1.bf16.msra.mxu0 %v3995
    %5903 = vmatprep.subr.bf16.mxu0 %v4000
    %5904 = vmatpush1.bf16.msra.mxu0 %v3999
    %5905 = vmatprep.mubr.bf16.mxu0 %v1338
    %5906 = vmatmul.mubr.bf16.gmra.mrb[0].mxu0 %v1337
    %v5907 = vpop.f32.mrb[0].mxu0
    %v5908 = vadd.f32 %v5867, %v5907
    %v5909 = vpop.f32.mrb[0].mxu0
    %v5910 = vadd.f32 %v5869, %v5909
    %v5911 = vpop.f32.mrb[0].mxu0
    %v5912 = vpop.f32.mrb[0].mxu0
    %5913 = vdwg.mxu0
    %5914 = vmatprep.subr.bf16.mxu0 %v4004
    %5915 = vmatpush1.bf16.msra.mxu0 %v4003
    %5916 = vmatprep.subr.bf16.mxu0 %v4008
    %5917 = vmatpush1.bf16.msra.mxu0 %v4007
    %5918 = vmatprep.subr.bf16.mxu0 %v4012
    %5919 = vmatpush1.bf16.msra.mxu0 %v4011
    %5920 = vmatprep.subr.bf16.mxu0 %v4016
    %5921 = vmatpush1.bf16.msra.mxu0 %v4015
    %5922 = vmatprep.subr.bf16.mxu0 %v4020
    %5923 = vmatpush1.bf16.msra.mxu0 %v4019
    %5924 = vmatprep.subr.bf16.mxu0 %v4024
    %5925 = vmatpush1.bf16.msra.mxu0 %v4023
    %5926 = vmatprep.subr.bf16.mxu0 %v4028
    %5927 = vmatpush1.bf16.msra.mxu0 %v4027
    %5928 = vmatprep.subr.bf16.mxu0 %v4032
    %5929 = vmatpush1.bf16.msra.mxu0 %v4031
    %5930 = vmatprep.subr.bf16.mxu0 %v4036
    %5931 = vmatpush1.bf16.msra.mxu0 %v4035
    %5932 = vmatprep.subr.bf16.mxu0 %v4040
    %5933 = vmatpush1.bf16.msra.mxu0 %v4039
    %5934 = vmatprep.subr.bf16.mxu0 %v4044
    %5935 = vmatpush1.bf16.msra.mxu0 %v4043
    %5936 = vmatprep.subr.bf16.mxu0 %v4048
    %5937 = vmatpush1.bf16.msra.mxu0 %v4047
    %5938 = vmatprep.subr.bf16.mxu0 %v4052
    %5939 = vmatpush1.bf16.msra.mxu0 %v4051
    %5940 = vmatprep.subr.bf16.mxu0 %v4056
    %5941 = vmatpush1.bf16.msra.mxu0 %v4055
    %5942 = vmatprep.subr.bf16.mxu0 %v4060
    %5943 = vmatpush1.bf16.msra.mxu0 %v4059
    %5944 = vmatprep.subr.bf16.mxu0 %v4064
    %5945 = vmatpush1.bf16.msra.mxu0 %v4063
    %5946 = vmatprep.mubr.bf16.mxu0 %v1340
    %5947 = vmatmul.mubr.bf16.gmra.mrb[0].mxu0 %v1339
    %v5948 = vpop.f32.mrb[0].mxu0
    %v5949 = vadd.f32 %v5908, %v5948
    %v5950 = vpop.f32.mrb[0].mxu0
    %v5951 = vadd.f32 %v5910, %v5950
    %v5952 = vpop.f32.mrb[0].mxu0
    %v5953 = vpop.f32.mrb[0].mxu0
    %5954 = vdwg.mxu0
    %5955 = vmatprep.subr.bf16.mxu0 %v4068
    %5956 = vmatpush1.bf16.msra.mxu0 %v4067
    %5957 = vmatprep.subr.bf16.mxu0 %v4072
    %5958 = vmatpush1.bf16.msra.mxu0 %v4071
    %5959 = vmatprep.subr.bf16.mxu0 %v4076
    %5960 = vmatpush1.bf16.msra.mxu0 %v4075
    %5961 = vmatprep.subr.bf16.mxu0 %v4080
    %5962 = vmatpush1.bf16.msra.mxu0 %v4079
    %5963 = vmatprep.subr.bf16.mxu0 %v4084
    %5964 = vmatpush1.bf16.msra.mxu0 %v4083
    %5965 = vmatprep.subr.bf16.mxu0 %v4088
    %5966 = vmatpush1.bf16.msra.mxu0 %v4087
    %5967 = vmatprep.subr.bf16.mxu0 %v4092
    %5968 = vmatpush1.bf16.msra.mxu0 %v4091
    %5969 = vmatprep.subr.bf16.mxu0 %v4096
    %5970 = vmatpush1.bf16.msra.mxu0 %v4095
    %5971 = vmatprep.subr.bf16.mxu0 %v4100
    %5972 = vmatpush1.bf16.msra.mxu0 %v4099
    %5973 = vmatprep.subr.bf16.mxu0 %v4104
    %5974 = vmatpush1.bf16.msra.mxu0 %v4103
    %5975 = vmatprep.subr.bf16.mxu0 %v4108
    %5976 = vmatpush1.bf16.msra.mxu0 %v4107
    %5977 = vmatprep.subr.bf16.mxu0 %v4112
    %5978 = vmatpush1.bf16.msra.mxu0 %v4111
    %5979 = vmatprep.subr.bf16.mxu0 %v4116
    %5980 = vmatpush1.bf16.msra.mxu0 %v4115
    %5981 = vmatprep.subr.bf16.mxu0 %v4120
    %5982 = vmatpush1.bf16.msra.mxu0 %v4119
    %5983 = vmatprep.subr.bf16.mxu0 %v4124
    %5984 = vmatpush1.bf16.msra.mxu0 %v4123
    %5985 = vmatprep.subr.bf16.mxu0 %v4128
    %5986 = vmatpush1.bf16.msra.mxu0 %v4127
    %5987 = vmatprep.mubr.bf16.mxu0 %v1342
    %5988 = vmatmul.mubr.bf16.gmra.mrb[0].mxu0 %v1341
    %v5989 = vpop.f32.mrb[0].mxu0
    %v5990 = vadd.f32 %v5949, %v5989
    %v5991 = vpop.f32.mrb[0].mxu0
    %v5992 = vadd.f32 %v5951, %v5991
    %v5993 = vpop.f32.mrb[0].mxu0
    %v5994 = vpop.f32.mrb[0].mxu0
    %5995 = vdwg.mxu0
    %5996 = vmatprep.subr.bf16.mxu0 %v4132
    %5997 = vmatpush1.bf16.msra.mxu0 %v4131
    %5998 = vmatprep.subr.bf16.mxu0 %v4136
    %5999 = vmatpush1.bf16.msra.mxu0 %v4135
    %6000 = vmatprep.subr.bf16.mxu0 %v4140
    %6001 = vmatpush1.bf16.msra.mxu0 %v4139
    %6002 = vmatprep.subr.bf16.mxu0 %v4144
    %6003 = vmatpush1.bf16.msra.mxu0 %v4143
    %6004 = vmatprep.subr.bf16.mxu0 %v4148
    %6005 = vmatpush1.bf16.msra.mxu0 %v4147
    %6006 = vmatprep.subr.bf16.mxu0 %v4152
    %6007 = vmatpush1.bf16.msra.mxu0 %v4151
    %6008 = vmatprep.subr.bf16.mxu0 %v4156
    %6009 = vmatpush1.bf16.msra.mxu0 %v4155
    %6010 = vmatprep.subr.bf16.mxu0 %v4160
    %6011 = vmatpush1.bf16.msra.mxu0 %v4159
    %6012 = vmatprep.subr.bf16.mxu0 %v4164
    %6013 = vmatpush1.bf16.msra.mxu0 %v4163
    %6014 = vmatprep.subr.bf16.mxu0 %v4168
    %6015 = vmatpush1.bf16.msra.mxu0 %v4167
    %6016 = vmatprep.subr.bf16.mxu0 %v4172
    %6017 = vmatpush1.bf16.msra.mxu0 %v4171
    %6018 = vmatprep.subr.bf16.mxu0 %v4176
    %6019 = vmatpush1.bf16.msra.mxu0 %v4175
    %6020 = vmatprep.subr.bf16.mxu0 %v4180
    %6021 = vmatpush1.bf16.msra.mxu0 %v4179
    %6022 = vmatprep.subr.bf16.mxu0 %v4184
    %6023 = vmatpush1.bf16.msra.mxu0 %v4183
    %6024 = vmatprep.subr.bf16.mxu0 %v4188
    %6025 = vmatpush1.bf16.msra.mxu0 %v4187
    %6026 = vmatprep.subr.bf16.mxu0 %v4192
    %6027 = vmatpush1.bf16.msra.mxu0 %v4191
    %6028 = vmatprep.mubr.bf16.mxu0 %v1344
    %6029 = vmatmul.mubr.bf16.gmra.mrb[0].mxu0 %v1343
    %v6030 = vpop.f32.mrb[0].mxu0
    %v6031 = vadd.f32 %v5990, %v6030
    %v6032 = vpop.f32.mrb[0].mxu0
    %v6033 = vadd.f32 %v5992, %v6032
    %v6034 = vpop.f32.mrb[0].mxu0
    %v6035 = vpop.f32.mrb[0].mxu0
    %6036 = vdwg.mxu0
    %6037 = vmatprep.subr.bf16.mxu0 %v4196
    %6038 = vmatpush1.bf16.msra.mxu0 %v4195
    %6039 = vmatprep.subr.bf16.mxu0 %v4200
    %6040 = vmatpush1.bf16.msra.mxu0 %v4199
    %6041 = vmatprep.subr.bf16.mxu0 %v4204
    %6042 = vmatpush1.bf16.msra.mxu0 %v4203
    %6043 = vmatprep.subr.bf16.mxu0 %v4208
    %6044 = vmatpush1.bf16.msra.mxu0 %v4207
    %6045 = vmatprep.subr.bf16.mxu0 %v4212
    %6046 = vmatpush1.bf16.msra.mxu0 %v4211
    %6047 = vmatprep.subr.bf16.mxu0 %v4216
    %6048 = vmatpush1.bf16.msra.mxu0 %v4215
    %6049 = vmatprep.subr.bf16.mxu0 %v4220
    %6050 = vmatpush1.bf16.msra.mxu0 %v4219
    %6051 = vmatprep.subr.bf16.mxu0 %v4224
    %6052 = vmatpush1.bf16.msra.mxu0 %v4223
    %6053 = vmatprep.subr.bf16.mxu0 %v4228
    %6054 = vmatpush1.bf16.msra.mxu0 %v4227
    %6055 = vmatprep.subr.bf16.mxu0 %v4232
    %6056 = vmatpush1.bf16.msra.mxu0 %v4231
    %6057 = vmatprep.subr.bf16.mxu0 %v4236
    %6058 = vmatpush1.bf16.msra.mxu0 %v4235
    %6059 = vmatprep.subr.bf16.mxu0 %v4240
    %6060 = vmatpush1.bf16.msra.mxu0 %v4239
    %6061 = vmatprep.subr.bf16.mxu0 %v4244
    %6062 = vmatpush1.bf16.msra.mxu0 %v4243
    %6063 = vmatprep.subr.bf16.mxu0 %v4248
    %6064 = vmatpush1.bf16.msra.mxu0 %v4247
    %6065 = vmatprep.subr.bf16.mxu0 %v4252
    %6066 = vmatpush1.bf16.msra.mxu0 %v4251
    %6067 = vmatprep.subr.bf16.mxu0 %v4256
    %6068 = vmatpush1.bf16.msra.mxu0 %v4255
    %6069 = vmatprep.mubr.bf16.mxu0 %v1346
    %6070 = vmatmul.mubr.bf16.gmra.mrb[0].mxu0 %v1345
    %v6071 = vpop.f32.mrb[0].mxu0
    %v6072 = vadd.f32 %v6031, %v6071
    %v6073 = vpop.f32.mrb[0].mxu0
    %v6074 = vadd.f32 %v6033, %v6073
    %v6075 = vpop.f32.mrb[0].mxu0
    %v6076 = vpop.f32.mrb[0].mxu0
    %6077 = vdwg.mxu0
    %6078 = vmatprep.subr.bf16.mxu0 %v4260
    %6079 = vmatpush1.bf16.msra.mxu0 %v4259
    %6080 = vmatprep.subr.bf16.mxu0 %v4264
    %6081 = vmatpush1.bf16.msra.mxu0 %v4263
    %6082 = vmatprep.subr.bf16.mxu0 %v4268
    %6083 = vmatpush1.bf16.msra.mxu0 %v4267
    %6084 = vmatprep.subr.bf16.mxu0 %v4272
    %6085 = vmatpush1.bf16.msra.mxu0 %v4271
    %6086 = vmatprep.subr.bf16.mxu0 %v4276
    %6087 = vmatpush1.bf16.msra.mxu0 %v4275
    %6088 = vmatprep.subr.bf16.mxu0 %v4280
    %6089 = vmatpush1.bf16.msra.mxu0 %v4279
    %6090 = vmatprep.subr.bf16.mxu0 %v4284
    %6091 = vmatpush1.bf16.msra.mxu0 %v4283
    %6092 = vmatprep.subr.bf16.mxu0 %v4288
    %6093 = vmatpush1.bf16.msra.mxu0 %v4287
    %6094 = vmatprep.subr.bf16.mxu0 %v4292
    %6095 = vmatpush1.bf16.msra.mxu0 %v4291
    %6096 = vmatprep.subr.bf16.mxu0 %v4296
    %6097 = vmatpush1.bf16.msra.mxu0 %v4295
    %6098 = vmatprep.subr.bf16.mxu0 %v4300
    %6099 = vmatpush1.bf16.msra.mxu0 %v4299
    %6100 = vmatprep.subr.bf16.mxu0 %v4304
    %6101 = vmatpush1.bf16.msra.mxu0 %v4303
    %6102 = vmatprep.subr.bf16.mxu0 %v4308
    %6103 = vmatpush1.bf16.msra.mxu0 %v4307
    %6104 = vmatprep.subr.bf16.mxu0 %v4312
    %6105 = vmatpush1.bf16.msra.mxu0 %v4311
    %6106 = vmatprep.subr.bf16.mxu0 %v4316
    %6107 = vmatpush1.bf16.msra.mxu0 %v4315
    %6108 = vmatprep.subr.bf16.mxu0 %v4320
    %6109 = vmatpush1.bf16.msra.mxu0 %v4319
    %6110 = vmatprep.mubr.bf16.mxu0 %v1348
    %6111 = vmatmul.mubr.bf16.gmra.mrb[0].mxu0 %v1347
    %v6112 = vpop.f32.mrb[0].mxu0
    %v6113 = vadd.f32 %v6072, %v6112
    %v6114 = vpop.f32.mrb[0].mxu0
    %v6115 = vadd.f32 %v6074, %v6114
    %v6116 = vpop.f32.mrb[0].mxu0
    %v6117 = vpop.f32.mrb[0].mxu0
    %6118 = vdwg.mxu0
    %6119 = vmatprep.subr.bf16.mxu0 %v4324
    %6120 = vmatpush1.bf16.msra.mxu0 %v4323
    %6121 = vmatprep.subr.bf16.mxu0 %v4328
    %6122 = vmatpush1.bf16.msra.mxu0 %v4327
    %6123 = vmatprep.subr.bf16.mxu0 %v4332
    %6124 = vmatpush1.bf16.msra.mxu0 %v4331
    %6125 = vmatprep.subr.bf16.mxu0 %v4336
    %6126 = vmatpush1.bf16.msra.mxu0 %v4335
    %6127 = vmatprep.subr.bf16.mxu0 %v4340
    %6128 = vmatpush1.bf16.msra.mxu0 %v4339
    %6129 = vmatprep.subr.bf16.mxu0 %v4344
    %6130 = vmatpush1.bf16.msra.mxu0 %v4343
    %6131 = vmatprep.subr.bf16.mxu0 %v4348
    %6132 = vmatpush1.bf16.msra.mxu0 %v4347
    %6133 = vmatprep.subr.bf16.mxu0 %v4352
    %6134 = vmatpush1.bf16.msra.mxu0 %v4351
    %6135 = vmatprep.subr.bf16.mxu0 %v4356
    %6136 = vmatpush1.bf16.msra.mxu0 %v4355
    %6137 = vmatprep.subr.bf16.mxu0 %v4360
    %6138 = vmatpush1.bf16.msra.mxu0 %v4359
    %6139 = vmatprep.subr.bf16.mxu0 %v4364
    %6140 = vmatpush1.bf16.msra.mxu0 %v4363
    %6141 = vmatprep.subr.bf16.mxu0 %v4368
    %6142 = vmatpush1.bf16.msra.mxu0 %v4367
    %6143 = vmatprep.subr.bf16.mxu0 %v4372
    %6144 = vmatpush1.bf16.msra.mxu0 %v4371
    %6145 = vmatprep.subr.bf16.mxu0 %v4376
    %6146 = vmatpush1.bf16.msra.mxu0 %v4375
    %6147 = vmatprep.subr.bf16.mxu0 %v4380
    %6148 = vmatpush1.bf16.msra.mxu0 %v4379
    %6149 = vmatprep.subr.bf16.mxu0 %v4384
    %6150 = vmatpush1.bf16.msra.mxu0 %v4383
    %6151 = vmatprep.mubr.bf16.mxu0 %v1350
    %6152 = vmatmul.mubr.bf16.gmra.mrb[0].mxu0 %v1349
    %v6153 = vpop.f32.mrb[0].mxu0
    %v6154 = vadd.f32 %v6113, %v6153
    %v6155 = vpop.f32.mrb[0].mxu0
    %v6156 = vadd.f32 %v6115, %v6155
    %v6157 = vpop.f32.mrb[0].mxu0
    %v6158 = vpop.f32.mrb[0].mxu0
    %6159 = vdwg.mxu0
    %6160 = vmatprep.subr.bf16.mxu0 %v4388
    %6161 = vmatpush1.bf16.msra.mxu0 %v4387
    %6162 = vmatprep.subr.bf16.mxu0 %v4392
    %6163 = vmatpush1.bf16.msra.mxu0 %v4391
    %6164 = vmatprep.subr.bf16.mxu0 %v4396
    %6165 = vmatpush1.bf16.msra.mxu0 %v4395
    %6166 = vmatprep.subr.bf16.mxu0 %v4400
    %6167 = vmatpush1.bf16.msra.mxu0 %v4399
    %6168 = vmatprep.subr.bf16.mxu0 %v4404
    %6169 = vmatpush1.bf16.msra.mxu0 %v4403
    %6170 = vmatprep.subr.bf16.mxu0 %v4408
    %6171 = vmatpush1.bf16.msra.mxu0 %v4407
    %6172 = vmatprep.subr.bf16.mxu0 %v4412
    %6173 = vmatpush1.bf16.msra.mxu0 %v4411
    %6174 = vmatprep.subr.bf16.mxu0 %v4416
    %6175 = vmatpush1.bf16.msra.mxu0 %v4415
    %6176 = vmatprep.subr.bf16.mxu0 %v4420
    %6177 = vmatpush1.bf16.msra.mxu0 %v4419
    %6178 = vmatprep.subr.bf16.mxu0 %v4424
    %6179 = vmatpush1.bf16.msra.mxu0 %v4423
    %6180 = vmatprep.subr.bf16.mxu0 %v4428
    %6181 = vmatpush1.bf16.msra.mxu0 %v4427
    %6182 = vmatprep.subr.bf16.mxu0 %v4432
    %6183 = vmatpush1.bf16.msra.mxu0 %v4431
    %6184 = vmatprep.subr.bf16.mxu0 %v4436
    %6185 = vmatpush1.bf16.msra.mxu0 %v4435
    %6186 = vmatprep.subr.bf16.mxu0 %v4440
    %6187 = vmatpush1.bf16.msra.mxu0 %v4439
    %6188 = vmatprep.subr.bf16.mxu0 %v4444
    %6189 = vmatpush1.bf16.msra.mxu0 %v4443
    %6190 = vmatprep.subr.bf16.mxu0 %v4448
    %6191 = vmatpush1.bf16.msra.mxu0 %v4447
    %6192 = vmatprep.mubr.bf16.mxu0 %v1352
    %6193 = vmatmul.mubr.bf16.gmra.mrb[0].mxu0 %v1351
    %v6194 = vpop.f32.mrb[0].mxu0
    %v6195 = vadd.f32 %v6154, %v6194
    %v6196 = vpop.f32.mrb[0].mxu0
    %v6197 = vadd.f32 %v6156, %v6196
    %v6198 = vpop.f32.mrb[0].mxu0
    %v6199 = vpop.f32.mrb[0].mxu0
    %6200 = vdwg.mxu0
    %v6201 = vmax.f32 %v5703, 0.0
    %v6202 = vmax.f32 %v5705, 0.0
    %v6203 = vmax.f32 %v6195, 0.0
    %v6204 = vmax.f32 %v6197, 0.0
    %v6205 = vpack.c.bf16 %v6201, %v6201
    %v6206 = vpack.c.bf16 %v6202, %v6202
    %v6207 = vpack.c.bf16 %v6203, %v6203
    %v6208 = vpack.c.bf16 %v6204, %v6204
    %v6209 = vld [vmem:[#allocation11] sm:$0xff]
    %v6210 = vld [vmem:[#allocation11 + $0x8] sm:$0xff]
    %v6211 = vld [vmem:[#allocation11 + $0x10] sm:$0xff]
    %v6212 = vld [vmem:[#allocation11 + $0x18] sm:$0xff]
    %v6213 = vld [vmem:[#allocation11 + $0x20] sm:$0xff]
    %v6214 = vld [vmem:[#allocation11 + $0x28] sm:$0xff]
    %v6215 = vld [vmem:[#allocation11 + $0x30] sm:$0xff]
    %v6216 = vld [vmem:[#allocation11 + $0x38] sm:$0xff]
    %v6217 = vld [vmem:[#allocation11 + $0x40] sm:$0xff]
    %v6218 = vld [vmem:[#allocation11 + $0x48] sm:$0xff]
    %v6219 = vld [vmem:[#allocation11 + $0x50] sm:$0xff]
    %v6220 = vld [vmem:[#allocation11 + $0x58] sm:$0xff]
    %v6221 = vld [vmem:[#allocation11 + $0x60] sm:$0xff]
    %v6222 = vld [vmem:[#allocation11 + $0x68] sm:$0xff]
    %v6223 = vld [vmem:[#allocation11 + $0x70] sm:$0xff]
    %v6224 = vld [vmem:[#allocation11 + $0x78] sm:$0xff]
    %v6225 = vld [vmem:[#allocation11 + $0x80] sm:$0xff]
    %v6226 = vld [vmem:[#allocation11 + $0x88] sm:$0xff]
    %v6227 = vld [vmem:[#allocation11 + $0x90] sm:$0xff]
    %v6228 = vld [vmem:[#allocation11 + $0x98] sm:$0xff]
    %v6229 = vld [vmem:[#allocation11 + $0xa0] sm:$0xff]
    %v6230 = vld [vmem:[#allocation11 + $0xa8] sm:$0xff]
    %v6231 = vld [vmem:[#allocation11 + $0xb0] sm:$0xff]
    %v6232 = vld [vmem:[#allocation11 + $0xb8] sm:$0xff]
    %v6233 = vld [vmem:[#allocation11 + $0xc0] sm:$0xff]
    %v6234 = vld [vmem:[#allocation11 + $0xc8] sm:$0xff]
    %v6235 = vld [vmem:[#allocation11 + $0xd0] sm:$0xff]
    %v6236 = vld [vmem:[#allocation11 + $0xd8] sm:$0xff]
    %v6237 = vld [vmem:[#allocation11 + $0xe0] sm:$0xff]
    %v6238 = vld [vmem:[#allocation11 + $0xe8] sm:$0xff]
    %v6239 = vld [vmem:[#allocation11 + $0xf0] sm:$0xff]
    %v6240 = vld [vmem:[#allocation11 + $0xf8] sm:$0xff]
    %v6241 = vld [vmem:[#allocation11 + $0x100] sm:$0xff]
    %v6242 = vld [vmem:[#allocation11 + $0x108] sm:$0xff]
    %v6243 = vld [vmem:[#allocation11 + $0x110] sm:$0xff]
    %v6244 = vld [vmem:[#allocation11 + $0x118] sm:$0xff]
    %v6245 = vld [vmem:[#allocation11 + $0x120] sm:$0xff]
    %v6246 = vld [vmem:[#allocation11 + $0x128] sm:$0xff]
    %v6247 = vld [vmem:[#allocation11 + $0x130] sm:$0xff]
    %v6248 = vld [vmem:[#allocation11 + $0x138] sm:$0xff]
    %v6249 = vld [vmem:[#allocation11 + $0x140] sm:$0xff]
    %v6250 = vld [vmem:[#allocation11 + $0x148] sm:$0xff]
    %v6251 = vld [vmem:[#allocation11 + $0x150] sm:$0xff]
    %v6252 = vld [vmem:[#allocation11 + $0x158] sm:$0xff]
    %v6253 = vld [vmem:[#allocation11 + $0x160] sm:$0xff]
    %v6254 = vld [vmem:[#allocation11 + $0x168] sm:$0xff]
    %v6255 = vld [vmem:[#allocation11 + $0x170] sm:$0xff]
    %v6256 = vld [vmem:[#allocation11 + $0x178] sm:$0xff]
    %v6257 = vld [vmem:[#allocation11 + $0x180] sm:$0xff]
    %v6258 = vld [vmem:[#allocation11 + $0x188] sm:$0xff]
    %v6259 = vld [vmem:[#allocation11 + $0x190] sm:$0xff]
    %v6260 = vld [vmem:[#allocation11 + $0x198] sm:$0xff]
    %v6261 = vld [vmem:[#allocation11 + $0x1a0] sm:$0xff]
    %v6262 = vld [vmem:[#allocation11 + $0x1a8] sm:$0xff]
    %v6263 = vld [vmem:[#allocation11 + $0x1b0] sm:$0xff]
    %v6264 = vld [vmem:[#allocation11 + $0x1b8] sm:$0xff]
    %v6265 = vld [vmem:[#allocation11 + $0x1c0] sm:$0xff]
    %v6266 = vld [vmem:[#allocation11 + $0x1c8] sm:$0xff]
    %v6267 = vld [vmem:[#allocation11 + $0x1d0] sm:$0xff]
    %v6268 = vld [vmem:[#allocation11 + $0x1d8] sm:$0xff]
    %v6269 = vld [vmem:[#allocation11 + $0x1e0] sm:$0xff]
    %v6270 = vld [vmem:[#allocation11 + $0x1e8] sm:$0xff]
    %v6271 = vld [vmem:[#allocation11 + $0x1f0] sm:$0xff]
    %v6272 = vld [vmem:[#allocation11 + $0x1f8] sm:$0xff]
    %v6273 = vld [vmem:[#allocation12] sm:$0x3]
    %v6275 = vlaneseq
    %v6276 = vshrl.u32 %v6275, 7
    %v6277 = vsub.s32 0, %v6276
    %v6278 = vrot.slane %v6273, %v6277
    %v6279 = vlaneseq
    %v6280 = vshrl.u32 %v6279, 7
    %v6281 = vsub.s32 1, %v6280
    %v6282 = vrot.slane %v6273, %v6281
    %v6349 = vunpack.c.l.b16 %v6209
    %v6350 = vunpack.c.h.b16 %v6209
    %v6351 = vunpack.c.l.b16 %v6210
    %v6352 = vunpack.c.h.b16 %v6210
    %v6353 = vunpack.c.l.b16 %v6211
    %v6354 = vunpack.c.h.b16 %v6211
    %v6355 = vunpack.c.l.b16 %v6212
    %v6356 = vunpack.c.h.b16 %v6212
    %v6357 = vunpack.c.l.b16 %v6213
    %v6358 = vunpack.c.h.b16 %v6213
    %v6359 = vunpack.c.l.b16 %v6214
    %v6360 = vunpack.c.h.b16 %v6214
    %v6361 = vunpack.c.l.b16 %v6215
    %v6362 = vunpack.c.h.b16 %v6215
    %v6363 = vunpack.c.l.b16 %v6216
    %v6364 = vunpack.c.h.b16 %v6216
    %v6365 = vunpack.c.l.b16 %v6217
    %v6366 = vunpack.c.h.b16 %v6217
    %v6367 = vunpack.c.l.b16 %v6218
    %v6368 = vunpack.c.h.b16 %v6218
    %v6369 = vunpack.c.l.b16 %v6219
    %v6370 = vunpack.c.h.b16 %v6219
    %v6371 = vunpack.c.l.b16 %v6220
    %v6372 = vunpack.c.h.b16 %v6220
    %v6373 = vunpack.c.l.b16 %v6221
    %v6374 = vunpack.c.h.b16 %v6221
    %v6375 = vunpack.c.l.b16 %v6222
    %v6376 = vunpack.c.h.b16 %v6222
    %v6377 = vunpack.c.l.b16 %v6223
    %v6378 = vunpack.c.h.b16 %v6223
    %v6379 = vunpack.c.l.b16 %v6224
    %v6380 = vunpack.c.h.b16 %v6224
    %v6381 = vunpack.c.l.b16 %v6225
    %v6382 = vunpack.c.h.b16 %v6225
    %v6383 = vunpack.c.l.b16 %v6226
    %v6384 = vunpack.c.h.b16 %v6226
    %v6385 = vunpack.c.l.b16 %v6227
    %v6386 = vunpack.c.h.b16 %v6227
    %v6387 = vunpack.c.l.b16 %v6228
    %v6388 = vunpack.c.h.b16 %v6228
    %v6389 = vunpack.c.l.b16 %v6229
    %v6390 = vunpack.c.h.b16 %v6229
    %v6391 = vunpack.c.l.b16 %v6230
    %v6392 = vunpack.c.h.b16 %v6230
    %v6393 = vunpack.c.l.b16 %v6231
    %v6394 = vunpack.c.h.b16 %v6231
    %v6395 = vunpack.c.l.b16 %v6232
    %v6396 = vunpack.c.h.b16 %v6232
    %v6397 = vunpack.c.l.b16 %v6233
    %v6398 = vunpack.c.h.b16 %v6233
    %v6399 = vunpack.c.l.b16 %v6234
    %v6400 = vunpack.c.h.b16 %v6234
    %v6401 = vunpack.c.l.b16 %v6235
    %v6402 = vunpack.c.h.b16 %v6235
    %v6403 = vunpack.c.l.b16 %v6236
    %v6404 = vunpack.c.h.b16 %v6236
    %v6405 = vunpack.c.l.b16 %v6237
    %v6406 = vunpack.c.h.b16 %v6237
    %v6407 = vunpack.c.l.b16 %v6238
    %v6408 = vunpack.c.h.b16 %v6238
    %v6409 = vunpack.c.l.b16 %v6239
    %v6410 = vunpack.c.h.b16 %v6239
    %v6411 = vunpack.c.l.b16 %v6240
    %v6412 = vunpack.c.h.b16 %v6240
    %v6413 = vunpack.c.l.b16 %v6241
    %v6414 = vunpack.c.h.b16 %v6241
    %v6415 = vunpack.c.l.b16 %v6242
    %v6416 = vunpack.c.h.b16 %v6242
    %v6417 = vunpack.c.l.b16 %v6243
    %v6418 = vunpack.c.h.b16 %v6243
    %v6419 = vunpack.c.l.b16 %v6244
    %v6420 = vunpack.c.h.b16 %v6244
    %v6421 = vunpack.c.l.b16 %v6245
    %v6422 = vunpack.c.h.b16 %v6245
    %v6423 = vunpack.c.l.b16 %v6246
    %v6424 = vunpack.c.h.b16 %v6246
    %v6425 = vunpack.c.l.b16 %v6247
    %v6426 = vunpack.c.h.b16 %v6247
    %v6427 = vunpack.c.l.b16 %v6248
    %v6428 = vunpack.c.h.b16 %v6248
    %v6429 = vunpack.c.l.b16 %v6249
    %v6430 = vunpack.c.h.b16 %v6249
    %v6431 = vunpack.c.l.b16 %v6250
    %v6432 = vunpack.c.h.b16 %v6250
    %v6433 = vunpack.c.l.b16 %v6251
    %v6434 = vunpack.c.h.b16 %v6251
    %v6435 = vunpack.c.l.b16 %v6252
    %v6436 = vunpack.c.h.b16 %v6252
    %v6437 = vunpack.c.l.b16 %v6253
    %v6438 = vunpack.c.h.b16 %v6253
    %v6439 = vunpack.c.l.b16 %v6254
    %v6440 = vunpack.c.h.b16 %v6254
    %v6441 = vunpack.c.l.b16 %v6255
    %v6442 = vunpack.c.h.b16 %v6255
    %v6443 = vunpack.c.l.b16 %v6256
    %v6444 = vunpack.c.h.b16 %v6256
    %v6445 = vunpack.c.l.b16 %v6257
    %v6446 = vunpack.c.h.b16 %v6257
    %v6447 = vunpack.c.l.b16 %v6258
    %v6448 = vunpack.c.h.b16 %v6258
    %v6449 = vunpack.c.l.b16 %v6259
    %v6450 = vunpack.c.h.b16 %v6259
    %v6451 = vunpack.c.l.b16 %v6260
    %v6452 = vunpack.c.h.b16 %v6260
    %v6453 = vunpack.c.l.b16 %v6261
    %v6454 = vunpack.c.h.b16 %v6261
    %v6455 = vunpack.c.l.b16 %v6262
    %v6456 = vunpack.c.h.b16 %v6262
    %v6457 = vunpack.c.l.b16 %v6263
    %v6458 = vunpack.c.h.b16 %v6263
    %v6459 = vunpack.c.l.b16 %v6264
    %v6460 = vunpack.c.h.b16 %v6264
    %v6461 = vunpack.c.l.b16 %v6265
    %v6462 = vunpack.c.h.b16 %v6265
    %v6463 = vunpack.c.l.b16 %v6266
    %v6464 = vunpack.c.h.b16 %v6266
    %v6465 = vunpack.c.l.b16 %v6267
    %v6466 = vunpack.c.h.b16 %v6267
    %v6467 = vunpack.c.l.b16 %v6268
    %v6468 = vunpack.c.h.b16 %v6268
    %v6469 = vunpack.c.l.b16 %v6269
    %v6470 = vunpack.c.h.b16 %v6269
    %v6471 = vunpack.c.l.b16 %v6270
    %v6472 = vunpack.c.h.b16 %v6270
    %v6473 = vunpack.c.l.b16 %v6271
    %v6474 = vunpack.c.h.b16 %v6271
    %v6475 = vunpack.c.l.b16 %v6272
    %v6476 = vunpack.c.h.b16 %v6272
    %v6477 = vpack.c.b16 %v6351, %v6349
    %v6478 = vpack.c.b16 %v6352, %v6350
    %v6479 = vpack.c.b16 %v6355, %v6353
    %v6480 = vpack.c.b16 %v6356, %v6354
    %v6481 = vpack.c.b16 %v6359, %v6357
    %v6482 = vpack.c.b16 %v6360, %v6358
    %v6483 = vpack.c.b16 %v6363, %v6361
    %v6484 = vpack.c.b16 %v6364, %v6362
    %v6485 = vpack.c.b16 %v6367, %v6365
    %v6486 = vpack.c.b16 %v6368, %v6366
    %v6487 = vpack.c.b16 %v6371, %v6369
    %v6488 = vpack.c.b16 %v6372, %v6370
    %v6489 = vpack.c.b16 %v6375, %v6373
    %v6490 = vpack.c.b16 %v6376, %v6374
    %v6491 = vpack.c.b16 %v6379, %v6377
    %v6492 = vpack.c.b16 %v6380, %v6378
    %v6493 = vpack.c.b16 %v6383, %v6381
    %v6494 = vpack.c.b16 %v6384, %v6382
    %v6495 = vpack.c.b16 %v6387, %v6385
    %v6496 = vpack.c.b16 %v6388, %v6386
    %v6497 = vpack.c.b16 %v6391, %v6389
    %v6498 = vpack.c.b16 %v6392, %v6390
    %v6499 = vpack.c.b16 %v6395, %v6393
    %v6500 = vpack.c.b16 %v6396, %v6394
    %v6501 = vpack.c.b16 %v6399, %v6397
    %v6502 = vpack.c.b16 %v6400, %v6398
    %v6503 = vpack.c.b16 %v6403, %v6401
    %v6504 = vpack.c.b16 %v6404, %v6402
    %v6505 = vpack.c.b16 %v6407, %v6405
    %v6506 = vpack.c.b16 %v6408, %v6406
    %v6507 = vpack.c.b16 %v6411, %v6409
    %v6508 = vpack.c.b16 %v6412, %v6410
    %v6509 = vpack.c.b16 %v6415, %v6413
    %v6510 = vpack.c.b16 %v6416, %v6414
    %v6511 = vpack.c.b16 %v6419, %v6417
    %v6512 = vpack.c.b16 %v6420, %v6418
    %v6513 = vpack.c.b16 %v6423, %v6421
    %v6514 = vpack.c.b16 %v6424, %v6422
    %v6515 = vpack.c.b16 %v6427, %v6425
    %v6516 = vpack.c.b16 %v6428, %v6426
    %v6517 = vpack.c.b16 %v6431, %v6429
    %v6518 = vpack.c.b16 %v6432, %v6430
    %v6519 = vpack.c.b16 %v6435, %v6433
    %v6520 = vpack.c.b16 %v6436, %v6434
    %v6521 = vpack.c.b16 %v6439, %v6437
    %v6522 = vpack.c.b16 %v6440, %v6438
    %v6523 = vpack.c.b16 %v6443, %v6441
    %v6524 = vpack.c.b16 %v6444, %v6442
    %v6525 = vpack.c.b16 %v6447, %v6445
    %v6526 = vpack.c.b16 %v6448, %v6446
    %v6527 = vpack.c.b16 %v6451, %v6449
    %v6528 = vpack.c.b16 %v6452, %v6450
    %v6529 = vpack.c.b16 %v6455, %v6453
    %v6530 = vpack.c.b16 %v6456, %v6454
    %v6531 = vpack.c.b16 %v6459, %v6457
    %v6532 = vpack.c.b16 %v6460, %v6458
    %v6533 = vpack.c.b16 %v6463, %v6461
    %v6534 = vpack.c.b16 %v6464, %v6462
    %v6535 = vpack.c.b16 %v6467, %v6465
    %v6536 = vpack.c.b16 %v6468, %v6466
    %v6537 = vpack.c.b16 %v6471, %v6469
    %v6538 = vpack.c.b16 %v6472, %v6470
    %v6539 = vpack.c.b16 %v6475, %v6473
    %v6540 = vpack.c.b16 %v6476, %v6474
    %6605 = vmatprep.subr.bf16.mxu0 %v6478
    %6606 = vmatpush1.bf16.msra.mxu0 %v6477
    %6607 = vmatprep.subr.bf16.mxu0 %v6480
    %6608 = vmatpush1.bf16.msra.mxu0 %v6479
    %6609 = vmatprep.subr.bf16.mxu0 %v6482
    %6610 = vmatpush1.bf16.msra.mxu0 %v6481
    %6611 = vmatprep.subr.bf16.mxu0 %v6484
    %6612 = vmatpush1.bf16.msra.mxu0 %v6483
    %6613 = vmatprep.subr.bf16.mxu0 %v6486
    %6614 = vmatpush1.bf16.msra.mxu0 %v6485
    %6615 = vmatprep.subr.bf16.mxu0 %v6488
    %6616 = vmatpush1.bf16.msra.mxu0 %v6487
    %6617 = vmatprep.subr.bf16.mxu0 %v6490
    %6618 = vmatpush1.bf16.msra.mxu0 %v6489
    %6619 = vmatprep.subr.bf16.mxu0 %v6492
    %6620 = vmatpush1.bf16.msra.mxu0 %v6491
    %6621 = vmatprep.subr.bf16.mxu0 %v6494
    %6622 = vmatpush1.bf16.msra.mxu0 %v6493
    %6623 = vmatprep.subr.bf16.mxu0 %v6496
    %6624 = vmatpush1.bf16.msra.mxu0 %v6495
    %6625 = vmatprep.subr.bf16.mxu0 %v6498
    %6626 = vmatpush1.bf16.msra.mxu0 %v6497
    %6627 = vmatprep.subr.bf16.mxu0 %v6500
    %6628 = vmatpush1.bf16.msra.mxu0 %v6499
    %6629 = vmatprep.subr.bf16.mxu0 %v6502
    %6630 = vmatpush1.bf16.msra.mxu0 %v6501
    %6631 = vmatprep.subr.bf16.mxu0 %v6504
    %6632 = vmatpush1.bf16.msra.mxu0 %v6503
    %6633 = vmatprep.subr.bf16.mxu0 %v6506
    %6634 = vmatpush1.bf16.msra.mxu0 %v6505
    %6635 = vmatprep.subr.bf16.mxu0 %v6508
    %6636 = vmatpush1.bf16.msra.mxu0 %v6507
    %6637 = vmatprep.mubr.bf16.mxu0 %v6206
    %6638 = vmatmul.mubr.bf16.gmra.mrb[0].mxu0 %v6205
    %v6639 = vpop.f32.mrb[0].mxu0
    %v6640 = vadd.f32 %v6278, %v6639
    %v6641 = vpop.f32.mrb[0].mxu0
    %v6642 = vadd.f32 %v6282, %v6641
    %v6643 = vpop.f32.mrb[0].mxu0
    %v6644 = vpop.f32.mrb[0].mxu0
    %6645 = vdwg.mxu0
    %6646 = vmatprep.subr.bf16.mxu0 %v6510
    %6647 = vmatpush1.bf16.msra.mxu0 %v6509
    %6648 = vmatprep.subr.bf16.mxu0 %v6512
    %6649 = vmatpush1.bf16.msra.mxu0 %v6511
    %6650 = vmatprep.subr.bf16.mxu0 %v6514
    %6651 = vmatpush1.bf16.msra.mxu0 %v6513
    %6652 = vmatprep.subr.bf16.mxu0 %v6516
    %6653 = vmatpush1.bf16.msra.mxu0 %v6515
    %6654 = vmatprep.subr.bf16.mxu0 %v6518
    %6655 = vmatpush1.bf16.msra.mxu0 %v6517
    %6656 = vmatprep.subr.bf16.mxu0 %v6520
    %6657 = vmatpush1.bf16.msra.mxu0 %v6519
    %6658 = vmatprep.subr.bf16.mxu0 %v6522
    %6659 = vmatpush1.bf16.msra.mxu0 %v6521
    %6660 = vmatprep.subr.bf16.mxu0 %v6524
    %6661 = vmatpush1.bf16.msra.mxu0 %v6523
    %6662 = vmatprep.subr.bf16.mxu0 %v6526
    %6663 = vmatpush1.bf16.msra.mxu0 %v6525
    %6664 = vmatprep.subr.bf16.mxu0 %v6528
    %6665 = vmatpush1.bf16.msra.mxu0 %v6527
    %6666 = vmatprep.subr.bf16.mxu0 %v6530
    %6667 = vmatpush1.bf16.msra.mxu0 %v6529
    %6668 = vmatprep.subr.bf16.mxu0 %v6532
    %6669 = vmatpush1.bf16.msra.mxu0 %v6531
    %6670 = vmatprep.subr.bf16.mxu0 %v6534
    %6671 = vmatpush1.bf16.msra.mxu0 %v6533
    %6672 = vmatprep.subr.bf16.mxu0 %v6536
    %6673 = vmatpush1.bf16.msra.mxu0 %v6535
    %6674 = vmatprep.subr.bf16.mxu0 %v6538
    %6675 = vmatpush1.bf16.msra.mxu0 %v6537
    %6676 = vmatprep.subr.bf16.mxu0 %v6540
    %6677 = vmatpush1.bf16.msra.mxu0 %v6539
    %6678 = vmatprep.mubr.bf16.mxu0 %v6208
    %6679 = vmatmul.mubr.bf16.gmra.mrb[0].mxu0 %v6207
    %v6680 = vpop.f32.mrb[0].mxu0
    %v6681 = vadd.f32 %v6640, %v6680
    %v6682 = vpop.f32.mrb[0].mxu0
    %v6683 = vadd.f32 %v6642, %v6682
    %v6684 = vpop.f32.mrb[0].mxu0
    %v6685 = vpop.f32.mrb[0].mxu0
    %6686 = vdwg.mxu0
    %v6687 = vmax.f32 %v6681, 0.0
    %v6688 = vmax.f32 %v6683, 0.0
    %v6689 = vpack.c.bf16 %v6687, %v6687
    %v6690 = vpack.c.bf16 %v6688, %v6688
    %v6691 = vld [vmem:[#allocation14] sm:$0xf]
    %v6692 = vld [vmem:[#allocation14 + $0x4] sm:$0xf]
    %v6693 = vld [vmem:[#allocation14 + $0x8] sm:$0xf]
    %v6694 = vld [vmem:[#allocation14 + $0xc] sm:$0xf]
    %v6695 = vld [vmem:[#allocation14 + $0x10] sm:$0xf]
    %v6696 = vld [vmem:[#allocation14 + $0x14] sm:$0xf]
    %v6697 = vld [vmem:[#allocation14 + $0x18] sm:$0xf]
    %v6698 = vld [vmem:[#allocation14 + $0x1c] sm:$0xf]
    %v6699 = vld [vmem:[#allocation14 + $0x20] sm:$0xf]
    %v6700 = vld [vmem:[#allocation14 + $0x24] sm:$0xf]
    %v6701 = vld [vmem:[#allocation14 + $0x28] sm:$0xf]
    %v6702 = vld [vmem:[#allocation14 + $0x2c] sm:$0xf]
    %v6703 = vld [vmem:[#allocation14 + $0x30] sm:$0xf]
    %v6704 = vld [vmem:[#allocation14 + $0x34] sm:$0xf]
    %v6705 = vld [vmem:[#allocation14 + $0x38] sm:$0xf]
    %v6706 = vld [vmem:[#allocation14 + $0x3c] sm:$0xf]
    %v6707 = vld [vmem:[#allocation14 + $0x40] sm:$0xf]
    %v6708 = vld [vmem:[#allocation14 + $0x44] sm:$0xf]
    %v6709 = vld [vmem:[#allocation14 + $0x48] sm:$0xf]
    %v6710 = vld [vmem:[#allocation14 + $0x4c] sm:$0xf]
    %v6711 = vld [vmem:[#allocation14 + $0x50] sm:$0xf]
    %v6712 = vld [vmem:[#allocation14 + $0x54] sm:$0xf]
    %v6713 = vld [vmem:[#allocation14 + $0x58] sm:$0xf]
    %v6714 = vld [vmem:[#allocation14 + $0x5c] sm:$0xf]
    %v6715 = vld [vmem:[#allocation14 + $0x60] sm:$0xf]
    %v6716 = vld [vmem:[#allocation14 + $0x64] sm:$0xf]
    %v6717 = vld [vmem:[#allocation14 + $0x68] sm:$0xf]
    %v6718 = vld [vmem:[#allocation14 + $0x6c] sm:$0xf]
    %v6719 = vld [vmem:[#allocation14 + $0x70] sm:$0xf]
    %v6720 = vld [vmem:[#allocation14 + $0x74] sm:$0xf]
    %v6721 = vld [vmem:[#allocation14 + $0x78] sm:$0xf]
    %v6722 = vld [vmem:[#allocation14 + $0x7c] sm:$0xf]
    %v6723 = vld [vmem:[#allocation15] sm:$0x1]
    %v6725 = vlaneseq
    %v6726 = vshrl.u32 %v6725, 7
    %v6727 = vsub.s32 0, %v6726
    %v6728 = vrot.slane %v6723, %v6727
    %v6762 = vunpack.c.l.b16 %v6691
    %v6763 = vunpack.c.l.b16 %v6692
    %v6764 = vunpack.c.l.b16 %v6693
    %v6765 = vunpack.c.l.b16 %v6694
    %v6766 = vunpack.c.l.b16 %v6695
    %v6767 = vunpack.c.l.b16 %v6696
    %v6768 = vunpack.c.l.b16 %v6697
    %v6769 = vunpack.c.l.b16 %v6698
    %v6770 = vunpack.c.l.b16 %v6699
    %v6771 = vunpack.c.l.b16 %v6700
    %v6772 = vunpack.c.l.b16 %v6701
    %v6773 = vunpack.c.l.b16 %v6702
    %v6774 = vunpack.c.l.b16 %v6703
    %v6775 = vunpack.c.l.b16 %v6704
    %v6776 = vunpack.c.l.b16 %v6705
    %v6777 = vunpack.c.l.b16 %v6706
    %v6778 = vunpack.c.l.b16 %v6707
    %v6779 = vunpack.c.l.b16 %v6708
    %v6780 = vunpack.c.l.b16 %v6709
    %v6781 = vunpack.c.l.b16 %v6710
    %v6782 = vunpack.c.l.b16 %v6711
    %v6783 = vunpack.c.l.b16 %v6712
    %v6784 = vunpack.c.l.b16 %v6713
    %v6785 = vunpack.c.l.b16 %v6714
    %v6786 = vunpack.c.l.b16 %v6715
    %v6787 = vunpack.c.l.b16 %v6716
    %v6788 = vunpack.c.l.b16 %v6717
    %v6789 = vunpack.c.l.b16 %v6718
    %v6790 = vunpack.c.l.b16 %v6719
    %v6791 = vunpack.c.l.b16 %v6720
    %v6792 = vunpack.c.l.b16 %v6721
    %v6793 = vunpack.c.l.b16 %v6722
    %v6794 = vpack.c.b16 %v6763, %v6762
    %v6795 = vpack.c.b16 %v6765, %v6764
    %v6796 = vpack.c.b16 %v6767, %v6766
    %v6797 = vpack.c.b16 %v6769, %v6768
    %v6798 = vpack.c.b16 %v6771, %v6770
    %v6799 = vpack.c.b16 %v6773, %v6772
    %v6800 = vpack.c.b16 %v6775, %v6774
    %v6801 = vpack.c.b16 %v6777, %v6776
    %v6802 = vpack.c.b16 %v6779, %v6778
    %v6803 = vpack.c.b16 %v6781, %v6780
    %v6804 = vpack.c.b16 %v6783, %v6782
    %v6805 = vpack.c.b16 %v6785, %v6784
    %v6806 = vpack.c.b16 %v6787, %v6786
    %v6807 = vpack.c.b16 %v6789, %v6788
    %v6808 = vpack.c.b16 %v6791, %v6790
    %v6809 = vpack.c.b16 %v6793, %v6792
    %6826 = vmatprep.subr.bf16.mxu0 0
    %6827 = vmatpush1.bf16.msra.mxu0 %v6794
    %6828 = vmatprep.subr.bf16.mxu0 0
    %6829 = vmatpush1.bf16.msra.mxu0 %v6795
    %6830 = vmatprep.subr.bf16.mxu0 0
    %6831 = vmatpush1.bf16.msra.mxu0 %v6796
    %6832 = vmatprep.subr.bf16.mxu0 0
    %6833 = vmatpush1.bf16.msra.mxu0 %v6797
    %6834 = vmatprep.subr.bf16.mxu0 0
    %6835 = vmatpush1.bf16.msra.mxu0 %v6798
    %6836 = vmatprep.subr.bf16.mxu0 0
    %6837 = vmatpush1.bf16.msra.mxu0 %v6799
    %6838 = vmatprep.subr.bf16.mxu0 0
    %6839 = vmatpush1.bf16.msra.mxu0 %v6800
    %6840 = vmatprep.subr.bf16.mxu0 0
    %6841 = vmatpush1.bf16.msra.mxu0 %v6801
    %6842 = vmatprep.subr.bf16.mxu0 0
    %6843 = vmatpush1.bf16.msra.mxu0 %v6802
    %6844 = vmatprep.subr.bf16.mxu0 0
    %6845 = vmatpush1.bf16.msra.mxu0 %v6803
    %6846 = vmatprep.subr.bf16.mxu0 0
    %6847 = vmatpush1.bf16.msra.mxu0 %v6804
    %6848 = vmatprep.subr.bf16.mxu0 0
    %6849 = vmatpush1.bf16.msra.mxu0 %v6805
    %6850 = vmatprep.subr.bf16.mxu0 0
    %6851 = vmatpush1.bf16.msra.mxu0 %v6806
    %6852 = vmatprep.subr.bf16.mxu0 0
    %6853 = vmatpush1.bf16.msra.mxu0 %v6807
    %6854 = vmatprep.subr.bf16.mxu0 0
    %6855 = vmatpush1.bf16.msra.mxu0 %v6808
    %6856 = vmatprep.subr.bf16.mxu0 0
    %6857 = vmatpush1.bf16.msra.mxu0 %v6809
    %6858 = vmatprep.mubr.bf16.mxu0 %v6690
    %6859 = vmatmul.mubr.bf16.gmra.mrb[0].mxu0 %v6689
    %v6860 = vpop.f32.mrb[0].mxu0
    %v6861 = vadd.f32 %v6728, %v6860
    %v6862 = vpop.f32.mrb[0].mxu0
    %v6863 = vpop.f32.mrb[0].mxu0
    %v6864 = vpop.f32.mrb[0].mxu0
    %6865 = vdwg.mxu0
    %6866 = vst [vmem:[%s8] sm:$0xff] %v6861
    // Predicated region
    $region54: #{swapnet_forward.2} parent=1 // pred_check
      _
    $region55: #{swapnet_forward.2} parent=1 // pred_check_branch
      %6868 = sbr.rel (0) target = $region57
    $region56: #{swapnet_forward.2} parent=1 // pred_region
      _
    $region57: #{swapnet_forward.2} parent=1 // pred_fallthru
      _
    // Predicated region
    $region58: #{swapnet_forward.2} parent=1 // pred_check
      _
    $region59: #{swapnet_forward.2} parent=1 // pred_check_branch
      %6870 = sbr.rel (0) target = $region61
    $region60: #{swapnet_forward.2} parent=1 // pred_region
      _
    $region61: #{swapnet_forward.2} parent=1 // pred_fallthru
      _
    %6871 = vsyncpa [#allocation8], 1
    %6872 = vsyncpa [#allocation10], 1
    %6873 = vsyncpa [#allocation13], 1
    %6874 = vsyncpa [#allocation16], 1

</llo_original>
